<compile_context>
chip_gen: v5e
topology: v5e:2x2
jax: 0.10.0
libtpu: 0.0.40
codegen_flags: <defaults>
</compile_context>

<pallas_src>
import math
from functools import lru_cache, partial

import jax
import jax.numpy as jnp
from jax.experimental import pallas as pl
from jax.experimental.pallas import tpu as pltpu

V_LEN = 4                                  # node feature length fed to the sub-graph
SUB_LAYERS = 5                             # -> p_len = V_LEN * 2**SUB_LAYERS = 128
GLOBAL_LAYERS = 1                          # GlobalGraph.not_last_layer asserts False
HIDDEN = 32                                # MLP hidden width
LN_EPS = 1e-5                              # torch.nn.LayerNorm default eps
P_LEN = V_LEN * 2 ** SUB_LAYERS            # 128
D_MAX = V_LEN * 2 ** (SUB_LAYERS - 1)      # 64 (widest per-node width, width of pooled)
MAX_VEC_BLOCK = 64                         # vectors per grid block (>=512 flat MXU rows)
VMEM_LIMIT_BYTES = 48 * 1024 * 1024        # explicit scoped-VMEM budget (all generations)
NEG_INF = -1e30


# ------------------------------- helpers --------------------------------------


def _layernorm(x, gamma, beta):
    # var = E[x^2] - mu^2: the two cross-lane reductions are independent.
    mu = jnp.mean(x, axis=-1, keepdims=True)
    ex2 = jnp.mean(x * x, axis=-1, keepdims=True)
    var = ex2 - mu * mu
    return (x - mu) * jax.lax.rsqrt(var + LN_EPS) * gamma + beta


def _bf16_dot(a, b):
    # bf16 MXU operands, f32 accumulation.
    return jnp.dot(a.astype(jnp.bfloat16), b.astype(jnp.bfloat16),
                   preferred_element_type=jnp.float32)


# ----------------------------- kernel A: SubGraph ------------------------------


def _subgraph_kernel(x_ref, w1_ref, vA_ref, w2_ref, vB_ref, wqkv_ref, bqkv_ref,
                     q_ref, kv_ref, *, m):
    """SubGraph (5 MLP layers + pooled concat folded into W1 rows) + folded QKV proj.

    x_ref    : [tb*m, V_LEN]            flattened per-node inputs of this vector block
    w1_ref   : [L, D_MAX, HIDDEN]       layer i uses rows :d_i
    vA_ref   : [L, 3, HIDDEN]           rows = (b1, gamma1, beta1)
    w2_ref   : [L, HIDDEN, D_MAX]       layer i uses cols :d_i
    vB_ref   : [L, 3, D_MAX]            rows = (b2, gamma2, beta2), cols :d_i
    wqkv_ref : [D_MAX, 3*P_LEN]         folded QKV weight (pooled-duplication folded in)
    bqkv_ref : [1, 3*P_LEN]
    q_ref    : [tb, P_LEN]   out        kv_ref : [tb, 2*P_LEN]   out
    """
    rows = x_ref.shape[0]
    tb = rows // m

    o = None        # per-node activations, flat [rows, d_i] f32
    pooled = None   # per-vector max over nodes,  [tb, d_i]  f32
    for i in range(SUB_LAYERS):
        d = V_LEN * 2 ** i
        b1, g1, be1 = vA_ref[i, 0:1, :], vA_ref[i, 1:2, :], vA_ref[i, 2:3, :]
        if i == 0:
            h = _bf16_dot(x_ref[...], w1_ref[i, :d, :])                      # [rows, H]
        else:
            dp = d // 2
            # Layer input is cat(pooled_bcast, o): split W1 rows instead of
            # materializing the concat; broadcast the pooled projection over nodes.
            hn = _bf16_dot(o, w1_ref[i, dp:d, :])                            # [rows, H]
            hp = _bf16_dot(pooled, w1_ref[i, :dp, :])                        # [tb, H]
            h = hn + jnp.broadcast_to(hp[:, None, :],
                                      (tb, m, HIDDEN)).reshape(rows, HIDDEN)
        h = jnp.maximum(_layernorm(h + b1, g1, be1), 0.0)                    # [rows, H]

        b2, g2, be2 = vB_ref[i, 0:1, :d], vB_ref[i, 1:2, :d], vB_ref[i, 2:3, :d]
        oo = _bf16_dot(h, w2_ref[i, :, :d]) + b2                             # [rows, d]
        o = jnp.maximum(_layernorm(oo, g2, be2), 0.0)
        pooled = jnp.max(o.reshape(tb, m, d), axis=1)                        # [tb, d]

    # SubGraph tail: max over nodes of cat(pooled_bcast, o) == cat(pooled, pooled);
    # the duplication is already folded into wqkv, so project pooled directly.
    qkv = _bf16_dot(pooled, wqkv_ref[...]) + bqkv_ref[...]                   # [tb, 384]
    q_ref[...] = qkv[:, :P_LEN]
    kv_ref[...] = qkv[:, P_LEN:]


# --------------------------- kernel B: GlobalGraph -----------------------------


def _attention_kernel(q_ref, kv_ref, segq_ref, segk_ref, o_ref):
    """Block-diagonal (per-polyline) self-attention; no 1/sqrt(d_k) scaling (reference).

    q_ref   : [tb, P_LEN]        query block
    kv_ref  : [n_pad, 2*P_LEN]   all keys|values (resident)
    segq_ref: [tb, 1] int32      polyline id per query row (-1 for padding)
    segk_ref: [1, n_pad] int32   polyline id per key row
    o_ref   : [tb, P_LEN]
    """
    q = q_ref[...]
    k = kv_ref[:, :P_LEN]
    v = kv_ref[:, P_LEN:]
    # Contract on the shared feature axis directly (no explicit K transpose).
    s = jax.lax.dot_general(q.astype(jnp.bfloat16), k.astype(jnp.bfloat16),
                            (((1,), (1,)), ((), ())),
                            preferred_element_type=jnp.float32)              # [tb, n_pad]
    mask = segq_ref[...] == segk_ref[...]
    s = jnp.where(mask, s, NEG_INF)
    s = s - jnp.max(s, axis=-1, keepdims=True)                               # stable softmax
    e = jnp.exp(s)
    a = e * pl.reciprocal(jnp.sum(e, axis=-1, keepdims=True), approx=False)  # exact norm
    o_ref[...] = _bf16_dot(a, v)
    # TODO(synk): flash-style key tiling for very large n_pad (bounds the [tb, n_pad]
    # score tile; needed first on v7x's 64 MiB VMEM).


# ------------------------------ call builders ----------------------------------


def _round_rows(n):
    # Bucket sizes: multiple of 8 below 64 (sublane aligned), multiple of 64 above
    # (few distinct shapes -> few recompiles).
    if n <= MAX_VEC_BLOCK:
        return ((n + 7) // 8) * 8
    return ((n + MAX_VEC_BLOCK - 1) // MAX_VEC_BLOCK) * MAX_VEC_BLOCK


@lru_cache(maxsize=None)
def _build_group_fn(n_pad, m):
    """Builds (and caches) the jitted SubGraph+attention runner for one shape bucket."""
    tb = min(MAX_VEC_BLOCK, n_pad)
    grid = (n_pad // tb,)
    cparams = pltpu.CompilerParams(dimension_semantics=("parallel",),
                                   vmem_limit_bytes=VMEM_LIMIT_BYTES)

    sub_call = pl.pallas_call(
        partial(_subgraph_kernel, m=m),
        grid=grid,
        in_specs=[
            pl.BlockSpec((tb * m, V_LEN), lambda i: (i, 0)),                  # x rows
            pl.BlockSpec((SUB_LAYERS, D_MAX, HIDDEN), lambda i: (0, 0, 0)),   # w1 resident
            pl.BlockSpec((SUB_LAYERS, 3, HIDDEN), lambda i: (0, 0, 0)),       # b1/g1/be1
            pl.BlockSpec((SUB_LAYERS, HIDDEN, D_MAX), lambda i: (0, 0, 0)),   # w2 resident
            pl.BlockSpec((SUB_LAYERS, 3, D_MAX), lambda i: (0, 0, 0)),        # b2/g2/be2
            pl.BlockSpec((D_MAX, 3 * P_LEN), lambda i: (0, 0)),               # folded Wqkv
            pl.BlockSpec((1, 3 * P_LEN), lambda i: (0, 0)),                   # bqkv
        ],
        out_specs=[
            pl.BlockSpec((tb, P_LEN), lambda i: (i, 0)),                      # Q
            pl.BlockSpec((tb, 2 * P_LEN), lambda i: (i, 0)),                  # K|V
        ],
        out_shape=[
            jax.ShapeDtypeStruct((n_pad, P_LEN), jnp.float32),
            jax.ShapeDtypeStruct((n_pad, 2 * P_LEN), jnp.float32),
        ],
        compiler_params=cparams,
    )

    attn_call = pl.pallas_call(
        _attention_kernel,
        grid=grid,
        in_specs=[
            pl.BlockSpec((tb, P_LEN), lambda i: (i, 0)),                      # Q block
            pl.BlockSpec((n_pad, 2 * P_LEN), lambda i: (0, 0)),               # full K|V
            pl.BlockSpec((tb, 1), lambda i: (i, 0)),                          # query seg ids
            pl.BlockSpec((1, n_pad), lambda i: (0, 0)),                       # key seg ids
        ],
        out_specs=pl.BlockSpec((tb, P_LEN), lambda i: (i, 0)),
        out_shape=jax.ShapeDtypeStruct((n_pad, P_LEN), jnp.float32),
        compiler_params=cparams,
    )

    def run(x_flat, segq, segk, w1, vecA, w2, vecB, wqkv, bqkv):
        q, kv = sub_call(x_flat, w1, vecA, w2, vecB, wqkv, bqkv)
        return attn_call(q, kv, segq, segk)

    return jax.jit(run)


# ------------------------------ module wrapper ----------------------------------


def vectornet_forward(polyline_list, packed):
    """Mirrors VectorNet.forward: list of [N, L, node_dim] polylines (or (1,1) sentinels)
    -> list of [N, P_LEN] features (or None)."""
    assert GLOBAL_LAYERS == 1  # not_last_layer asserts False in the reference module
    results = [None] * len(polyline_list)

    # Group polylines by node count so each group is one compile + two launches.
    groups = {}
    for idx, poly in enumerate(polyline_list):
        if tuple(poly.shape) == (1, 1):
            continue
        x = jnp.concatenate([poly[:, :-1, :], poly[:, 1:, :]],
                            axis=-1).astype(jnp.float32)             # [N, M, V_LEN]
        assert x.shape[-1] == V_LEN
        groups.setdefault(int(x.shape[1]), []).append((idx, x))

    for m, items in groups.items():
        xs = jnp.concatenate([x for _, x in items], axis=0)           # [sum_N, M, V_LEN]
        seg = jnp.concatenate([jnp.full((x.shape[0],), j, jnp.int32)
                               for j, (_, x) in enumerate(items)])    # [sum_N]
        n = xs.shape[0]
        n_pad = _round_rows(n)
        if n_pad != n:
            xs = jnp.pad(xs, ((0, n_pad - n), (0, 0), (0, 0)))
            seg = jnp.pad(seg, (0, n_pad - n), constant_values=-1)    # padding rows never
                                                                      # attend to real rows
        x_flat = xs.reshape(n_pad * m, V_LEN)                         # per-node rows
        fn = _build_group_fn(n_pad, m)
        out = fn(x_flat, seg.reshape(n_pad, 1), seg.reshape(1, n_pad),
                 packed['w1'], packed['vecA'], packed['w2'], packed['vecB'],
                 packed['wqkv'], packed['bqkv'])                      # [n_pad, P_LEN]
        off = 0
        for idx, x in items:
            k = x.shape[0]
            results[idx] = out[off:off + k]
            off += k
    return results


# ----------------------- deterministic parameter init ---------------------------


def _xavier_uniform(key, fan_in, fan_out):
    bound = math.sqrt(6.0 / (fan_in + fan_out))
    return jax.random.uniform(key, (fan_in, fan_out), jnp.float32, -bound, bound)


def init_packed_params(key):
    """Packed parameters: 4 arrays for the 5 sub-graph layers + folded QKV projection.
    Weights are stored [in, out] so every linear is x @ W + b (== PyTorch x @ W.T + b)."""
    w1 = jnp.zeros((SUB_LAYERS, D_MAX, HIDDEN), jnp.float32)
    w2 = jnp.zeros((SUB_LAYERS, HIDDEN, D_MAX), jnp.float32)
    vecA = jnp.zeros((SUB_LAYERS, 3, HIDDEN), jnp.float32)   # b1 / gamma1 / beta1
    vecB = jnp.zeros((SUB_LAYERS, 3, D_MAX), jnp.float32)    # b2 / gamma2 / beta2
    for i in range(SUB_LAYERS):
        d = V_LEN * 2 ** i
        key, k1, k2 = jax.random.split(key, 3)
        w1 = w1.at[i, :d, :].set(_xavier_uniform(k1, d, HIDDEN))
        w2 = w2.at[i, :, :d].set(_xavier_uniform(k2, HIDDEN, d))
        vecA = vecA.at[i, 0, :].set(0.01)     # linear1 bias fill_(0.01)
        vecA = vecA.at[i, 1, :].set(1.0)      # LayerNorm(hidden) weight
        vecB = vecB.at[i, 0, :d].set(0.01)    # linear2 bias fill_(0.01)
        vecB = vecB.at[i, 1, :d].set(1.0)     # LayerNorm(out) weight
        # beta1 / beta2 stay 0 (LayerNorm default bias)

    bound = 1.0 / math.sqrt(P_LEN)            # PyTorch default Linear init
    ws, bs = [], []
    for _ in range(3):                        # Q, K, V
        key, kw, kb = jax.random.split(key, 3)
        ws.append(jax.random.uniform(kw, (P_LEN, P_LEN), jnp.float32, -bound, bound))
        bs.append(jax.random.uniform(kb, (1, P_LEN), jnp.float32, -bound, bound))
    wqkv = jnp.concatenate(ws, axis=1)                      # [P_LEN, 3*P_LEN]
    # P = [pooled, pooled]: fold the duplication into the weight (done once, in f32).
    wqkv_folded = wqkv[:D_MAX, :] + wqkv[D_MAX:, :]         # [D_MAX, 3*P_LEN]
    return {
        'w1': w1, 'vecA': vecA, 'w2': w2, 'vecB': vecB,
        'wqkv': wqkv_folded,
        'bqkv': jnp.concatenate(bs, axis=1),                # [1, 3*P_LEN]
    }


# ----------------------------------- main ---------------------------------------


if __name__ == "__main__":
    key = jax.random.PRNGKey(0)
    key, kp, k1, k2 = jax.random.split(key, 4)
    packed = init_packed_params(kp)

    # Polylines: [N_vectors, L_points, 2]; start/end concat gives node_dim = 4 = V_LEN.
    polyline_a = jax.random.normal(k1, (3, 9, 2), jnp.float32)   # -> [3, 8, 4]
    polyline_b = jax.random.normal(k2, (2, 9, 2), jnp.float32)   # -> [2, 8, 4]
    empty_item = jnp.zeros((1, 1), jnp.float32)                  # -> feature is None

    out_list = vectornet_forward([polyline_a, polyline_b, empty_item], packed)

    assert out_list[0].shape == (3, P_LEN)
    assert out_list[1].shape == (2, P_LEN)
    assert out_list[2] is None
    for o in out_list:
        if o is not None:
            jax.block_until_ready(o)
            assert bool(jnp.all(jnp.isfinite(o)))
    print("KERNEL_OK")
</pallas_src>

<mosaic_0001>
module attributes {stable_mosaic.version = 11 : i64} {
  func.func @_attention_kernel(%arg0: i32, %arg1: memref<8x128xf32, #tpu.memory_space<vmem>>, %arg2: memref<8x256xf32, #tpu.memory_space<vmem>>, %arg3: memref<8x1xi32, #tpu.memory_space<vmem>>, %arg4: memref<1x8xi32, #tpu.memory_space<vmem>>, %arg5: memref<8x128xf32, #tpu.memory_space<vmem>>) attributes {dimension_semantics = [#tpu.dimension_semantics<parallel>], iteration_bounds = array<i64: 1>, scalar_prefetch = 0 : i64, scratch_operands = 0 : i64, tpu.core_type = #tpu.core_type<tc>, window_params = [{transform_indices = @transform_0, window_bounds = array<i64: 8, 128>}, {pipeline_mode = #tpu.pipeline_mode<synchronous>, transform_indices = @transform_1, window_bounds = array<i64: 8, 256>}, {transform_indices = @transform_2, window_bounds = array<i64: 8, 1>}, {pipeline_mode = #tpu.pipeline_mode<synchronous>, transform_indices = @transform_3, window_bounds = array<i64: 1, 8>}, {transform_indices = @transform_4, window_bounds = array<i64: 8, 128>}]} {
    %c0 = arith.constant 0 : index
    %c0_0 = arith.constant 0 : index
    %0 = vector.load %arg1[%c0, %c0_0] : memref<8x128xf32, #tpu.memory_space<vmem>>, vector<8x128xf32>
    %c0_1 = arith.constant 0 : index
    %c0_2 = arith.constant 0 : index
    %1 = vector.load %arg2[%c0_1, %c0_2] : memref<8x256xf32, #tpu.memory_space<vmem>>, vector<8x128xf32>
    %c0_3 = arith.constant 0 : index
    %c128 = arith.constant 128 : index
    %2 = vector.load %arg2[%c0_3, %c128] : memref<8x256xf32, #tpu.memory_space<vmem>>, vector<8x128xf32>
    %3 = arith.truncf %0 : vector<8x128xf32> to vector<8x128xbf16>
    %4 = arith.truncf %1 : vector<8x128xf32> to vector<8x128xbf16>
    %cst = arith.constant dense<0.000000e+00> : vector<8x8xf32>
    %5 = tpu.matmul %3, %4, %cst {dimension_numbers = #tpu.dot_dimension_numbers<[1], [1], [0], [0], [0, 0, 1, 0], [], []>} : vector<8x128xbf16>, vector<8x128xbf16>, vector<8x8xf32> -> vector<8x8xf32>
    %c0_4 = arith.constant 0 : index
    %c0_5 = arith.constant 0 : index
    %6 = vector.load %arg3[%c0_4, %c0_5] : memref<8x1xi32, #tpu.memory_space<vmem>>, vector<8x1xi32>
    %c0_6 = arith.constant 0 : index
    %c0_7 = arith.constant 0 : index
    %7 = vector.load %arg4[%c0_6, %c0_7] : memref<1x8xi32, #tpu.memory_space<vmem>>, vector<1x8xi32>
    %8 = vector.broadcast %6 : vector<8x1xi32> to vector<8x8xi32>
    %9 = vector.broadcast %7 : vector<1x8xi32> to vector<8x8xi32>
    %10 = arith.cmpi eq, %8, %9 : vector<8x8xi32>
    %cst_8 = arith.constant -1.000000e+30 : f32
    %11 = vector.broadcast %cst_8 : f32 to vector<8x8xf32>
    %12 = arith.select %10, %5, %11 : vector<8x8xi1>, vector<8x8xf32>
    %cst_9 = arith.constant dense<0xFF800000> : vector<8xf32>
    %13 = vector.multi_reduction <maximumf>, %12, %cst_9 [1] : vector<8x8xf32> to vector<8xf32>
    %14 = vector.shape_cast %13 : vector<8xf32> to vector<8x1xf32>
    %15 = vector.broadcast %14 : vector<8x1xf32> to vector<8x8xf32>
    %16 = arith.subf %12, %15 : vector<8x8xf32>
    %17 = math.exp %16 : vector<8x8xf32>
    %cst_10 = arith.constant dense<0.000000e+00> : vector<8xf32>
    %18 = vector.multi_reduction <add>, %17, %cst_10 [1] : vector<8x8xf32> to vector<8xf32>
    %19 = vector.shape_cast %18 : vector<8xf32> to vector<8x1xf32>
    %20 = tpu.reciprocal %19 : vector<8x1xf32> -> vector<8x1xf32>
    %21 = vector.broadcast %20 : vector<8x1xf32> to vector<8x8xf32>
    %22 = arith.mulf %17, %21 : vector<8x8xf32>
    %23 = arith.truncf %22 : vector<8x8xf32> to vector<8x8xbf16>
    %24 = arith.truncf %2 : vector<8x128xf32> to vector<8x128xbf16>
    %cst_11 = arith.constant dense<0.000000e+00> : vector<8x128xf32>
    %25 = tpu.matmul %23, %24, %cst_11 {dimension_numbers = #tpu.dot_dimension_numbers<[1], [0], [0], [1], [0, 0, 1, 1], [], []>} : vector<8x8xbf16>, vector<8x128xbf16>, vector<8x128xf32> -> vector<8x128xf32>
    %c0_12 = arith.constant 0 : index
    %c0_13 = arith.constant 0 : index
    %26 = vector.load %arg5[%c0_12, %c0_13] : memref<8x128xf32, #tpu.memory_space<vmem>>, vector<8x128xf32>
    tpu.vector_store %arg5[%c0_12, %c0_13], %25 {strides = array<i32>} : memref<8x128xf32, #tpu.memory_space<vmem>>, vector<8x128xf32>,
    return
  }
  func.func @transform_0(%arg0: i32) -> (i32, i32) {
    %c0_i32 = arith.constant 0 : i32
    %c0_i32_0 = arith.constant 0 : i32
    return %arg0, %c0_i32 : i32, i32
  }
  func.func @transform_1(%arg0: i32) -> (i32, i32) {
    %c0_i32 = arith.constant 0 : i32
    %c0_i32_0 = arith.constant 0 : i32
    %c0_i32_1 = arith.constant 0 : i32
    return %c0_i32, %c0_i32_0 : i32, i32
  }
  func.func @transform_2(%arg0: i32) -> (i32, i32) {
    %c0_i32 = arith.constant 0 : i32
    %c0_i32_0 = arith.constant 0 : i32
    return %arg0, %c0_i32 : i32, i32
  }
  func.func @transform_3(%arg0: i32) -> (i32, i32) {
    %c0_i32 = arith.constant 0 : i32
    %c0_i32_0 = arith.constant 0 : i32
    %c0_i32_1 = arith.constant 0 : i32
    return %c0_i32, %c0_i32_0 : i32, i32
  }
  func.func @transform_4(%arg0: i32) -> (i32, i32) {
    %c0_i32 = arith.constant 0 : i32
    %c0_i32_0 = arith.constant 0 : i32
    return %arg0, %c0_i32 : i32, i32
  }
}

module attributes {stable_mosaic.version = 11 : i64} {
  func.func @_subgraph_kernel(%arg0: i32, %arg1: memref<64x4xf32, #tpu.memory_space<vmem>>, %arg2: memref<5x64x32xf32, #tpu.memory_space<vmem>>, %arg3: memref<5x3x32xf32, #tpu.memory_space<vmem>>, %arg4: memref<5x32x64xf32, #tpu.memory_space<vmem>>, %arg5: memref<5x3x64xf32, #tpu.memory_space<vmem>>, %arg6: memref<64x384xf32, #tpu.memory_space<vmem>>, %arg7: memref<1x384xf32, #tpu.memory_space<vmem>>, %arg8: memref<8x128xf32, #tpu.memory_space<vmem>>, %arg9: memref<8x256xf32, #tpu.memory_space<vmem>>) attributes {dimension_semantics = [#tpu.dimension_semantics<parallel>], iteration_bounds = array<i64: 1>, scalar_prefetch = 0 : i64, scratch_operands = 0 : i64, tpu.core_type = #tpu.core_type<tc>, window_params = [{transform_indices = @transform_0, window_bounds = array<i64: 64, 4>}, {pipeline_mode = #tpu.pipeline_mode<synchronous>, transform_indices = @transform_1, window_bounds = array<i64: 5, 64, 32>}, {pipeline_mode = #tpu.pipeline_mode<synchronous>, transform_indices = @transform_2, window_bounds = array<i64: 5, 3, 32>}, {pipeline_mode = #tpu.pipeline_mode<synchronous>, transform_indices = @transform_3, window_bounds = array<i64: 5, 32, 64>}, {pipeline_mode = #tpu.pipeline_mode<synchronous>, transform_indices = @transform_4, window_bounds = array<i64: 5, 3, 64>}, {pipeline_mode = #tpu.pipeline_mode<synchronous>, transform_indices = @transform_5, window_bounds = array<i64: 64, 384>}, {pipeline_mode = #tpu.pipeline_mode<synchronous>, transform_indices = @transform_6, window_bounds = array<i64: 1, 384>}, {transform_indices = @transform_7, window_bounds = array<i64: 8, 128>}, {transform_indices = @transform_8, window_bounds = array<i64: 8, 256>}]} {
    %c0 = arith.constant 0 : index
    %c0_0 = arith.constant 0 : index
    %c0_1 = arith.constant 0 : index
    %0 = vector.load %arg3[%c0, %c0_0, %c0_1] : memref<5x3x32xf32, #tpu.memory_space<vmem>>, vector<1x1x32xf32>
    %1 = vector.shape_cast %0 : vector<1x1x32xf32> to vector<1x32xf32>
    %c0_2 = arith.constant 0 : index
    %c1 = arith.constant 1 : index
    %c0_3 = arith.constant 0 : index
    %2 = vector.load %arg3[%c0_2, %c1, %c0_3] : memref<5x3x32xf32, #tpu.memory_space<vmem>>, vector<1x1x32xf32>
    %3 = vector.shape_cast %2 : vector<1x1x32xf32> to vector<1x32xf32>
    %c0_4 = arith.constant 0 : index
    %c2 = arith.constant 2 : index
    %c0_5 = arith.constant 0 : index
    %4 = vector.load %arg3[%c0_4, %c2, %c0_5] : memref<5x3x32xf32, #tpu.memory_space<vmem>>, vector<1x1x32xf32>
    %5 = vector.shape_cast %4 : vector<1x1x32xf32> to vector<1x32xf32>
    %c0_6 = arith.constant 0 : index
    %c0_7 = arith.constant 0 : index
    %6 = vector.load %arg1[%c0_6, %c0_7] : memref<64x4xf32, #tpu.memory_space<vmem>>, vector<64x4xf32>
    %c0_8 = arith.constant 0 : index
    %c0_9 = arith.constant 0 : index
    %c0_10 = arith.constant 0 : index
    %7 = vector.load %arg2[%c0_8, %c0_9, %c0_10] : memref<5x64x32xf32, #tpu.memory_space<vmem>>, vector<1x4x32xf32>
    %8 = vector.shape_cast %7 : vector<1x4x32xf32> to vector<4x32xf32>
    %9 = arith.truncf %6 : vector<64x4xf32> to vector<64x4xbf16>
    %10 = arith.truncf %8 : vector<4x32xf32> to vector<4x32xbf16>
    %cst = arith.constant dense<0.000000e+00> : vector<64x32xf32>
    %11 = tpu.matmul %9, %10, %cst {dimension_numbers = #tpu.dot_dimension_numbers<[1], [0], [0], [1], [0, 0, 1, 1], [], []>} : vector<64x4xbf16>, vector<4x32xbf16>, vector<64x32xf32> -> vector<64x32xf32>
    %12 = vector.broadcast %1 : vector<1x32xf32> to vector<64x32xf32>
    %13 = arith.addf %11, %12 : vector<64x32xf32>
    %cst_11 = arith.constant dense<0.000000e+00> : vector<64xf32>
    %14 = vector.multi_reduction <add>, %13, %cst_11 [1] : vector<64x32xf32> to vector<64xf32>
    %15 = vector.shape_cast %14 : vector<64xf32> to vector<64x1xf32>
    %cst_12 = arith.constant 3.200000e+01 : f32
    %16 = vector.broadcast %cst_12 : f32 to vector<64x1xf32>
    %17 = arith.divf %15, %16 : vector<64x1xf32>
    %18 = arith.mulf %13, %13 : vector<64x32xf32>
    %cst_13 = arith.constant dense<0.000000e+00> : vector<64xf32>
    %19 = vector.multi_reduction <add>, %18, %cst_13 [1] : vector<64x32xf32> to vector<64xf32>
    %20 = vector.shape_cast %19 : vector<64xf32> to vector<64x1xf32>
    %cst_14 = arith.constant 3.200000e+01 : f32
    %21 = vector.broadcast %cst_14 : f32 to vector<64x1xf32>
    %22 = arith.divf %20, %21 : vector<64x1xf32>
    %23 = arith.mulf %17, %17 : vector<64x1xf32>
    %24 = arith.subf %22, %23 : vector<64x1xf32>
    %25 = vector.broadcast %17 : vector<64x1xf32> to vector<64x32xf32>
    %26 = arith.subf %13, %25 : vector<64x32xf32>
    %cst_15 = arith.constant 9.99999974E-6 : f32
    %27 = vector.broadcast %cst_15 : f32 to vector<64x1xf32>
    %28 = arith.addf %24, %27 : vector<64x1xf32>
    %29 = math.rsqrt %28 : vector<64x1xf32>
    %30 = vector.broadcast %29 : vector<64x1xf32> to vector<64x32xf32>
    %31 = arith.mulf %26, %30 : vector<64x32xf32>
    %32 = vector.broadcast %3 : vector<1x32xf32> to vector<64x32xf32>
    %33 = arith.mulf %31, %32 : vector<64x32xf32>
    %34 = vector.broadcast %5 : vector<1x32xf32> to vector<64x32xf32>
    %35 = arith.addf %33, %34 : vector<64x32xf32>
    %cst_16 = arith.constant 0.000000e+00 : f32
    %36 = vector.broadcast %cst_16 : f32 to vector<64x32xf32>
    %37 = arith.maximumf %35, %36 : vector<64x32xf32>
    %c0_17 = arith.constant 0 : index
    %c0_18 = arith.constant 0 : index
    %c0_19 = arith.constant 0 : index
    %38 = vector.load %arg5[%c0_17, %c0_18, %c0_19] : memref<5x3x64xf32, #tpu.memory_space<vmem>>, vector<1x1x4xf32>
    %39 = vector.shape_cast %38 : vector<1x1x4xf32> to vector<1x4xf32>
    %c0_20 = arith.constant 0 : index
    %c1_21 = arith.constant 1 : index
    %c0_22 = arith.constant 0 : index
    %40 = vector.load %arg5[%c0_20, %c1_21, %c0_22] : memref<5x3x64xf32, #tpu.memory_space<vmem>>, vector<1x1x4xf32>
    %41 = vector.shape_cast %40 : vector<1x1x4xf32> to vector<1x4xf32>
    %c0_23 = arith.constant 0 : index
    %c2_24 = arith.constant 2 : index
    %c0_25 = arith.constant 0 : index
    %42 = vector.load %arg5[%c0_23, %c2_24, %c0_25] : memref<5x3x64xf32, #tpu.memory_space<vmem>>, vector<1x1x4xf32>
    %43 = vector.shape_cast %42 : vector<1x1x4xf32> to vector<1x4xf32>
    %c0_26 = arith.constant 0 : index
    %c0_27 = arith.constant 0 : index
    %c0_28 = arith.constant 0 : index
    %44 = vector.load %arg4[%c0_26, %c0_27, %c0_28] : memref<5x32x64xf32, #tpu.memory_space<vmem>>, vector<1x32x4xf32>
    %45 = vector.shape_cast %44 : vector<1x32x4xf32> to vector<32x4xf32>
    %46 = arith.truncf %37 : vector<64x32xf32> to vector<64x32xbf16>
    %47 = arith.truncf %45 : vector<32x4xf32> to vector<32x4xbf16>
    %cst_29 = arith.constant dense<0.000000e+00> : vector<64x4xf32>
    %48 = tpu.matmul %46, %47, %cst_29 {dimension_numbers = #tpu.dot_dimension_numbers<[1], [0], [0], [1], [0, 0, 1, 1], [], []>} : vector<64x32xbf16>, vector<32x4xbf16>, vector<64x4xf32> -> vector<64x4xf32>
    %49 = vector.broadcast %39 : vector<1x4xf32> to vector<64x4xf32>
    %50 = arith.addf %48, %49 : vector<64x4xf32>
    %cst_30 = arith.constant dense<0.000000e+00> : vector<64xf32>
    %51 = vector.multi_reduction <add>, %50, %cst_30 [1] : vector<64x4xf32> to vector<64xf32>
    %52 = vector.shape_cast %51 : vector<64xf32> to vector<64x1xf32>
    %cst_31 = arith.constant 4.000000e+00 : f32
    %53 = vector.broadcast %cst_31 : f32 to vector<64x1xf32>
    %54 = arith.divf %52, %53 : vector<64x1xf32>
    %55 = arith.mulf %50, %50 : vector<64x4xf32>
    %cst_32 = arith.constant dense<0.000000e+00> : vector<64xf32>
    %56 = vector.multi_reduction <add>, %55, %cst_32 [1] : vector<64x4xf32> to vector<64xf32>
    %57 = vector.shape_cast %56 : vector<64xf32> to vector<64x1xf32>
    %cst_33 = arith.constant 4.000000e+00 : f32
    %58 = vector.broadcast %cst_33 : f32 to vector<64x1xf32>
    %59 = arith.divf %57, %58 : vector<64x1xf32>
    %60 = arith.mulf %54, %54 : vector<64x1xf32>
    %61 = arith.subf %59, %60 : vector<64x1xf32>
    %62 = vector.broadcast %54 : vector<64x1xf32> to vector<64x4xf32>
    %63 = arith.subf %50, %62 : vector<64x4xf32>
    %cst_34 = arith.constant 9.99999974E-6 : f32
    %64 = vector.broadcast %cst_34 : f32 to vector<64x1xf32>
    %65 = arith.addf %61, %64 : vector<64x1xf32>
    %66 = math.rsqrt %65 : vector<64x1xf32>
    %67 = vector.broadcast %66 : vector<64x1xf32> to vector<64x4xf32>
    %68 = arith.mulf %63, %67 : vector<64x4xf32>
    %69 = vector.broadcast %41 : vector<1x4xf32> to vector<64x4xf32>
    %70 = arith.mulf %68, %69 : vector<64x4xf32>
    %71 = vector.broadcast %43 : vector<1x4xf32> to vector<64x4xf32>
    %72 = arith.addf %70, %71 : vector<64x4xf32>
    %cst_35 = arith.constant 0.000000e+00 : f32
    %73 = vector.broadcast %cst_35 : f32 to vector<64x4xf32>
    %74 = arith.maximumf %72, %73 : vector<64x4xf32>
    %75 = vector.shape_cast %74 : vector<64x4xf32> to vector<8x8x4xf32>
    %cst_36 = arith.constant dense<0xFF800000> : vector<8x4xf32>
    %76 = vector.multi_reduction <maximumf>, %75, %cst_36 [1] : vector<8x8x4xf32> to vector<8x4xf32>
    %c1_37 = arith.constant 1 : index
    %c0_38 = arith.constant 0 : index
    %c0_39 = arith.constant 0 : index
    %77 = vector.load %arg3[%c1_37, %c0_38, %c0_39] : memref<5x3x32xf32, #tpu.memory_space<vmem>>, vector<1x1x32xf32>
    %78 = vector.shape_cast %77 : vector<1x1x32xf32> to vector<1x32xf32>
    %c1_40 = arith.constant 1 : index
    %c1_41 = arith.constant 1 : index
    %c0_42 = arith.constant 0 : index
    %79 = vector.load %arg3[%c1_40, %c1_41, %c0_42] : memref<5x3x32xf32, #tpu.memory_space<vmem>>, vector<1x1x32xf32>
    %80 = vector.shape_cast %79 : vector<1x1x32xf32> to vector<1x32xf32>
    %c1_43 = arith.constant 1 : index
    %c2_44 = arith.constant 2 : index
    %c0_45 = arith.constant 0 : index
    %81 = vector.load %arg3[%c1_43, %c2_44, %c0_45] : memref<5x3x32xf32, #tpu.memory_space<vmem>>, vector<1x1x32xf32>
    %82 = vector.shape_cast %81 : vector<1x1x32xf32> to vector<1x32xf32>
    %c1_46 = arith.constant 1 : index
    %c4 = arith.constant 4 : index
    %c0_47 = arith.constant 0 : index
    %83 = vector.load %arg2[%c1_46, %c4, %c0_47] : memref<5x64x32xf32, #tpu.memory_space<vmem>>, vector<1x4x32xf32>
    %84 = vector.shape_cast %83 : vector<1x4x32xf32> to vector<4x32xf32>
    %85 = arith.truncf %74 : vector<64x4xf32> to vector<64x4xbf16>
    %86 = arith.truncf %84 : vector<4x32xf32> to vector<4x32xbf16>
    %cst_48 = arith.constant dense<0.000000e+00> : vector<64x32xf32>
    %87 = tpu.matmul %85, %86, %cst_48 {dimension_numbers = #tpu.dot_dimension_numbers<[1], [0], [0], [1], [0, 0, 1, 1], [], []>} : vector<64x4xbf16>, vector<4x32xbf16>, vector<64x32xf32> -> vector<64x32xf32>
    %c1_49 = arith.constant 1 : index
    %c0_50 = arith.constant 0 : index
    %c0_51 = arith.constant 0 : index
    %88 = vector.load %arg2[%c1_49, %c0_50, %c0_51] : memref<5x64x32xf32, #tpu.memory_space<vmem>>, vector<1x4x32xf32>
    %89 = vector.shape_cast %88 : vector<1x4x32xf32> to vector<4x32xf32>
    %90 = arith.truncf %76 : vector<8x4xf32> to vector<8x4xbf16>
    %91 = arith.truncf %89 : vector<4x32xf32> to vector<4x32xbf16>
    %cst_52 = arith.constant dense<0.000000e+00> : vector<8x32xf32>
    %92 = tpu.matmul %90, %91, %cst_52 {dimension_numbers = #tpu.dot_dimension_numbers<[1], [0], [0], [1], [0, 0, 1, 1], [], []>} : vector<8x4xbf16>, vector<4x32xbf16>, vector<8x32xf32> -> vector<8x32xf32>
    %93 = vector.shape_cast %92 : vector<8x32xf32> to vector<8x1x32xf32>
    %94 = vector.shape_cast %93 : vector<8x1x32xf32> to vector<8x1x32xf32>
    %95 = vector.broadcast %94 : vector<8x1x32xf32> to vector<8x8x32xf32>
    %96 = vector.shape_cast %95 : vector<8x8x32xf32> to vector<64x32xf32>
    %97 = arith.addf %87, %96 : vector<64x32xf32>
    %98 = vector.broadcast %78 : vector<1x32xf32> to vector<64x32xf32>
    %99 = arith.addf %97, %98 : vector<64x32xf32>
    %cst_53 = arith.constant dense<0.000000e+00> : vector<64xf32>
    %100 = vector.multi_reduction <add>, %99, %cst_53 [1] : vector<64x32xf32> to vector<64xf32>
    %101 = vector.shape_cast %100 : vector<64xf32> to vector<64x1xf32>
    %cst_54 = arith.constant 3.200000e+01 : f32
    %102 = vector.broadcast %cst_54 : f32 to vector<64x1xf32>
    %103 = arith.divf %101, %102 : vector<64x1xf32>
    %104 = arith.mulf %99, %99 : vector<64x32xf32>
    %cst_55 = arith.constant dense<0.000000e+00> : vector<64xf32>
    %105 = vector.multi_reduction <add>, %104, %cst_55 [1] : vector<64x32xf32> to vector<64xf32>
    %106 = vector.shape_cast %105 : vector<64xf32> to vector<64x1xf32>
    %cst_56 = arith.constant 3.200000e+01 : f32
    %107 = vector.broadcast %cst_56 : f32 to vector<64x1xf32>
    %108 = arith.divf %106, %107 : vector<64x1xf32>
    %109 = arith.mulf %103, %103 : vector<64x1xf32>
    %110 = arith.subf %108, %109 : vector<64x1xf32>
    %111 = vector.broadcast %103 : vector<64x1xf32> to vector<64x32xf32>
    %112 = arith.subf %99, %111 : vector<64x32xf32>
    %cst_57 = arith.constant 9.99999974E-6 : f32
    %113 = vector.broadcast %cst_57 : f32 to vector<64x1xf32>
    %114 = arith.addf %110, %113 : vector<64x1xf32>
    %115 = math.rsqrt %114 : vector<64x1xf32>
    %116 = vector.broadcast %115 : vector<64x1xf32> to vector<64x32xf32>
    %117 = arith.mulf %112, %116 : vector<64x32xf32>
    %118 = vector.broadcast %80 : vector<1x32xf32> to vector<64x32xf32>
    %119 = arith.mulf %117, %118 : vector<64x32xf32>
    %120 = vector.broadcast %82 : vector<1x32xf32> to vector<64x32xf32>
    %121 = arith.addf %119, %120 : vector<64x32xf32>
    %cst_58 = arith.constant 0.000000e+00 : f32
    %122 = vector.broadcast %cst_58 : f32 to vector<64x32xf32>
    %123 = arith.maximumf %121, %122 : vector<64x32xf32>
    %c1_59 = arith.constant 1 : index
    %c0_60 = arith.constant 0 : index
    %c0_61 = arith.constant 0 : index
    %124 = vector.load %arg5[%c1_59, %c0_60, %c0_61] : memref<5x3x64xf32, #tpu.memory_space<vmem>>, vector<1x1x8xf32>
    %125 = vector.shape_cast %124 : vector<1x1x8xf32> to vector<1x8xf32>
    %c1_62 = arith.constant 1 : index
    %c1_63 = arith.constant 1 : index
    %c0_64 = arith.constant 0 : index
    %126 = vector.load %arg5[%c1_62, %c1_63, %c0_64] : memref<5x3x64xf32, #tpu.memory_space<vmem>>, vector<1x1x8xf32>
    %127 = vector.shape_cast %126 : vector<1x1x8xf32> to vector<1x8xf32>
    %c1_65 = arith.constant 1 : index
    %c2_66 = arith.constant 2 : index
    %c0_67 = arith.constant 0 : index
    %128 = vector.load %arg5[%c1_65, %c2_66, %c0_67] : memref<5x3x64xf32, #tpu.memory_space<vmem>>, vector<1x1x8xf32>
    %129 = vector.shape_cast %128 : vector<1x1x8xf32> to vector<1x8xf32>
    %c1_68 = arith.constant 1 : index
    %c0_69 = arith.constant 0 : index
    %c0_70 = arith.constant 0 : index
    %130 = vector.load %arg4[%c1_68, %c0_69, %c0_70] : memref<5x32x64xf32, #tpu.memory_space<vmem>>, vector<1x32x8xf32>
    %131 = vector.shape_cast %130 : vector<1x32x8xf32> to vector<32x8xf32>
    %132 = arith.truncf %123 : vector<64x32xf32> to vector<64x32xbf16>
    %133 = arith.truncf %131 : vector<32x8xf32> to vector<32x8xbf16>
    %cst_71 = arith.constant dense<0.000000e+00> : vector<64x8xf32>
    %134 = tpu.matmul %132, %133, %cst_71 {dimension_numbers = #tpu.dot_dimension_numbers<[1], [0], [0], [1], [0, 0, 1, 1], [], []>} : vector<64x32xbf16>, vector<32x8xbf16>, vector<64x8xf32> -> vector<64x8xf32>
    %135 = vector.broadcast %125 : vector<1x8xf32> to vector<64x8xf32>
    %136 = arith.addf %134, %135 : vector<64x8xf32>
    %cst_72 = arith.constant dense<0.000000e+00> : vector<64xf32>
    %137 = vector.multi_reduction <add>, %136, %cst_72 [1] : vector<64x8xf32> to vector<64xf32>
    %138 = vector.shape_cast %137 : vector<64xf32> to vector<64x1xf32>
    %cst_73 = arith.constant 8.000000e+00 : f32
    %139 = vector.broadcast %cst_73 : f32 to vector<64x1xf32>
    %140 = arith.divf %138, %139 : vector<64x1xf32>
    %141 = arith.mulf %136, %136 : vector<64x8xf32>
    %cst_74 = arith.constant dense<0.000000e+00> : vector<64xf32>
    %142 = vector.multi_reduction <add>, %141, %cst_74 [1] : vector<64x8xf32> to vector<64xf32>
    %143 = vector.shape_cast %142 : vector<64xf32> to vector<64x1xf32>
    %cst_75 = arith.constant 8.000000e+00 : f32
    %144 = vector.broadcast %cst_75 : f32 to vector<64x1xf32>
    %145 = arith.divf %143, %144 : vector<64x1xf32>
    %146 = arith.mulf %140, %140 : vector<64x1xf32>
    %147 = arith.subf %145, %146 : vector<64x1xf32>
    %148 = vector.broadcast %140 : vector<64x1xf32> to vector<64x8xf32>
    %149 = arith.subf %136, %148 : vector<64x8xf32>
    %cst_76 = arith.constant 9.99999974E-6 : f32
    %150 = vector.broadcast %cst_76 : f32 to vector<64x1xf32>
    %151 = arith.addf %147, %150 : vector<64x1xf32>
    %152 = math.rsqrt %151 : vector<64x1xf32>
    %153 = vector.broadcast %152 : vector<64x1xf32> to vector<64x8xf32>
    %154 = arith.mulf %149, %153 : vector<64x8xf32>
    %155 = vector.broadcast %127 : vector<1x8xf32> to vector<64x8xf32>
    %156 = arith.mulf %154, %155 : vector<64x8xf32>
    %157 = vector.broadcast %129 : vector<1x8xf32> to vector<64x8xf32>
    %158 = arith.addf %156, %157 : vector<64x8xf32>
    %cst_77 = arith.constant 0.000000e+00 : f32
    %159 = vector.broadcast %cst_77 : f32 to vector<64x8xf32>
    %160 = arith.maximumf %158, %159 : vector<64x8xf32>
    %161 = vector.shape_cast %160 : vector<64x8xf32> to vector<8x8x8xf32>
    %cst_78 = arith.constant dense<0xFF800000> : vector<8x8xf32>
    %162 = vector.multi_reduction <maximumf>, %161, %cst_78 [1] : vector<8x8x8xf32> to vector<8x8xf32>
    %c2_79 = arith.constant 2 : index
    %c0_80 = arith.constant 0 : index
    %c0_81 = arith.constant 0 : index
    %163 = vector.load %arg3[%c2_79, %c0_80, %c0_81] : memref<5x3x32xf32, #tpu.memory_space<vmem>>, vector<1x1x32xf32>
    %164 = vector.shape_cast %163 : vector<1x1x32xf32> to vector<1x32xf32>
    %c2_82 = arith.constant 2 : index
    %c1_83 = arith.constant 1 : index
    %c0_84 = arith.constant 0 : index
    %165 = vector.load %arg3[%c2_82, %c1_83, %c0_84] : memref<5x3x32xf32, #tpu.memory_space<vmem>>, vector<1x1x32xf32>
    %166 = vector.shape_cast %165 : vector<1x1x32xf32> to vector<1x32xf32>
    %c2_85 = arith.constant 2 : index
    %c2_86 = arith.constant 2 : index
    %c0_87 = arith.constant 0 : index
    %167 = vector.load %arg3[%c2_85, %c2_86, %c0_87] : memref<5x3x32xf32, #tpu.memory_space<vmem>>, vector<1x1x32xf32>
    %168 = vector.shape_cast %167 : vector<1x1x32xf32> to vector<1x32xf32>
    %c2_88 = arith.constant 2 : index
    %c8 = arith.constant 8 : index
    %c0_89 = arith.constant 0 : index
    %169 = vector.load %arg2[%c2_88, %c8, %c0_89] : memref<5x64x32xf32, #tpu.memory_space<vmem>>, vector<1x8x32xf32>
    %170 = vector.shape_cast %169 : vector<1x8x32xf32> to vector<8x32xf32>
    %171 = arith.truncf %160 : vector<64x8xf32> to vector<64x8xbf16>
    %172 = arith.truncf %170 : vector<8x32xf32> to vector<8x32xbf16>
    %cst_90 = arith.constant dense<0.000000e+00> : vector<64x32xf32>
    %173 = tpu.matmul %171, %172, %cst_90 {dimension_numbers = #tpu.dot_dimension_numbers<[1], [0], [0], [1], [0, 0, 1, 1], [], []>} : vector<64x8xbf16>, vector<8x32xbf16>, vector<64x32xf32> -> vector<64x32xf32>
    %c2_91 = arith.constant 2 : index
    %c0_92 = arith.constant 0 : index
    %c0_93 = arith.constant 0 : index
    %174 = vector.load %arg2[%c2_91, %c0_92, %c0_93] : memref<5x64x32xf32, #tpu.memory_space<vmem>>, vector<1x8x32xf32>
    %175 = vector.shape_cast %174 : vector<1x8x32xf32> to vector<8x32xf32>
    %176 = arith.truncf %162 : vector<8x8xf32> to vector<8x8xbf16>
    %177 = arith.truncf %175 : vector<8x32xf32> to vector<8x32xbf16>
    %cst_94 = arith.constant dense<0.000000e+00> : vector<8x32xf32>
    %178 = tpu.matmul %176, %177, %cst_94 {dimension_numbers = #tpu.dot_dimension_numbers<[1], [0], [0], [1], [0, 0, 1, 1], [], []>} : vector<8x8xbf16>, vector<8x32xbf16>, vector<8x32xf32> -> vector<8x32xf32>
    %179 = vector.shape_cast %178 : vector<8x32xf32> to vector<8x1x32xf32>
    %180 = vector.shape_cast %179 : vector<8x1x32xf32> to vector<8x1x32xf32>
    %181 = vector.broadcast %180 : vector<8x1x32xf32> to vector<8x8x32xf32>
    %182 = vector.shape_cast %181 : vector<8x8x32xf32> to vector<64x32xf32>
    %183 = arith.addf %173, %182 : vector<64x32xf32>
    %184 = vector.broadcast %164 : vector<1x32xf32> to vector<64x32xf32>
    %185 = arith.addf %183, %184 : vector<64x32xf32>
    %cst_95 = arith.constant dense<0.000000e+00> : vector<64xf32>
    %186 = vector.multi_reduction <add>, %185, %cst_95 [1] : vector<64x32xf32> to vector<64xf32>
    %187 = vector.shape_cast %186 : vector<64xf32> to vector<64x1xf32>
    %cst_96 = arith.constant 3.200000e+01 : f32
    %188 = vector.broadcast %cst_96 : f32 to vector<64x1xf32>
    %189 = arith.divf %187, %188 : vector<64x1xf32>
    %190 = arith.mulf %185, %185 : vector<64x32xf32>
    %cst_97 = arith.constant dense<0.000000e+00> : vector<64xf32>
    %191 = vector.multi_reduction <add>, %190, %cst_97 [1] : vector<64x32xf32> to vector<64xf32>
    %192 = vector.shape_cast %191 : vector<64xf32> to vector<64x1xf32>
    %cst_98 = arith.constant 3.200000e+01 : f32
    %193 = vector.broadcast %cst_98 : f32 to vector<64x1xf32>
    %194 = arith.divf %192, %193 : vector<64x1xf32>
    %195 = arith.mulf %189, %189 : vector<64x1xf32>
    %196 = arith.subf %194, %195 : vector<64x1xf32>
    %197 = vector.broadcast %189 : vector<64x1xf32> to vector<64x32xf32>
    %198 = arith.subf %185, %197 : vector<64x32xf32>
    %cst_99 = arith.constant 9.99999974E-6 : f32
    %199 = vector.broadcast %cst_99 : f32 to vector<64x1xf32>
    %200 = arith.addf %196, %199 : vector<64x1xf32>
    %201 = math.rsqrt %200 : vector<64x1xf32>
    %202 = vector.broadcast %201 : vector<64x1xf32> to vector<64x32xf32>
    %203 = arith.mulf %198, %202 : vector<64x32xf32>
    %204 = vector.broadcast %166 : vector<1x32xf32> to vector<64x32xf32>
    %205 = arith.mulf %203, %204 : vector<64x32xf32>
    %206 = vector.broadcast %168 : vector<1x32xf32> to vector<64x32xf32>
    %207 = arith.addf %205, %206 : vector<64x32xf32>
    %cst_100 = arith.constant 0.000000e+00 : f32
    %208 = vector.broadcast %cst_100 : f32 to vector<64x32xf32>
    %209 = arith.maximumf %207, %208 : vector<64x32xf32>
    %c2_101 = arith.constant 2 : index
    %c0_102 = arith.constant 0 : index
    %c0_103 = arith.constant 0 : index
    %210 = vector.load %arg5[%c2_101, %c0_102, %c0_103] : memref<5x3x64xf32, #tpu.memory_space<vmem>>, vector<1x1x16xf32>
    %211 = vector.shape_cast %210 : vector<1x1x16xf32> to vector<1x16xf32>
    %c2_104 = arith.constant 2 : index
    %c1_105 = arith.constant 1 : index
    %c0_106 = arith.constant 0 : index
    %212 = vector.load %arg5[%c2_104, %c1_105, %c0_106] : memref<5x3x64xf32, #tpu.memory_space<vmem>>, vector<1x1x16xf32>
    %213 = vector.shape_cast %212 : vector<1x1x16xf32> to vector<1x16xf32>
    %c2_107 = arith.constant 2 : index
    %c2_108 = arith.constant 2 : index
    %c0_109 = arith.constant 0 : index
    %214 = vector.load %arg5[%c2_107, %c2_108, %c0_109] : memref<5x3x64xf32, #tpu.memory_space<vmem>>, vector<1x1x16xf32>
    %215 = vector.shape_cast %214 : vector<1x1x16xf32> to vector<1x16xf32>
    %c2_110 = arith.constant 2 : index
    %c0_111 = arith.constant 0 : index
    %c0_112 = arith.constant 0 : index
    %216 = vector.load %arg4[%c2_110, %c0_111, %c0_112] : memref<5x32x64xf32, #tpu.memory_space<vmem>>, vector<1x32x16xf32>
    %217 = vector.shape_cast %216 : vector<1x32x16xf32> to vector<32x16xf32>
    %218 = arith.truncf %209 : vector<64x32xf32> to vector<64x32xbf16>
    %219 = arith.truncf %217 : vector<32x16xf32> to vector<32x16xbf16>
    %cst_113 = arith.constant dense<0.000000e+00> : vector<64x16xf32>
    %220 = tpu.matmul %218, %219, %cst_113 {dimension_numbers = #tpu.dot_dimension_numbers<[1], [0], [0], [1], [0, 0, 1, 1], [], []>} : vector<64x32xbf16>, vector<32x16xbf16>, vector<64x16xf32> -> vector<64x16xf32>
    %221 = vector.broadcast %211 : vector<1x16xf32> to vector<64x16xf32>
    %222 = arith.addf %220, %221 : vector<64x16xf32>
    %cst_114 = arith.constant dense<0.000000e+00> : vector<64xf32>
    %223 = vector.multi_reduction <add>, %222, %cst_114 [1] : vector<64x16xf32> to vector<64xf32>
    %224 = vector.shape_cast %223 : vector<64xf32> to vector<64x1xf32>
    %cst_115 = arith.constant 1.600000e+01 : f32
    %225 = vector.broadcast %cst_115 : f32 to vector<64x1xf32>
    %226 = arith.divf %224, %225 : vector<64x1xf32>
    %227 = arith.mulf %222, %222 : vector<64x16xf32>
    %cst_116 = arith.constant dense<0.000000e+00> : vector<64xf32>
    %228 = vector.multi_reduction <add>, %227, %cst_116 [1] : vector<64x16xf32> to vector<64xf32>
    %229 = vector.shape_cast %228 : vector<64xf32> to vector<64x1xf32>
    %cst_117 = arith.constant 1.600000e+01 : f32
    %230 = vector.broadcast %cst_117 : f32 to vector<64x1xf32>
    %231 = arith.divf %229, %230 : vector<64x1xf32>
    %232 = arith.mulf %226, %226 : vector<64x1xf32>
    %233 = arith.subf %231, %232 : vector<64x1xf32>
    %234 = vector.broadcast %226 : vector<64x1xf32> to vector<64x16xf32>
    %235 = arith.subf %222, %234 : vector<64x16xf32>
    %cst_118 = arith.constant 9.99999974E-6 : f32
    %236 = vector.broadcast %cst_118 : f32 to vector<64x1xf32>
    %237 = arith.addf %233, %236 : vector<64x1xf32>
    %238 = math.rsqrt %237 : vector<64x1xf32>
    %239 = vector.broadcast %238 : vector<64x1xf32> to vector<64x16xf32>
    %240 = arith.mulf %235, %239 : vector<64x16xf32>
    %241 = vector.broadcast %213 : vector<1x16xf32> to vector<64x16xf32>
    %242 = arith.mulf %240, %241 : vector<64x16xf32>
    %243 = vector.broadcast %215 : vector<1x16xf32> to vector<64x16xf32>
    %244 = arith.addf %242, %243 : vector<64x16xf32>
    %cst_119 = arith.constant 0.000000e+00 : f32
    %245 = vector.broadcast %cst_119 : f32 to vector<64x16xf32>
    %246 = arith.maximumf %244, %245 : vector<64x16xf32>
    %247 = vector.shape_cast %246 : vector<64x16xf32> to vector<8x8x16xf32>
    %cst_120 = arith.constant dense<0xFF800000> : vector<8x16xf32>
    %248 = vector.multi_reduction <maximumf>, %247, %cst_120 [1] : vector<8x8x16xf32> to vector<8x16xf32>
    %c3 = arith.constant 3 : index
    %c0_121 = arith.constant 0 : index
    %c0_122 = arith.constant 0 : index
    %249 = vector.load %arg3[%c3, %c0_121, %c0_122] : memref<5x3x32xf32, #tpu.memory_space<vmem>>, vector<1x1x32xf32>
    %250 = vector.shape_cast %249 : vector<1x1x32xf32> to vector<1x32xf32>
    %c3_123 = arith.constant 3 : index
    %c1_124 = arith.constant 1 : index
    %c0_125 = arith.constant 0 : index
    %251 = vector.load %arg3[%c3_123, %c1_124, %c0_125] : memref<5x3x32xf32, #tpu.memory_space<vmem>>, vector<1x1x32xf32>
    %252 = vector.shape_cast %251 : vector<1x1x32xf32> to vector<1x32xf32>
    %c3_126 = arith.constant 3 : index
    %c2_127 = arith.constant 2 : index
    %c0_128 = arith.constant 0 : index
    %253 = vector.load %arg3[%c3_126, %c2_127, %c0_128] : memref<5x3x32xf32, #tpu.memory_space<vmem>>, vector<1x1x32xf32>
    %254 = vector.shape_cast %253 : vector<1x1x32xf32> to vector<1x32xf32>
    %c3_129 = arith.constant 3 : index
    %c16 = arith.constant 16 : index
    %c0_130 = arith.constant 0 : index
    %255 = vector.load %arg2[%c3_129, %c16, %c0_130] : memref<5x64x32xf32, #tpu.memory_space<vmem>>, vector<1x16x32xf32>
    %256 = vector.shape_cast %255 : vector<1x16x32xf32> to vector<16x32xf32>
    %257 = arith.truncf %246 : vector<64x16xf32> to vector<64x16xbf16>
    %258 = arith.truncf %256 : vector<16x32xf32> to vector<16x32xbf16>
    %cst_131 = arith.constant dense<0.000000e+00> : vector<64x32xf32>
    %259 = tpu.matmul %257, %258, %cst_131 {dimension_numbers = #tpu.dot_dimension_numbers<[1], [0], [0], [1], [0, 0, 1, 1], [], []>} : vector<64x16xbf16>, vector<16x32xbf16>, vector<64x32xf32> -> vector<64x32xf32>
    %c3_132 = arith.constant 3 : index
    %c0_133 = arith.constant 0 : index
    %c0_134 = arith.constant 0 : index
    %260 = vector.load %arg2[%c3_132, %c0_133, %c0_134] : memref<5x64x32xf32, #tpu.memory_space<vmem>>, vector<1x16x32xf32>
    %261 = vector.shape_cast %260 : vector<1x16x32xf32> to vector<16x32xf32>
    %262 = arith.truncf %248 : vector<8x16xf32> to vector<8x16xbf16>
    %263 = arith.truncf %261 : vector<16x32xf32> to vector<16x32xbf16>
    %cst_135 = arith.constant dense<0.000000e+00> : vector<8x32xf32>
    %264 = tpu.matmul %262, %263, %cst_135 {dimension_numbers = #tpu.dot_dimension_numbers<[1], [0], [0], [1], [0, 0, 1, 1], [], []>} : vector<8x16xbf16>, vector<16x32xbf16>, vector<8x32xf32> -> vector<8x32xf32>
    %265 = vector.shape_cast %264 : vector<8x32xf32> to vector<8x1x32xf32>
    %266 = vector.shape_cast %265 : vector<8x1x32xf32> to vector<8x1x32xf32>
    %267 = vector.broadcast %266 : vector<8x1x32xf32> to vector<8x8x32xf32>
    %268 = vector.shape_cast %267 : vector<8x8x32xf32> to vector<64x32xf32>
    %269 = arith.addf %259, %268 : vector<64x32xf32>
    %270 = vector.broadcast %250 : vector<1x32xf32> to vector<64x32xf32>
    %271 = arith.addf %269, %270 : vector<64x32xf32>
    %cst_136 = arith.constant dense<0.000000e+00> : vector<64xf32>
    %272 = vector.multi_reduction <add>, %271, %cst_136 [1] : vector<64x32xf32> to vector<64xf32>
    %273 = vector.shape_cast %272 : vector<64xf32> to vector<64x1xf32>
    %cst_137 = arith.constant 3.200000e+01 : f32
    %274 = vector.broadcast %cst_137 : f32 to vector<64x1xf32>
    %275 = arith.divf %273, %274 : vector<64x1xf32>
    %276 = arith.mulf %271, %271 : vector<64x32xf32>
    %cst_138 = arith.constant dense<0.000000e+00> : vector<64xf32>
    %277 = vector.multi_reduction <add>, %276, %cst_138 [1] : vector<64x32xf32> to vector<64xf32>
    %278 = vector.shape_cast %277 : vector<64xf32> to vector<64x1xf32>
    %cst_139 = arith.constant 3.200000e+01 : f32
    %279 = vector.broadcast %cst_139 : f32 to vector<64x1xf32>
    %280 = arith.divf %278, %279 : vector<64x1xf32>
    %281 = arith.mulf %275, %275 : vector<64x1xf32>
    %282 = arith.subf %280, %281 : vector<64x1xf32>
    %283 = vector.broadcast %275 : vector<64x1xf32> to vector<64x32xf32>
    %284 = arith.subf %271, %283 : vector<64x32xf32>
    %cst_140 = arith.constant 9.99999974E-6 : f32
    %285 = vector.broadcast %cst_140 : f32 to vector<64x1xf32>
    %286 = arith.addf %282, %285 : vector<64x1xf32>
    %287 = math.rsqrt %286 : vector<64x1xf32>
    %288 = vector.broadcast %287 : vector<64x1xf32> to vector<64x32xf32>
    %289 = arith.mulf %284, %288 : vector<64x32xf32>
    %290 = vector.broadcast %252 : vector<1x32xf32> to vector<64x32xf32>
    %291 = arith.mulf %289, %290 : vector<64x32xf32>
    %292 = vector.broadcast %254 : vector<1x32xf32> to vector<64x32xf32>
    %293 = arith.addf %291, %292 : vector<64x32xf32>
    %cst_141 = arith.constant 0.000000e+00 : f32
    %294 = vector.broadcast %cst_141 : f32 to vector<64x32xf32>
    %295 = arith.maximumf %293, %294 : vector<64x32xf32>
    %c3_142 = arith.constant 3 : index
    %c0_143 = arith.constant 0 : index
    %c0_144 = arith.constant 0 : index
    %296 = vector.load %arg5[%c3_142, %c0_143, %c0_144] : memref<5x3x64xf32, #tpu.memory_space<vmem>>, vector<1x1x32xf32>
    %297 = vector.shape_cast %296 : vector<1x1x32xf32> to vector<1x32xf32>
    %c3_145 = arith.constant 3 : index
    %c1_146 = arith.constant 1 : index
    %c0_147 = arith.constant 0 : index
    %298 = vector.load %arg5[%c3_145, %c1_146, %c0_147] : memref<5x3x64xf32, #tpu.memory_space<vmem>>, vector<1x1x32xf32>
    %299 = vector.shape_cast %298 : vector<1x1x32xf32> to vector<1x32xf32>
    %c3_148 = arith.constant 3 : index
    %c2_149 = arith.constant 2 : index
    %c0_150 = arith.constant 0 : index
    %300 = vector.load %arg5[%c3_148, %c2_149, %c0_150] : memref<5x3x64xf32, #tpu.memory_space<vmem>>, vector<1x1x32xf32>
    %301 = vector.shape_cast %300 : vector<1x1x32xf32> to vector<1x32xf32>
    %c3_151 = arith.constant 3 : index
    %c0_152 = arith.constant 0 : index
    %c0_153 = arith.constant 0 : index
    %302 = vector.load %arg4[%c3_151, %c0_152, %c0_153] : memref<5x32x64xf32, #tpu.memory_space<vmem>>, vector<1x32x32xf32>
    %303 = vector.shape_cast %302 : vector<1x32x32xf32> to vector<32x32xf32>
    %304 = arith.truncf %295 : vector<64x32xf32> to vector<64x32xbf16>
    %305 = arith.truncf %303 : vector<32x32xf32> to vector<32x32xbf16>
    %cst_154 = arith.constant dense<0.000000e+00> : vector<64x32xf32>
    %306 = tpu.matmul %304, %305, %cst_154 {dimension_numbers = #tpu.dot_dimension_numbers<[1], [0], [0], [1], [0, 0, 1, 1], [], []>} : vector<64x32xbf16>, vector<32x32xbf16>, vector<64x32xf32> -> vector<64x32xf32>
    %307 = vector.broadcast %297 : vector<1x32xf32> to vector<64x32xf32>
    %308 = arith.addf %306, %307 : vector<64x32xf32>
    %cst_155 = arith.constant dense<0.000000e+00> : vector<64xf32>
    %309 = vector.multi_reduction <add>, %308, %cst_155 [1] : vector<64x32xf32> to vector<64xf32>
    %310 = vector.shape_cast %309 : vector<64xf32> to vector<64x1xf32>
    %cst_156 = arith.constant 3.200000e+01 : f32
    %311 = vector.broadcast %cst_156 : f32 to vector<64x1xf32>
    %312 = arith.divf %310, %311 : vector<64x1xf32>
    %313 = arith.mulf %308, %308 : vector<64x32xf32>
    %cst_157 = arith.constant dense<0.000000e+00> : vector<64xf32>
    %314 = vector.multi_reduction <add>, %313, %cst_157 [1] : vector<64x32xf32> to vector<64xf32>
    %315 = vector.shape_cast %314 : vector<64xf32> to vector<64x1xf32>
    %cst_158 = arith.constant 3.200000e+01 : f32
    %316 = vector.broadcast %cst_158 : f32 to vector<64x1xf32>
    %317 = arith.divf %315, %316 : vector<64x1xf32>
    %318 = arith.mulf %312, %312 : vector<64x1xf32>
    %319 = arith.subf %317, %318 : vector<64x1xf32>
    %320 = vector.broadcast %312 : vector<64x1xf32> to vector<64x32xf32>
    %321 = arith.subf %308, %320 : vector<64x32xf32>
    %cst_159 = arith.constant 9.99999974E-6 : f32
    %322 = vector.broadcast %cst_159 : f32 to vector<64x1xf32>
    %323 = arith.addf %319, %322 : vector<64x1xf32>
    %324 = math.rsqrt %323 : vector<64x1xf32>
    %325 = vector.broadcast %324 : vector<64x1xf32> to vector<64x32xf32>
    %326 = arith.mulf %321, %325 : vector<64x32xf32>
    %327 = vector.broadcast %299 : vector<1x32xf32> to vector<64x32xf32>
    %328 = arith.mulf %326, %327 : vector<64x32xf32>
    %329 = vector.broadcast %301 : vector<1x32xf32> to vector<64x32xf32>
    %330 = arith.addf %328, %329 : vector<64x32xf32>
    %cst_160 = arith.constant 0.000000e+00 : f32
    %331 = vector.broadcast %cst_160 : f32 to vector<64x32xf32>
    %332 = arith.maximumf %330, %331 : vector<64x32xf32>
    %333 = vector.shape_cast %332 : vector<64x32xf32> to vector<8x8x32xf32>
    %cst_161 = arith.constant dense<0xFF800000> : vector<8x32xf32>
    %334 = vector.multi_reduction <maximumf>, %333, %cst_161 [1] : vector<8x8x32xf32> to vector<8x32xf32>
    %c4_162 = arith.constant 4 : index
    %c0_163 = arith.constant 0 : index
    %c0_164 = arith.constant 0 : index
    %335 = vector.load %arg3[%c4_162, %c0_163, %c0_164] : memref<5x3x32xf32, #tpu.memory_space<vmem>>, vector<1x1x32xf32>
    %336 = vector.shape_cast %335 : vector<1x1x32xf32> to vector<1x32xf32>
    %c4_165 = arith.constant 4 : index
    %c1_166 = arith.constant 1 : index
    %c0_167 = arith.constant 0 : index
    %337 = vector.load %arg3[%c4_165, %c1_166, %c0_167] : memref<5x3x32xf32, #tpu.memory_space<vmem>>, vector<1x1x32xf32>
    %338 = vector.shape_cast %337 : vector<1x1x32xf32> to vector<1x32xf32>
    %c4_168 = arith.constant 4 : index
    %c2_169 = arith.constant 2 : index
    %c0_170 = arith.constant 0 : index
    %339 = vector.load %arg3[%c4_168, %c2_169, %c0_170] : memref<5x3x32xf32, #tpu.memory_space<vmem>>, vector<1x1x32xf32>
    %340 = vector.shape_cast %339 : vector<1x1x32xf32> to vector<1x32xf32>
    %c4_171 = arith.constant 4 : index
    %c32 = arith.constant 32 : index
    %c0_172 = arith.constant 0 : index
    %341 = vector.load %arg2[%c4_171, %c32, %c0_172] : memref<5x64x32xf32, #tpu.memory_space<vmem>>, vector<1x32x32xf32>
    %342 = vector.shape_cast %341 : vector<1x32x32xf32> to vector<32x32xf32>
    %343 = arith.truncf %332 : vector<64x32xf32> to vector<64x32xbf16>
    %344 = arith.truncf %342 : vector<32x32xf32> to vector<32x32xbf16>
    %cst_173 = arith.constant dense<0.000000e+00> : vector<64x32xf32>
    %345 = tpu.matmul %343, %344, %cst_173 {dimension_numbers = #tpu.dot_dimension_numbers<[1], [0], [0], [1], [0, 0, 1, 1], [], []>} : vector<64x32xbf16>, vector<32x32xbf16>, vector<64x32xf32> -> vector<64x32xf32>
    %c4_174 = arith.constant 4 : index
    %c0_175 = arith.constant 0 : index
    %c0_176 = arith.constant 0 : index
    %346 = vector.load %arg2[%c4_174, %c0_175, %c0_176] : memref<5x64x32xf32, #tpu.memory_space<vmem>>, vector<1x32x32xf32>
    %347 = vector.shape_cast %346 : vector<1x32x32xf32> to vector<32x32xf32>
    %348 = arith.truncf %334 : vector<8x32xf32> to vector<8x32xbf16>
    %349 = arith.truncf %347 : vector<32x32xf32> to vector<32x32xbf16>
    %cst_177 = arith.constant dense<0.000000e+00> : vector<8x32xf32>
    %350 = tpu.matmul %348, %349, %cst_177 {dimension_numbers = #tpu.dot_dimension_numbers<[1], [0], [0], [1], [0, 0, 1, 1], [], []>} : vector<8x32xbf16>, vector<32x32xbf16>, vector<8x32xf32> -> vector<8x32xf32>
    %351 = vector.shape_cast %350 : vector<8x32xf32> to vector<8x1x32xf32>
    %352 = vector.shape_cast %351 : vector<8x1x32xf32> to vector<8x1x32xf32>
    %353 = vector.broadcast %352 : vector<8x1x32xf32> to vector<8x8x32xf32>
    %354 = vector.shape_cast %353 : vector<8x8x32xf32> to vector<64x32xf32>
    %355 = arith.addf %345, %354 : vector<64x32xf32>
    %356 = vector.broadcast %336 : vector<1x32xf32> to vector<64x32xf32>
    %357 = arith.addf %355, %356 : vector<64x32xf32>
    %cst_178 = arith.constant dense<0.000000e+00> : vector<64xf32>
    %358 = vector.multi_reduction <add>, %357, %cst_178 [1] : vector<64x32xf32> to vector<64xf32>
    %359 = vector.shape_cast %358 : vector<64xf32> to vector<64x1xf32>
    %cst_179 = arith.constant 3.200000e+01 : f32
    %360 = vector.broadcast %cst_179 : f32 to vector<64x1xf32>
    %361 = arith.divf %359, %360 : vector<64x1xf32>
    %362 = arith.mulf %357, %357 : vector<64x32xf32>
    %cst_180 = arith.constant dense<0.000000e+00> : vector<64xf32>
    %363 = vector.multi_reduction <add>, %362, %cst_180 [1] : vector<64x32xf32> to vector<64xf32>
    %364 = vector.shape_cast %363 : vector<64xf32> to vector<64x1xf32>
    %cst_181 = arith.constant 3.200000e+01 : f32
    %365 = vector.broadcast %cst_181 : f32 to vector<64x1xf32>
    %366 = arith.divf %364, %365 : vector<64x1xf32>
    %367 = arith.mulf %361, %361 : vector<64x1xf32>
    %368 = arith.subf %366, %367 : vector<64x1xf32>
    %369 = vector.broadcast %361 : vector<64x1xf32> to vector<64x32xf32>
    %370 = arith.subf %357, %369 : vector<64x32xf32>
    %cst_182 = arith.constant 9.99999974E-6 : f32
    %371 = vector.broadcast %cst_182 : f32 to vector<64x1xf32>
    %372 = arith.addf %368, %371 : vector<64x1xf32>
    %373 = math.rsqrt %372 : vector<64x1xf32>
    %374 = vector.broadcast %373 : vector<64x1xf32> to vector<64x32xf32>
    %375 = arith.mulf %370, %374 : vector<64x32xf32>
    %376 = vector.broadcast %338 : vector<1x32xf32> to vector<64x32xf32>
    %377 = arith.mulf %375, %376 : vector<64x32xf32>
    %378 = vector.broadcast %340 : vector<1x32xf32> to vector<64x32xf32>
    %379 = arith.addf %377, %378 : vector<64x32xf32>
    %cst_183 = arith.constant 0.000000e+00 : f32
    %380 = vector.broadcast %cst_183 : f32 to vector<64x32xf32>
    %381 = arith.maximumf %379, %380 : vector<64x32xf32>
    %c4_184 = arith.constant 4 : index
    %c0_185 = arith.constant 0 : index
    %c0_186 = arith.constant 0 : index
    %382 = vector.load %arg5[%c4_184, %c0_185, %c0_186] : memref<5x3x64xf32, #tpu.memory_space<vmem>>, vector<1x1x64xf32>
    %383 = vector.shape_cast %382 : vector<1x1x64xf32> to vector<1x64xf32>
    %c4_187 = arith.constant 4 : index
    %c1_188 = arith.constant 1 : index
    %c0_189 = arith.constant 0 : index
    %384 = vector.load %arg5[%c4_187, %c1_188, %c0_189] : memref<5x3x64xf32, #tpu.memory_space<vmem>>, vector<1x1x64xf32>
    %385 = vector.shape_cast %384 : vector<1x1x64xf32> to vector<1x64xf32>
    %c4_190 = arith.constant 4 : index
    %c2_191 = arith.constant 2 : index
    %c0_192 = arith.constant 0 : index
    %386 = vector.load %arg5[%c4_190, %c2_191, %c0_192] : memref<5x3x64xf32, #tpu.memory_space<vmem>>, vector<1x1x64xf32>
    %387 = vector.shape_cast %386 : vector<1x1x64xf32> to vector<1x64xf32>
    %c4_193 = arith.constant 4 : index
    %c0_194 = arith.constant 0 : index
    %c0_195 = arith.constant 0 : index
    %388 = vector.load %arg4[%c4_193, %c0_194, %c0_195] : memref<5x32x64xf32, #tpu.memory_space<vmem>>, vector<1x32x64xf32>
    %389 = vector.shape_cast %388 : vector<1x32x64xf32> to vector<32x64xf32>
    %390 = arith.truncf %381 : vector<64x32xf32> to vector<64x32xbf16>
    %391 = arith.truncf %389 : vector<32x64xf32> to vector<32x64xbf16>
    %cst_196 = arith.constant dense<0.000000e+00> : vector<64x64xf32>
    %392 = tpu.matmul %390, %391, %cst_196 {dimension_numbers = #tpu.dot_dimension_numbers<[1], [0], [0], [1], [0, 0, 1, 1], [], []>} : vector<64x32xbf16>, vector<32x64xbf16>, vector<64x64xf32> -> vector<64x64xf32>
    %393 = vector.broadcast %383 : vector<1x64xf32> to vector<64x64xf32>
    %394 = arith.addf %392, %393 : vector<64x64xf32>
    %cst_197 = arith.constant dense<0.000000e+00> : vector<64xf32>
    %395 = vector.multi_reduction <add>, %394, %cst_197 [1] : vector<64x64xf32> to vector<64xf32>
    %396 = vector.shape_cast %395 : vector<64xf32> to vector<64x1xf32>
    %cst_198 = arith.constant 6.400000e+01 : f32
    %397 = vector.broadcast %cst_198 : f32 to vector<64x1xf32>
    %398 = arith.divf %396, %397 : vector<64x1xf32>
    %399 = arith.mulf %394, %394 : vector<64x64xf32>
    %cst_199 = arith.constant dense<0.000000e+00> : vector<64xf32>
    %400 = vector.multi_reduction <add>, %399, %cst_199 [1] : vector<64x64xf32> to vector<64xf32>
    %401 = vector.shape_cast %400 : vector<64xf32> to vector<64x1xf32>
    %cst_200 = arith.constant 6.400000e+01 : f32
    %402 = vector.broadcast %cst_200 : f32 to vector<64x1xf32>
    %403 = arith.divf %401, %402 : vector<64x1xf32>
    %404 = arith.mulf %398, %398 : vector<64x1xf32>
    %405 = arith.subf %403, %404 : vector<64x1xf32>
    %406 = vector.broadcast %398 : vector<64x1xf32> to vector<64x64xf32>
    %407 = arith.subf %394, %406 : vector<64x64xf32>
    %cst_201 = arith.constant 9.99999974E-6 : f32
    %408 = vector.broadcast %cst_201 : f32 to vector<64x1xf32>
    %409 = arith.addf %405, %408 : vector<64x1xf32>
    %410 = math.rsqrt %409 : vector<64x1xf32>
    %411 = vector.broadcast %410 : vector<64x1xf32> to vector<64x64xf32>
    %412 = arith.mulf %407, %411 : vector<64x64xf32>
    %413 = vector.broadcast %385 : vector<1x64xf32> to vector<64x64xf32>
    %414 = arith.mulf %412, %413 : vector<64x64xf32>
    %415 = vector.broadcast %387 : vector<1x64xf32> to vector<64x64xf32>
    %416 = arith.addf %414, %415 : vector<64x64xf32>
    %cst_202 = arith.constant 0.000000e+00 : f32
    %417 = vector.broadcast %cst_202 : f32 to vector<64x64xf32>
    %418 = arith.maximumf %416, %417 : vector<64x64xf32>
    %419 = vector.shape_cast %418 : vector<64x64xf32> to vector<8x8x64xf32>
    %cst_203 = arith.constant dense<0xFF800000> : vector<8x64xf32>
    %420 = vector.multi_reduction <maximumf>, %419, %cst_203 [1] : vector<8x8x64xf32> to vector<8x64xf32>
    %c0_204 = arith.constant 0 : index
    %c0_205 = arith.constant 0 : index
    %421 = vector.load %arg6[%c0_204, %c0_205] : memref<64x384xf32, #tpu.memory_space<vmem>>, vector<64x384xf32>
    %422 = arith.truncf %420 : vector<8x64xf32> to vector<8x64xbf16>
    %423 = arith.truncf %421 : vector<64x384xf32> to vector<64x384xbf16>
    %cst_206 = arith.constant dense<0.000000e+00> : vector<8x384xf32>
    %424 = tpu.matmul %422, %423, %cst_206 {dimension_numbers = #tpu.dot_dimension_numbers<[1], [0], [0], [1], [0, 0, 1, 1], [], []>} : vector<8x64xbf16>, vector<64x384xbf16>, vector<8x384xf32> -> vector<8x384xf32>
    %c0_207 = arith.constant 0 : index
    %c0_208 = arith.constant 0 : index
    %425 = vector.load %arg7[%c0_207, %c0_208] : memref<1x384xf32, #tpu.memory_space<vmem>>, vector<1x384xf32>
    %426 = vector.broadcast %425 : vector<1x384xf32> to vector<8x384xf32>
    %427 = arith.addf %424, %426 : vector<8x384xf32>
    %428 = vector.extract_strided_slice %427 {offsets = [0, 0], sizes = [8, 128], strides = [1, 1]} : vector<8x384xf32> to vector<8x128xf32>
    %c0_209 = arith.constant 0 : index
    %c0_210 = arith.constant 0 : index
    %429 = vector.load %arg8[%c0_209, %c0_210] : memref<8x128xf32, #tpu.memory_space<vmem>>, vector<8x128xf32>
    tpu.vector_store %arg8[%c0_209, %c0_210], %428 {strides = array<i32>} : memref<8x128xf32, #tpu.memory_space<vmem>>, vector<8x128xf32>,
    %430 = vector.extract_strided_slice %427 {offsets = [0, 128], sizes = [8, 256], strides = [1, 1]} : vector<8x384xf32> to vector<8x256xf32>
    %c0_211 = arith.constant 0 : index
    %c0_212 = arith.constant 0 : index
    %431 = vector.load %arg9[%c0_211, %c0_212] : memref<8x256xf32, #tpu.memory_space<vmem>>, vector<8x256xf32>
    tpu.vector_store %arg9[%c0_211, %c0_212], %430 {strides = array<i32>} : memref<8x256xf32, #tpu.memory_space<vmem>>, vector<8x256xf32>,
    return
  }
  func.func @transform_0(%arg0: i32) -> (i32, i32) {
    %c0_i32 = arith.constant 0 : i32
    %c0_i32_0 = arith.constant 0 : i32
    return %arg0, %c0_i32 : i32, i32
  }
  func.func @transform_1(%arg0: i32) -> (i32, i32, i32) {
    %c0_i32 = arith.constant 0 : i32
    %c0_i32_0 = arith.constant 0 : i32
    %c0_i32_1 = arith.constant 0 : i32
    %c0_i32_2 = arith.constant 0 : i32
    return %c0_i32, %c0_i32_0, %c0_i32_1 : i32, i32, i32
  }
  func.func @transform_2(%arg0: i32) -> (i32, i32, i32) {
    %c0_i32 = arith.constant 0 : i32
    %c0_i32_0 = arith.constant 0 : i32
    %c0_i32_1 = arith.constant 0 : i32
    %c0_i32_2 = arith.constant 0 : i32
    return %c0_i32, %c0_i32_0, %c0_i32_1 : i32, i32, i32
  }
  func.func @transform_3(%arg0: i32) -> (i32, i32, i32) {
    %c0_i32 = arith.constant 0 : i32
    %c0_i32_0 = arith.constant 0 : i32
    %c0_i32_1 = arith.constant 0 : i32
    %c0_i32_2 = arith.constant 0 : i32
    return %c0_i32, %c0_i32_0, %c0_i32_1 : i32, i32, i32
  }
  func.func @transform_4(%arg0: i32) -> (i32, i32, i32) {
    %c0_i32 = arith.constant 0 : i32
    %c0_i32_0 = arith.constant 0 : i32
    %c0_i32_1 = arith.constant 0 : i32
    %c0_i32_2 = arith.constant 0 : i32
    return %c0_i32, %c0_i32_0, %c0_i32_1 : i32, i32, i32
  }
  func.func @transform_5(%arg0: i32) -> (i32, i32) {
    %c0_i32 = arith.constant 0 : i32
    %c0_i32_0 = arith.constant 0 : i32
    %c0_i32_1 = arith.constant 0 : i32
    return %c0_i32, %c0_i32_0 : i32, i32
  }
  func.func @transform_6(%arg0: i32) -> (i32, i32) {
    %c0_i32 = arith.constant 0 : i32
    %c0_i32_0 = arith.constant 0 : i32
    %c0_i32_1 = arith.constant 0 : i32
    return %c0_i32, %c0_i32_0 : i32, i32
  }
  func.func @transform_7(%arg0: i32) -> (i32, i32) {
    %c0_i32 = arith.constant 0 : i32
    %c0_i32_0 = arith.constant 0 : i32
    return %arg0, %c0_i32 : i32, i32
  }
  func.func @transform_8(%arg0: i32) -> (i32, i32) {
    %c0_i32 = arith.constant 0 : i32
    %c0_i32_0 = arith.constant 0 : i32
    return %arg0, %c0_i32 : i32, i32
  }
}

</mosaic_0001>

<llo_original>
// kernel: run.3
$region0: #{run.3}
  #allocation0 [shape = 'u32[]', space=smem, size = 0x4, offset = 0x4, fixed_abs, tag = 'smem constant byte address 0x4 - core index']
  #allocation1 [shape = 'u32[72,128]{1,0:T(1,128)}', space=vmem, size = 0x9000, scoped, tag = 'internal scratch']
  %s0 = inlined_call_operand.vmem [shape: f32[8,128], index: 0, kind: input, shape index: {}]
  %s1 = inlined_call_operand.vmem [shape: f32[8,256], index: 1, kind: input, shape index: {}]
  %s2 = inlined_call_operand.vmem [shape: s32[8,1], index: 2, kind: input, shape index: {}]
  %s3 = inlined_call_operand.vmem [shape: s32[1,8], index: 3, kind: input, shape index: {}]
  %s4 = inlined_call_operand.hbm [shape: f32[8,128], index: 4, kind: output, shape index: {}]
  %s5 = sld [smem:[#allocation0]]
  $region26: #{run.3} parent=0
    _
  %s7 = ssub.s32 1, %s5
  %s8 = scalar_select 0, %s7, %s5
  $region1: #{run.3} parent=0
    #allocation2 [shape = 'u8[4096]{0}', space=vmem, size = 0x1000, scoped, tag = 'output window, operand 0, single buffered']
    #allocation3 [shape = 's32[1]{0}', space=sflag, size = 0x4, scoped, tag = 'scoped memory for run.3']
    %9 = vsyncpa [#allocation3], 0
    // Predicated region
    $region2: #{run.3} parent=1 // pred_check
      _
    $region3: #{run.3} parent=1 // pred_check_branch
      %11 = sbr.rel (0) target = $region5
    $region4: #{run.3} parent=1 // pred_region
      _
    $region5: #{run.3} parent=1 // pred_fallthru
      _
    // Predicated region
    $region6: #{run.3} parent=1 // pred_check
      _
    $region7: #{run.3} parent=1 // pred_check_branch
      %13 = sbr.rel (0) target = $region9
    $region8: #{run.3} parent=1 // pred_region
      _
    $region9: #{run.3} parent=1 // pred_fallthru
      _
    // Predicated region
    $region10: #{run.3} parent=1 // pred_check
      _
    $region11: #{run.3} parent=1 // pred_check_branch
      %15 = sbr.rel (0) target = $region13
    $region12: #{run.3} parent=1 // pred_region
      _
    $region13: #{run.3} parent=1 // pred_fallthru
      _
    // Predicated region
    $region14: #{run.3} parent=1 // pred_check
      _
    $region15: #{run.3} parent=1 // pred_check_branch
      %17 = sbr.rel (0) target = $region17
    $region16: #{run.3} parent=1 // pred_region
      _
    $region17: #{run.3} parent=1 // pred_fallthru
      _
    %v19 = vld [vmem:[%s0] sm:$0xff]
    %v20 = vld [vmem:[%s1] sm:$0xff]
    %v21 = vld [vmem:[%s1 + $0x8] sm:$0xff]
    %v22 = vpack.c.bf16 %v19, %v19
    %v23 = vpack.c.bf16 %v20, %v20
    %24 = vmatpush.bf16.xpose.msra.mxu0 0
    %25 = vmatpush.bf16.xpose.msra.mxu0 0
    %26 = vmatpush.bf16.xpose.msra.mxu0 0
    %27 = vmatpush.bf16.xpose.msra.mxu0 0
    %28 = vmatpush.bf16.xpose.msra.mxu0 0
    %29 = vmatpush.bf16.xpose.msra.mxu0 0
    %30 = vmatpush.bf16.xpose.msra.mxu0 0
    %31 = vmatpush.bf16.xpose.msra.mxu0 %v23
    %32 = vmatmul.bf16.gmra.mxu0 %v22
    %v33 = vpop.f32.mrf.mxu0
    %v34 = vadd.f32 0.0, %v33
    %v35 = vpop.f32.mrf.mxu0
    %36 = vdwg.mxu0
    %v37 = vld [vmem:[%s2] sm:$0xff]
    %v38 = vld [vmem:[%s3] sm:$0x1]
    %39 = vset.pattern.permute.xlu0 0
    %40 = vperm.xlu0 %39, %v37
    %v41 = vpop.permute.xlu0 %40
    %v42 = vperm.slane %v38, 0
    %vm43 = vcmp.eq.s32.totalorder %v41, %v42
    %v44 = vsel %vm43, %v34, -1e+30
    %vm45 = vcmask 64512
    %v46 = vsel %vm45, %v44, -inf
    %47 = vmax.xlane.f32.xlu0 %v46
    %v48 = vpop.xlane.xlu0 %47
    %v49 = vsub.f32 %v44, %v48
    %v50 = vmul.f32 %v49, 1.442695
    %v51 = vpow.pop %v50
    %v52 = vsel %vm45, %v51, 0.0
    %53 = vadd.xlane.f32.xlu0 %v52
    %v54 = vpop.xlane.xlu0 %53
    %v55 = vrcp.pop %v54
    %v56 = vmul.f32 %v54, %v55
    %v57 = vsub.f32 1.0, %v56
    %v58 = vmul.f32 %v55, %v57
    %v59 = vadd.f32 %v55, %v58
    %vm60 = vweird.f32 %v54
    %vm61 = vweird.f32 %v55
    %vm62 = vmor %vm60, %vm61
    %v63 = vsel %vm62, %v55, %v59
    %v64 = vand.u32 2147483647, %v54
    %vm65 = vcmp.eq.f32.partialorder %v64, 8.507059e+37
    %v66 = vand.u32 %v54, 2147483648
    %v67 = vor.u32 1.1754944e-38, %v66
    %v68 = vsel %vm65, %v67, %v63
    %v69 = vmul.f32 %v51, %v68
    %v70 = vpack.c.bf16 %v69, %v69
    %v71 = vpack.c.bf16 %v21, %v21
    %v73 = vsel %vm45, %v70, 0
    %vm75 = vcmask 1043456
    %v77 = vsel %vm75, %v71, 0
    %79 = vmatpush.bf16.msra.mxu0 0
    %80 = vmatpush.bf16.msra.mxu0 0
    %81 = vmatpush.bf16.msra.mxu0 0
    %82 = vmatpush.bf16.msra.mxu0 0
    %83 = vmatpush.bf16.msra.mxu0 0
    %84 = vmatpush.bf16.msra.mxu0 0
    %85 = vmatpush.bf16.msra.mxu0 0
    %86 = vmatpush.bf16.msra.mxu0 %v77
    %87 = vmatmul.bf16.gmra.mxu0 %v73
    %v88 = vpop.f32.mrf.mxu0
    %v89 = vadd.f32 0.0, %v88
    %v90 = vpop.f32.mrf.mxu0
    %91 = vdwg.mxu0
    %92 = vst [vmem:[#allocation2] sm:$0xff] %v89
    // Predicated region
    $region18: #{run.3} parent=1 // pred_check
      _
    $region19: #{run.3} parent=1 // pred_check_branch
      %94 = sbr.rel (0) target = $region21
    $region20: #{run.3} parent=1 // pred_region
      %96 = vsyncadd [#allocation3], 0
      %s98 = sshll.u32 [#allocation2], 4
      %s99 = int_to_ptr.vmem [resolvable:$true] %s98
      %s100 = sshll.u32 %s4, 4
      %s101 = int_to_ptr.hbm [resolvable:$true] %s100
      %103 = dma.vmem_to_hbm [thread:$0]  %s99, 128, %s101, [#allocation3]
    $region21: #{run.3} parent=1 // pred_fallthru
      _
    // Predicated region
    $region22: #{run.3} parent=1 // pred_check
      _
    $region23: #{run.3} parent=1 // pred_check_branch
      %105 = sbr.rel (0) target = $region25
    $region24: #{run.3} parent=1 // pred_region
      %107 = dma.done [#allocation3], 128
    $region25: #{run.3} parent=1 // pred_fallthru
      _
    %108 = vsyncpa [#allocation3], 1

// kernel: run.2
$region0: #{run.2}
  #allocation0 [shape = 'u32[]', space=smem, size = 0x4, offset = 0x4, fixed_abs, tag = 'smem constant byte address 0x4 - core index']
  #allocation1 [shape = 'u32[72,128]{1,0:T(1,128)}', space=vmem, size = 0x9000, scoped, tag = 'internal scratch']
  %s0 = inlined_call_operand.vmem [shape: f32[64,4], index: 0, kind: input, shape index: {}]
  %s1 = inlined_call_operand.vmem [shape: f32[5,64,32], index: 1, kind: input, shape index: {}]
  %s2 = inlined_call_operand.vmem [shape: f32[5,3,32], index: 2, kind: input, shape index: {}]
  %s3 = inlined_call_operand.vmem [shape: f32[5,32,64], index: 3, kind: input, shape index: {}]
  %s4 = inlined_call_operand.vmem [shape: f32[5,3,64], index: 4, kind: input, shape index: {}]
  %s5 = inlined_call_operand.vmem [shape: f32[64,384], index: 5, kind: input, shape index: {}]
  %s6 = inlined_call_operand.vmem [shape: f32[1,384], index: 6, kind: input, shape index: {}]
  %s7 = inlined_call_operand.vmem [shape: f32[8,128], index: 7, kind: output, shape index: {0}]
  %s8 = inlined_call_operand.vmem [shape: f32[8,256], index: 8, kind: output, shape index: {1}]
  %9 = xla_tuple %s7, %s8
  %s10 = sld [smem:[#allocation0]]
  $region46: #{run.2} parent=0
    _
  %s12 = ssub.s32 1, %s10
  %s13 = scalar_select 0, %s12, %s10
  // Predicated region
  $region2: #{run.2} parent=0 // pred_check
    _
  $region3: #{run.2} parent=0 // pred_check_branch
    %15 = sbr.rel (0) target = $region5
  $region4: #{run.2} parent=0 // pred_region
    _
  $region5: #{run.2} parent=0 // pred_fallthru
    _
  // Predicated region
  $region6: #{run.2} parent=0 // pred_check
    _
  $region7: #{run.2} parent=0 // pred_check_branch
    %17 = sbr.rel (0) target = $region9
  $region8: #{run.2} parent=0 // pred_region
    _
  $region9: #{run.2} parent=0 // pred_fallthru
    _
  // Predicated region
  $region10: #{run.2} parent=0 // pred_check
    _
  $region11: #{run.2} parent=0 // pred_check_branch
    %19 = sbr.rel (0) target = $region13
  $region12: #{run.2} parent=0 // pred_region
    _
  $region13: #{run.2} parent=0 // pred_fallthru
    _
  // Predicated region
  $region14: #{run.2} parent=0 // pred_check
    _
  $region15: #{run.2} parent=0 // pred_check_branch
    %21 = sbr.rel (0) target = $region17
  $region16: #{run.2} parent=0 // pred_region
    _
  $region17: #{run.2} parent=0 // pred_fallthru
    _
  // Predicated region
  $region18: #{run.2} parent=0 // pred_check
    _
  $region19: #{run.2} parent=0 // pred_check_branch
    %23 = sbr.rel (0) target = $region21
  $region20: #{run.2} parent=0 // pred_region
    _
  $region21: #{run.2} parent=0 // pred_fallthru
    _
  // Predicated region
  $region22: #{run.2} parent=0 // pred_check
    _
  $region23: #{run.2} parent=0 // pred_check_branch
    %25 = sbr.rel (0) target = $region25
  $region24: #{run.2} parent=0 // pred_region
    _
  $region25: #{run.2} parent=0 // pred_fallthru
    _
  // Predicated region
  $region26: #{run.2} parent=0 // pred_check
    _
  $region27: #{run.2} parent=0 // pred_check_branch
    %27 = sbr.rel (0) target = $region29
  $region28: #{run.2} parent=0 // pred_region
    _
  $region29: #{run.2} parent=0 // pred_fallthru
    _
  %v29 = vld [vmem:[%s2] sm:$0x1]
  %v30 = vld [vmem:[%s2 + $0x1] sm:$0x1]
  %v31 = vld [vmem:[%s2 + $0x2] sm:$0x1]
  %v32 = vld [vmem:[%s0] sm:$0xff]
  %v33 = vld [vmem:[%s0 + $0x8] sm:$0xff]
  %v34 = vld [vmem:[%s0 + $0x10] sm:$0xff]
  %v35 = vld [vmem:[%s0 + $0x18] sm:$0xff]
  %v36 = vld [vmem:[%s0 + $0x20] sm:$0xff]
  %v37 = vld [vmem:[%s0 + $0x28] sm:$0xff]
  %v38 = vld [vmem:[%s0 + $0x30] sm:$0xff]
  %v39 = vld [vmem:[%s0 + $0x38] sm:$0xff]
  %v40 = vld [vmem:[%s1] sm:$0xf]
  %v41 = vpack.c.bf16 %v33, %v32
  %v42 = vpack.c.bf16 %v35, %v34
  %v43 = vpack.c.bf16 %v37, %v36
  %v44 = vpack.c.bf16 %v39, %v38
  %v45 = vpack.c.bf16 %v40, %v40
  %v46 = vperm.slane %v29, 0
  %vm47 = vcmask 31744
  %v49 = vsel %vm47, %v41, 0
  %v52 = vsel %vm47, %v42, 0
  %v55 = vsel %vm47, %v43, 0
  %v58 = vsel %vm47, %v44, 0
  %vm60 = vcmask 1041408
  %v62 = vsel %vm60, %v45, 0
  %64 = vmatpush.bf16.msra.mxu0 0
  %65 = vmatpush.bf16.msra.mxu0 0
  %66 = vmatpush.bf16.msra.mxu0 0
  %67 = vmatpush.bf16.msra.mxu0 0
  %68 = vmatpush.bf16.msra.mxu0 0
  %69 = vmatpush.bf16.msra.mxu0 0
  %70 = vmatpush.bf16.msra.mxu0 0
  %71 = vmatpush.bf16.msra.mxu0 %v62
  %72 = vmatmul.bf16.gmra.mxu0 %v49
  %v73 = vpop.f32.mrf.mxu0
  %v74 = vadd.f32 %v46, %v73
  %v75 = vpop.f32.mrf.mxu0
  %v76 = vadd.f32 %v46, %v75
  %77 = vmatmul.bf16.gmra.mxu0 %v52
  %v78 = vpop.f32.mrf.mxu0
  %v79 = vadd.f32 %v46, %v78
  %v80 = vpop.f32.mrf.mxu0
  %v81 = vadd.f32 %v46, %v80
  %82 = vmatmul.bf16.gmra.mxu0 %v55
  %v83 = vpop.f32.mrf.mxu0
  %v84 = vadd.f32 %v46, %v83
  %v85 = vpop.f32.mrf.mxu0
  %v86 = vadd.f32 %v46, %v85
  %87 = vmatmul.bf16.gmra.mxu0 %v58
  %v88 = vpop.f32.mrf.mxu0
  %v89 = vadd.f32 %v46, %v88
  %v90 = vpop.f32.mrf.mxu0
  %v91 = vadd.f32 %v46, %v90
  %92 = vdwg.mxu0
  %vm93 = vcmask 261120
  %v94 = vsel %vm93, %v74, 0.0
  %95 = vadd.xlane.f32.xlu0 %v94
  %v96 = vpop.xlane.xlu0 %95
  %v97 = vsel %vm93, %v76, 0.0
  %98 = vadd.xlane.f32.xlu0 %v97
  %v99 = vpop.xlane.xlu0 %98
  %v100 = vsel %vm93, %v79, 0.0
  %101 = vadd.xlane.f32.xlu0 %v100
  %v102 = vpop.xlane.xlu0 %101
  %v103 = vsel %vm93, %v81, 0.0
  %104 = vadd.xlane.f32.xlu0 %v103
  %v105 = vpop.xlane.xlu0 %104
  %v106 = vsel %vm93, %v84, 0.0
  %107 = vadd.xlane.f32.xlu0 %v106
  %v108 = vpop.xlane.xlu0 %107
  %v109 = vsel %vm93, %v86, 0.0
  %110 = vadd.xlane.f32.xlu0 %v109
  %v111 = vpop.xlane.xlu0 %110
  %v112 = vsel %vm93, %v89, 0.0
  %113 = vadd.xlane.f32.xlu0 %v112
  %v114 = vpop.xlane.xlu0 %113
  %v115 = vsel %vm93, %v91, 0.0
  %116 = vadd.xlane.f32.xlu0 %v115
  %v117 = vpop.xlane.xlu0 %116
  %v118 = vrcp.pop 32.0
  %v119 = vmul.f32 32.0, %v118
  %v120 = vsub.f32 1.0, %v119
  %v121 = vmul.f32 %v118, %v120
  %v122 = vadd.f32 %v118, %v121
  %vm123 = vweird.f32 %v118
  %v124 = vsel %vm123, %v118, %v122
  %v125 = vmul.f32 %v96, %v124
  %v126 = vmul.f32 %v99, %v124
  %v127 = vmul.f32 %v102, %v124
  %v128 = vmul.f32 %v105, %v124
  %v129 = vmul.f32 %v108, %v124
  %v130 = vmul.f32 %v111, %v124
  %v131 = vmul.f32 %v114, %v124
  %v132 = vmul.f32 %v117, %v124
  %v133 = vmul.f32 %v74, %v74
  %v134 = vmul.f32 %v76, %v76
  %v135 = vmul.f32 %v79, %v79
  %v136 = vmul.f32 %v81, %v81
  %v137 = vmul.f32 %v84, %v84
  %v138 = vmul.f32 %v86, %v86
  %v139 = vmul.f32 %v89, %v89
  %v140 = vmul.f32 %v91, %v91
  %v141 = vsel %vm93, %v133, 0.0
  %142 = vadd.xlane.f32.xlu0 %v141
  %v143 = vpop.xlane.xlu0 %142
  %v144 = vsel %vm93, %v134, 0.0
  %145 = vadd.xlane.f32.xlu0 %v144
  %v146 = vpop.xlane.xlu0 %145
  %v147 = vsel %vm93, %v135, 0.0
  %148 = vadd.xlane.f32.xlu0 %v147
  %v149 = vpop.xlane.xlu0 %148
  %v150 = vsel %vm93, %v136, 0.0
  %151 = vadd.xlane.f32.xlu0 %v150
  %v152 = vpop.xlane.xlu0 %151
  %v153 = vsel %vm93, %v137, 0.0
  %154 = vadd.xlane.f32.xlu0 %v153
  %v155 = vpop.xlane.xlu0 %154
  %v156 = vsel %vm93, %v138, 0.0
  %157 = vadd.xlane.f32.xlu0 %v156
  %v158 = vpop.xlane.xlu0 %157
  %v159 = vsel %vm93, %v139, 0.0
  %160 = vadd.xlane.f32.xlu0 %v159
  %v161 = vpop.xlane.xlu0 %160
  %v162 = vsel %vm93, %v140, 0.0
  %163 = vadd.xlane.f32.xlu0 %v162
  %v164 = vpop.xlane.xlu0 %163
  %v165 = vmul.f32 %v143, %v124
  %v166 = vmul.f32 %v146, %v124
  %v167 = vmul.f32 %v149, %v124
  %v168 = vmul.f32 %v152, %v124
  %v169 = vmul.f32 %v155, %v124
  %v170 = vmul.f32 %v158, %v124
  %v171 = vmul.f32 %v161, %v124
  %v172 = vmul.f32 %v164, %v124
  %v173 = vmul.f32 %v125, %v125
  %v174 = vmul.f32 %v126, %v126
  %v175 = vmul.f32 %v127, %v127
  %v176 = vmul.f32 %v128, %v128
  %v177 = vmul.f32 %v129, %v129
  %v178 = vmul.f32 %v130, %v130
  %v179 = vmul.f32 %v131, %v131
  %v180 = vmul.f32 %v132, %v132
  %v181 = vsub.f32 %v165, %v173
  %v182 = vsub.f32 %v166, %v174
  %v183 = vsub.f32 %v167, %v175
  %v184 = vsub.f32 %v168, %v176
  %v185 = vsub.f32 %v169, %v177
  %v186 = vsub.f32 %v170, %v178
  %v187 = vsub.f32 %v171, %v179
  %v188 = vsub.f32 %v172, %v180
  %v189 = vsub.f32 %v74, %v125
  %v190 = vsub.f32 %v76, %v126
  %v191 = vsub.f32 %v79, %v127
  %v192 = vsub.f32 %v81, %v128
  %v193 = vsub.f32 %v84, %v129
  %v194 = vsub.f32 %v86, %v130
  %v195 = vsub.f32 %v89, %v131
  %v196 = vsub.f32 %v91, %v132
  %v197 = vadd.f32 %v181, 1e-05
  %v198 = vadd.f32 %v182, 1e-05
  %v199 = vadd.f32 %v183, 1e-05
  %v200 = vadd.f32 %v184, 1e-05
  %v201 = vadd.f32 %v185, 1e-05
  %v202 = vadd.f32 %v186, 1e-05
  %v203 = vadd.f32 %v187, 1e-05
  %v204 = vadd.f32 %v188, 1e-05
  %v205 = vrsqrt.pop %v197
  %v206 = vmul.f32 %v205, %v197
  %v207 = vmul.f32 %v206, %v205
  %v208 = vmul.f32 0.5, %v207
  %v209 = vsub.f32 1.5, %v208
  %v210 = vmul.f32 %v205, %v209
  %vm211 = vweird.f32 %v197
  %vm212 = vweird.f32 %v205
  %vm213 = vmor %vm211, %vm212
  %v214 = vsel %vm213, %v205, %v210
  %v215 = vrsqrt.pop %v198
  %v216 = vmul.f32 %v215, %v198
  %v217 = vmul.f32 %v216, %v215
  %v218 = vmul.f32 0.5, %v217
  %v219 = vsub.f32 1.5, %v218
  %v220 = vmul.f32 %v215, %v219
  %vm221 = vweird.f32 %v198
  %vm222 = vweird.f32 %v215
  %vm223 = vmor %vm221, %vm222
  %v224 = vsel %vm223, %v215, %v220
  %v225 = vrsqrt.pop %v199
  %v226 = vmul.f32 %v225, %v199
  %v227 = vmul.f32 %v226, %v225
  %v228 = vmul.f32 0.5, %v227
  %v229 = vsub.f32 1.5, %v228
  %v230 = vmul.f32 %v225, %v229
  %vm231 = vweird.f32 %v199
  %vm232 = vweird.f32 %v225
  %vm233 = vmor %vm231, %vm232
  %v234 = vsel %vm233, %v225, %v230
  %v235 = vrsqrt.pop %v200
  %v236 = vmul.f32 %v235, %v200
  %v237 = vmul.f32 %v236, %v235
  %v238 = vmul.f32 0.5, %v237
  %v239 = vsub.f32 1.5, %v238
  %v240 = vmul.f32 %v235, %v239
  %vm241 = vweird.f32 %v200
  %vm242 = vweird.f32 %v235
  %vm243 = vmor %vm241, %vm242
  %v244 = vsel %vm243, %v235, %v240
  %v245 = vrsqrt.pop %v201
  %v246 = vmul.f32 %v245, %v201
  %v247 = vmul.f32 %v246, %v245
  %v248 = vmul.f32 0.5, %v247
  %v249 = vsub.f32 1.5, %v248
  %v250 = vmul.f32 %v245, %v249
  %vm251 = vweird.f32 %v201
  %vm252 = vweird.f32 %v245
  %vm253 = vmor %vm251, %vm252
  %v254 = vsel %vm253, %v245, %v250
  %v255 = vrsqrt.pop %v202
  %v256 = vmul.f32 %v255, %v202
  %v257 = vmul.f32 %v256, %v255
  %v258 = vmul.f32 0.5, %v257
  %v259 = vsub.f32 1.5, %v258
  %v260 = vmul.f32 %v255, %v259
  %vm261 = vweird.f32 %v202
  %vm262 = vweird.f32 %v255
  %vm263 = vmor %vm261, %vm262
  %v264 = vsel %vm263, %v255, %v260
  %v265 = vrsqrt.pop %v203
  %v266 = vmul.f32 %v265, %v203
  %v267 = vmul.f32 %v266, %v265
  %v268 = vmul.f32 0.5, %v267
  %v269 = vsub.f32 1.5, %v268
  %v270 = vmul.f32 %v265, %v269
  %vm271 = vweird.f32 %v203
  %vm272 = vweird.f32 %v265
  %vm273 = vmor %vm271, %vm272
  %v274 = vsel %vm273, %v265, %v270
  %v275 = vrsqrt.pop %v204
  %v276 = vmul.f32 %v275, %v204
  %v277 = vmul.f32 %v276, %v275
  %v278 = vmul.f32 0.5, %v277
  %v279 = vsub.f32 1.5, %v278
  %v280 = vmul.f32 %v275, %v279
  %vm281 = vweird.f32 %v204
  %vm282 = vweird.f32 %v275
  %vm283 = vmor %vm281, %vm282
  %v284 = vsel %vm283, %v275, %v280
  %v285 = vmul.f32 %v189, %v214
  %v286 = vmul.f32 %v190, %v224
  %v287 = vmul.f32 %v191, %v234
  %v288 = vmul.f32 %v192, %v244
  %v289 = vmul.f32 %v193, %v254
  %v290 = vmul.f32 %v194, %v264
  %v291 = vmul.f32 %v195, %v274
  %v292 = vmul.f32 %v196, %v284
  %v293 = vperm.slane %v30, 0
  %v294 = vmul.f32 %v285, %v293
  %v295 = vmul.f32 %v286, %v293
  %v296 = vmul.f32 %v287, %v293
  %v297 = vmul.f32 %v288, %v293
  %v298 = vmul.f32 %v289, %v293
  %v299 = vmul.f32 %v290, %v293
  %v300 = vmul.f32 %v291, %v293
  %v301 = vmul.f32 %v292, %v293
  %v302 = vperm.slane %v31, 0
  %v303 = vadd.f32 %v294, %v302
  %v304 = vadd.f32 %v295, %v302
  %v305 = vadd.f32 %v296, %v302
  %v306 = vadd.f32 %v297, %v302
  %v307 = vadd.f32 %v298, %v302
  %v308 = vadd.f32 %v299, %v302
  %v309 = vadd.f32 %v300, %v302
  %v310 = vadd.f32 %v301, %v302
  %v311 = vmax.f32 %v303, 0.0
  %v312 = vmax.f32 %v304, 0.0
  %v313 = vmax.f32 %v305, 0.0
  %v314 = vmax.f32 %v306, 0.0
  %v315 = vmax.f32 %v307, 0.0
  %v316 = vmax.f32 %v308, 0.0
  %v317 = vmax.f32 %v309, 0.0
  %v318 = vmax.f32 %v310, 0.0
  %v319 = vld [vmem:[%s4] sm:$0x1]
  %v320 = vld [vmem:[%s4 + $0x1] sm:$0x1]
  %v321 = vld [vmem:[%s4 + $0x2] sm:$0x1]
  %v322 = vld [vmem:[%s3] sm:$0xff]
  %v323 = vld [vmem:[%s3 + $0x8] sm:$0xff]
  %v324 = vld [vmem:[%s3 + $0x10] sm:$0xff]
  %v325 = vld [vmem:[%s3 + $0x18] sm:$0xff]
  %v326 = vpack.c.bf16 %v312, %v311
  %v327 = vpack.c.bf16 %v314, %v313
  %v328 = vpack.c.bf16 %v316, %v315
  %v329 = vpack.c.bf16 %v318, %v317
  %v330 = vpack.c.bf16 %v323, %v322
  %v331 = vpack.c.bf16 %v325, %v324
  %v332 = vperm.slane %v319, 0
  %v334 = vsel %vm93, %v326, 0
  %v337 = vsel %vm93, %v327, 0
  %v340 = vsel %vm93, %v328, 0
  %v343 = vsel %vm93, %v329, 0
  %345 = vmatpush.bf16.msra.mxu0 0
  %346 = vmatpush.bf16.msra.mxu0 0
  %347 = vmatpush.bf16.msra.mxu0 0
  %348 = vmatpush.bf16.msra.mxu0 0
  %349 = vmatpush.bf16.msra.mxu0 0
  %350 = vmatpush.bf16.msra.mxu0 0
  %351 = vmatpush.bf16.msra.mxu0 %v331
  %352 = vmatpush.bf16.msra.mxu0 %v330
  %353 = vmatmul.bf16.gmra.mxu0 %v334
  %v354 = vpop.f32.mrf.mxu0
  %v355 = vadd.f32 %v332, %v354
  %v356 = vpop.f32.mrf.mxu0
  %v357 = vadd.f32 %v332, %v356
  %358 = vmatmul.bf16.gmra.mxu0 %v337
  %v359 = vpop.f32.mrf.mxu0
  %v360 = vadd.f32 %v332, %v359
  %v361 = vpop.f32.mrf.mxu0
  %v362 = vadd.f32 %v332, %v361
  %363 = vmatmul.bf16.gmra.mxu0 %v340
  %v364 = vpop.f32.mrf.mxu0
  %v365 = vadd.f32 %v332, %v364
  %v366 = vpop.f32.mrf.mxu0
  %v367 = vadd.f32 %v332, %v366
  %368 = vmatmul.bf16.gmra.mxu0 %v343
  %v369 = vpop.f32.mrf.mxu0
  %v370 = vadd.f32 %v332, %v369
  %v371 = vpop.f32.mrf.mxu0
  %v372 = vadd.f32 %v332, %v371
  %373 = vdwg.mxu0
  %v374 = vsel %vm47, %v355, 0.0
  %375 = vadd.xlane.f32.xlu0 %v374
  %v376 = vpop.xlane.xlu0 %375
  %v377 = vsel %vm47, %v357, 0.0
  %378 = vadd.xlane.f32.xlu0 %v377
  %v379 = vpop.xlane.xlu0 %378
  %v380 = vsel %vm47, %v360, 0.0
  %381 = vadd.xlane.f32.xlu0 %v380
  %v382 = vpop.xlane.xlu0 %381
  %v383 = vsel %vm47, %v362, 0.0
  %384 = vadd.xlane.f32.xlu0 %v383
  %v385 = vpop.xlane.xlu0 %384
  %v386 = vsel %vm47, %v365, 0.0
  %387 = vadd.xlane.f32.xlu0 %v386
  %v388 = vpop.xlane.xlu0 %387
  %v389 = vsel %vm47, %v367, 0.0
  %390 = vadd.xlane.f32.xlu0 %v389
  %v391 = vpop.xlane.xlu0 %390
  %v392 = vsel %vm47, %v370, 0.0
  %393 = vadd.xlane.f32.xlu0 %v392
  %v394 = vpop.xlane.xlu0 %393
  %v395 = vsel %vm47, %v372, 0.0
  %396 = vadd.xlane.f32.xlu0 %v395
  %v397 = vpop.xlane.xlu0 %396
  %v398 = vrcp.pop 4.0
  %v399 = vmul.f32 4.0, %v398
  %v400 = vsub.f32 1.0, %v399
  %v401 = vmul.f32 %v398, %v400
  %v402 = vadd.f32 %v398, %v401
  %vm403 = vweird.f32 %v398
  %v404 = vsel %vm403, %v398, %v402
  %v405 = vmul.f32 %v376, %v404
  %v406 = vmul.f32 %v379, %v404
  %v407 = vmul.f32 %v382, %v404
  %v408 = vmul.f32 %v385, %v404
  %v409 = vmul.f32 %v388, %v404
  %v410 = vmul.f32 %v391, %v404
  %v411 = vmul.f32 %v394, %v404
  %v412 = vmul.f32 %v397, %v404
  %v413 = vmul.f32 %v355, %v355
  %v414 = vmul.f32 %v357, %v357
  %v415 = vmul.f32 %v360, %v360
  %v416 = vmul.f32 %v362, %v362
  %v417 = vmul.f32 %v365, %v365
  %v418 = vmul.f32 %v367, %v367
  %v419 = vmul.f32 %v370, %v370
  %v420 = vmul.f32 %v372, %v372
  %v421 = vsel %vm47, %v413, 0.0
  %422 = vadd.xlane.f32.xlu0 %v421
  %v423 = vpop.xlane.xlu0 %422
  %v424 = vsel %vm47, %v414, 0.0
  %425 = vadd.xlane.f32.xlu0 %v424
  %v426 = vpop.xlane.xlu0 %425
  %v427 = vsel %vm47, %v415, 0.0
  %428 = vadd.xlane.f32.xlu0 %v427
  %v429 = vpop.xlane.xlu0 %428
  %v430 = vsel %vm47, %v416, 0.0
  %431 = vadd.xlane.f32.xlu0 %v430
  %v432 = vpop.xlane.xlu0 %431
  %v433 = vsel %vm47, %v417, 0.0
  %434 = vadd.xlane.f32.xlu0 %v433
  %v435 = vpop.xlane.xlu0 %434
  %v436 = vsel %vm47, %v418, 0.0
  %437 = vadd.xlane.f32.xlu0 %v436
  %v438 = vpop.xlane.xlu0 %437
  %v439 = vsel %vm47, %v419, 0.0
  %440 = vadd.xlane.f32.xlu0 %v439
  %v441 = vpop.xlane.xlu0 %440
  %v442 = vsel %vm47, %v420, 0.0
  %443 = vadd.xlane.f32.xlu0 %v442
  %v444 = vpop.xlane.xlu0 %443
  %v445 = vmul.f32 %v423, %v404
  %v446 = vmul.f32 %v426, %v404
  %v447 = vmul.f32 %v429, %v404
  %v448 = vmul.f32 %v432, %v404
  %v449 = vmul.f32 %v435, %v404
  %v450 = vmul.f32 %v438, %v404
  %v451 = vmul.f32 %v441, %v404
  %v452 = vmul.f32 %v444, %v404
  %v453 = vmul.f32 %v405, %v405
  %v454 = vmul.f32 %v406, %v406
  %v455 = vmul.f32 %v407, %v407
  %v456 = vmul.f32 %v408, %v408
  %v457 = vmul.f32 %v409, %v409
  %v458 = vmul.f32 %v410, %v410
  %v459 = vmul.f32 %v411, %v411
  %v460 = vmul.f32 %v412, %v412
  %v461 = vsub.f32 %v445, %v453
  %v462 = vsub.f32 %v446, %v454
  %v463 = vsub.f32 %v447, %v455
  %v464 = vsub.f32 %v448, %v456
  %v465 = vsub.f32 %v449, %v457
  %v466 = vsub.f32 %v450, %v458
  %v467 = vsub.f32 %v451, %v459
  %v468 = vsub.f32 %v452, %v460
  %v469 = vsub.f32 %v355, %v405
  %v470 = vsub.f32 %v357, %v406
  %v471 = vsub.f32 %v360, %v407
  %v472 = vsub.f32 %v362, %v408
  %v473 = vsub.f32 %v365, %v409
  %v474 = vsub.f32 %v367, %v410
  %v475 = vsub.f32 %v370, %v411
  %v476 = vsub.f32 %v372, %v412
  %v477 = vadd.f32 %v461, 1e-05
  %v478 = vadd.f32 %v462, 1e-05
  %v479 = vadd.f32 %v463, 1e-05
  %v480 = vadd.f32 %v464, 1e-05
  %v481 = vadd.f32 %v465, 1e-05
  %v482 = vadd.f32 %v466, 1e-05
  %v483 = vadd.f32 %v467, 1e-05
  %v484 = vadd.f32 %v468, 1e-05
  %v485 = vrsqrt.pop %v477
  %v486 = vmul.f32 %v485, %v477
  %v487 = vmul.f32 %v486, %v485
  %v488 = vmul.f32 0.5, %v487
  %v489 = vsub.f32 1.5, %v488
  %v490 = vmul.f32 %v485, %v489
  %vm491 = vweird.f32 %v477
  %vm492 = vweird.f32 %v485
  %vm493 = vmor %vm491, %vm492
  %v494 = vsel %vm493, %v485, %v490
  %v495 = vrsqrt.pop %v478
  %v496 = vmul.f32 %v495, %v478
  %v497 = vmul.f32 %v496, %v495
  %v498 = vmul.f32 0.5, %v497
  %v499 = vsub.f32 1.5, %v498
  %v500 = vmul.f32 %v495, %v499
  %vm501 = vweird.f32 %v478
  %vm502 = vweird.f32 %v495
  %vm503 = vmor %vm501, %vm502
  %v504 = vsel %vm503, %v495, %v500
  %v505 = vrsqrt.pop %v479
  %v506 = vmul.f32 %v505, %v479
  %v507 = vmul.f32 %v506, %v505
  %v508 = vmul.f32 0.5, %v507
  %v509 = vsub.f32 1.5, %v508
  %v510 = vmul.f32 %v505, %v509
  %vm511 = vweird.f32 %v479
  %vm512 = vweird.f32 %v505
  %vm513 = vmor %vm511, %vm512
  %v514 = vsel %vm513, %v505, %v510
  %v515 = vrsqrt.pop %v480
  %v516 = vmul.f32 %v515, %v480
  %v517 = vmul.f32 %v516, %v515
  %v518 = vmul.f32 0.5, %v517
  %v519 = vsub.f32 1.5, %v518
  %v520 = vmul.f32 %v515, %v519
  %vm521 = vweird.f32 %v480
  %vm522 = vweird.f32 %v515
  %vm523 = vmor %vm521, %vm522
  %v524 = vsel %vm523, %v515, %v520
  %v525 = vrsqrt.pop %v481
  %v526 = vmul.f32 %v525, %v481
  %v527 = vmul.f32 %v526, %v525
  %v528 = vmul.f32 0.5, %v527
  %v529 = vsub.f32 1.5, %v528
  %v530 = vmul.f32 %v525, %v529
  %vm531 = vweird.f32 %v481
  %vm532 = vweird.f32 %v525
  %vm533 = vmor %vm531, %vm532
  %v534 = vsel %vm533, %v525, %v530
  %v535 = vrsqrt.pop %v482
  %v536 = vmul.f32 %v535, %v482
  %v537 = vmul.f32 %v536, %v535
  %v538 = vmul.f32 0.5, %v537
  %v539 = vsub.f32 1.5, %v538
  %v540 = vmul.f32 %v535, %v539
  %vm541 = vweird.f32 %v482
  %vm542 = vweird.f32 %v535
  %vm543 = vmor %vm541, %vm542
  %v544 = vsel %vm543, %v535, %v540
  %v545 = vrsqrt.pop %v483
  %v546 = vmul.f32 %v545, %v483
  %v547 = vmul.f32 %v546, %v545
  %v548 = vmul.f32 0.5, %v547
  %v549 = vsub.f32 1.5, %v548
  %v550 = vmul.f32 %v545, %v549
  %vm551 = vweird.f32 %v483
  %vm552 = vweird.f32 %v545
  %vm553 = vmor %vm551, %vm552
  %v554 = vsel %vm553, %v545, %v550
  %v555 = vrsqrt.pop %v484
  %v556 = vmul.f32 %v555, %v484
  %v557 = vmul.f32 %v556, %v555
  %v558 = vmul.f32 0.5, %v557
  %v559 = vsub.f32 1.5, %v558
  %v560 = vmul.f32 %v555, %v559
  %vm561 = vweird.f32 %v484
  %vm562 = vweird.f32 %v555
  %vm563 = vmor %vm561, %vm562
  %v564 = vsel %vm563, %v555, %v560
  %v565 = vmul.f32 %v469, %v494
  %v566 = vmul.f32 %v470, %v504
  %v567 = vmul.f32 %v471, %v514
  %v568 = vmul.f32 %v472, %v524
  %v569 = vmul.f32 %v473, %v534
  %v570 = vmul.f32 %v474, %v544
  %v571 = vmul.f32 %v475, %v554
  %v572 = vmul.f32 %v476, %v564
  %v573 = vperm.slane %v320, 0
  %v574 = vmul.f32 %v565, %v573
  %v575 = vmul.f32 %v566, %v573
  %v576 = vmul.f32 %v567, %v573
  %v577 = vmul.f32 %v568, %v573
  %v578 = vmul.f32 %v569, %v573
  %v579 = vmul.f32 %v570, %v573
  %v580 = vmul.f32 %v571, %v573
  %v581 = vmul.f32 %v572, %v573
  %v582 = vperm.slane %v321, 0
  %v583 = vadd.f32 %v574, %v582
  %v584 = vadd.f32 %v575, %v582
  %v585 = vadd.f32 %v576, %v582
  %v586 = vadd.f32 %v577, %v582
  %v587 = vadd.f32 %v578, %v582
  %v588 = vadd.f32 %v579, %v582
  %v589 = vadd.f32 %v580, %v582
  %v590 = vadd.f32 %v581, %v582
  %v591 = vmax.f32 %v583, 0.0
  %v592 = vmax.f32 %v584, 0.0
  %v593 = vmax.f32 %v585, 0.0
  %v594 = vmax.f32 %v586, 0.0
  %v595 = vmax.f32 %v587, 0.0
  %v596 = vmax.f32 %v588, 0.0
  %v597 = vmax.f32 %v589, 0.0
  %v598 = vmax.f32 %v590, 0.0
  %v599 = vsel %vm47, %v591, -inf
  %v600 = vrot.slane %v599, 4
  %v601 = vmax.f32 %v599, %v600
  %v602 = vrot.slane %v601, 2
  %v603 = vmax.f32 %v601, %v602
  %v604 = vrot.slane %v603, 1
  %v605 = vmax.f32 %v603, %v604
  %v606 = vsel %vm47, %v592, -inf
  %v607 = vrot.slane %v606, 4
  %v608 = vmax.f32 %v606, %v607
  %v609 = vrot.slane %v608, 2
  %v610 = vmax.f32 %v608, %v609
  %v611 = vrot.slane %v610, 1
  %v612 = vmax.f32 %v610, %v611
  %v613 = vsel %vm47, %v593, -inf
  %v614 = vrot.slane %v613, 4
  %v615 = vmax.f32 %v613, %v614
  %v616 = vrot.slane %v615, 2
  %v617 = vmax.f32 %v615, %v616
  %v618 = vrot.slane %v617, 1
  %v619 = vmax.f32 %v617, %v618
  %v620 = vsel %vm47, %v594, -inf
  %v621 = vrot.slane %v620, 4
  %v622 = vmax.f32 %v620, %v621
  %v623 = vrot.slane %v622, 2
  %v624 = vmax.f32 %v622, %v623
  %v625 = vrot.slane %v624, 1
  %v626 = vmax.f32 %v624, %v625
  %v627 = vsel %vm47, %v595, -inf
  %v628 = vrot.slane %v627, 4
  %v629 = vmax.f32 %v627, %v628
  %v630 = vrot.slane %v629, 2
  %v631 = vmax.f32 %v629, %v630
  %v632 = vrot.slane %v631, 1
  %v633 = vmax.f32 %v631, %v632
  %v634 = vsel %vm47, %v596, -inf
  %v635 = vrot.slane %v634, 4
  %v636 = vmax.f32 %v634, %v635
  %v637 = vrot.slane %v636, 2
  %v638 = vmax.f32 %v636, %v637
  %v639 = vrot.slane %v638, 1
  %v640 = vmax.f32 %v638, %v639
  %v641 = vsel %vm47, %v597, -inf
  %v642 = vrot.slane %v641, 4
  %v643 = vmax.f32 %v641, %v642
  %v644 = vrot.slane %v643, 2
  %v645 = vmax.f32 %v643, %v644
  %v646 = vrot.slane %v645, 1
  %v647 = vmax.f32 %v645, %v646
  %v648 = vsel %vm47, %v598, -inf
  %v649 = vrot.slane %v648, 4
  %v650 = vmax.f32 %v648, %v649
  %v651 = vrot.slane %v650, 2
  %v652 = vmax.f32 %v650, %v651
  %v653 = vrot.slane %v652, 1
  %v654 = vmax.f32 %v652, %v653
  %s655 = scalar_lea.vmem %s2, 4
  %v656 = vld [vmem:[%s655] sm:$0x1]
  %v657 = vld [vmem:[%s655 + $0x1] sm:$0x1]
  %v658 = vld [vmem:[%s655 + $0x2] sm:$0x1]
  %s659 = scalar_lea.vmem %s1, 64
  %v660 = vld [vmem:[%s659 + $0x4] sm:$0xf]
  %v661 = vpack.c.bf16 %v592, %v591
  %v662 = vpack.c.bf16 %v594, %v593
  %v663 = vpack.c.bf16 %v596, %v595
  %v664 = vpack.c.bf16 %v598, %v597
  %v665 = vpack.c.bf16 %v660, %v660
  %v666 = vld [vmem:[%s659] sm:$0xf]
  %v667 = vpack.c.bf16 %v605, %v605
  %v668 = vpack.c.bf16 %v612, %v612
  %v669 = vpack.c.bf16 %v619, %v619
  %v670 = vpack.c.bf16 %v626, %v626
  %v671 = vpack.c.bf16 %v633, %v633
  %v672 = vpack.c.bf16 %v640, %v640
  %v673 = vpack.c.bf16 %v647, %v647
  %v674 = vpack.c.bf16 %v654, %v654
  %v675 = vpack.c.bf16 %v666, %v666
  %v684 = vunpack.c.l.b16 %v667
  %v685 = vunpack.c.l.b16 %v668
  %v686 = vunpack.c.l.b16 %v669
  %v687 = vunpack.c.l.b16 %v670
  %v688 = vunpack.c.l.b16 %v671
  %v689 = vunpack.c.l.b16 %v672
  %v690 = vunpack.c.l.b16 %v673
  %v691 = vunpack.c.l.b16 %v674
  %vm692 = vcmask 1041409
  %v693 = vsel %vm692, %v685, %v684
  %vm694 = vcmask 1042434
  %v695 = vsel %vm694, %v686, %v693
  %vm696 = vcmask 1043459
  %v697 = vsel %vm696, %v687, %v695
  %vm698 = vcmask 1044484
  %v699 = vsel %vm698, %v688, %v697
  %vm700 = vcmask 1045509
  %v701 = vsel %vm700, %v689, %v699
  %vm702 = vcmask 1046534
  %v703 = vsel %vm702, %v690, %v701
  %vm704 = vcmask 1047559
  %v705 = vsel %vm704, %v691, %v703
  %v706 = vpack.c.b16 %v705, %v705
  %v708 = vsel %vm47, %v706, 0
  %v711 = vsel %vm60, %v675, 0
  %713 = vmatpush.bf16.msra.mxu0 0
  %714 = vmatpush.bf16.msra.mxu0 0
  %715 = vmatpush.bf16.msra.mxu0 0
  %716 = vmatpush.bf16.msra.mxu0 0
  %717 = vmatpush.bf16.msra.mxu0 0
  %718 = vmatpush.bf16.msra.mxu0 0
  %719 = vmatpush.bf16.msra.mxu0 0
  %720 = vmatpush.bf16.msra.mxu0 %v711
  %721 = vmatmul.bf16.gmra.mxu0 %v708
  %v722 = vpop.f32.mrf.mxu0
  %v723 = vadd.f32 0.0, %v722
  %v724 = vpop.f32.mrf.mxu0
  %725 = vdwg.mxu0
  %v727 = vrot.slane %v723, 1
  %v728 = vrot.slane %v723, 2
  %v729 = vrot.slane %v723, 3
  %v730 = vrot.slane %v723, 4
  %v731 = vrot.slane %v723, 5
  %v732 = vrot.slane %v723, 6
  %v733 = vrot.slane %v723, 7
  %v734 = vperm.slane %v723, 0
  %v735 = vperm.slane %v727, 0
  %v736 = vperm.slane %v728, 0
  %v737 = vperm.slane %v729, 0
  %v738 = vperm.slane %v730, 0
  %v739 = vperm.slane %v731, 0
  %v740 = vperm.slane %v732, 0
  %v741 = vperm.slane %v733, 0
  %v751 = vsel %vm47, %v661, 0
  %v754 = vsel %vm47, %v662, 0
  %v757 = vsel %vm47, %v663, 0
  %v760 = vsel %vm47, %v664, 0
  %v763 = vsel %vm60, %v665, 0
  %765 = vmatpush.bf16.msra.mxu0 0
  %766 = vmatpush.bf16.msra.mxu0 0
  %767 = vmatpush.bf16.msra.mxu0 0
  %768 = vmatpush.bf16.msra.mxu0 0
  %769 = vmatpush.bf16.msra.mxu0 0
  %770 = vmatpush.bf16.msra.mxu0 0
  %771 = vmatpush.bf16.msra.mxu0 0
  %772 = vmatpush.bf16.msra.mxu0 %v763
  %773 = vmatmul.bf16.gmra.mxu0 %v751
  %v774 = vpop.f32.mrf.mxu0
  %v775 = vadd.f32 %v734, %v774
  %v776 = vpop.f32.mrf.mxu0
  %v777 = vadd.f32 %v735, %v776
  %778 = vmatmul.bf16.gmra.mxu0 %v754
  %v779 = vpop.f32.mrf.mxu0
  %v780 = vadd.f32 %v736, %v779
  %v781 = vpop.f32.mrf.mxu0
  %v782 = vadd.f32 %v737, %v781
  %783 = vmatmul.bf16.gmra.mxu0 %v757
  %v784 = vpop.f32.mrf.mxu0
  %v785 = vadd.f32 %v738, %v784
  %v786 = vpop.f32.mrf.mxu0
  %v787 = vadd.f32 %v739, %v786
  %788 = vmatmul.bf16.gmra.mxu0 %v760
  %v789 = vpop.f32.mrf.mxu0
  %v790 = vadd.f32 %v740, %v789
  %v791 = vpop.f32.mrf.mxu0
  %v792 = vadd.f32 %v741, %v791
  %793 = vdwg.mxu0
  %v794 = vperm.slane %v656, 0
  %v795 = vadd.f32 %v775, %v794
  %v796 = vadd.f32 %v777, %v794
  %v797 = vadd.f32 %v780, %v794
  %v798 = vadd.f32 %v782, %v794
  %v799 = vadd.f32 %v785, %v794
  %v800 = vadd.f32 %v787, %v794
  %v801 = vadd.f32 %v790, %v794
  %v802 = vadd.f32 %v792, %v794
  %v803 = vsel %vm93, %v795, 0.0
  %804 = vadd.xlane.f32.xlu0 %v803
  %v805 = vpop.xlane.xlu0 %804
  %v806 = vsel %vm93, %v796, 0.0
  %807 = vadd.xlane.f32.xlu0 %v806
  %v808 = vpop.xlane.xlu0 %807
  %v809 = vsel %vm93, %v797, 0.0
  %810 = vadd.xlane.f32.xlu0 %v809
  %v811 = vpop.xlane.xlu0 %810
  %v812 = vsel %vm93, %v798, 0.0
  %813 = vadd.xlane.f32.xlu0 %v812
  %v814 = vpop.xlane.xlu0 %813
  %v815 = vsel %vm93, %v799, 0.0
  %816 = vadd.xlane.f32.xlu0 %v815
  %v817 = vpop.xlane.xlu0 %816
  %v818 = vsel %vm93, %v800, 0.0
  %819 = vadd.xlane.f32.xlu0 %v818
  %v820 = vpop.xlane.xlu0 %819
  %v821 = vsel %vm93, %v801, 0.0
  %822 = vadd.xlane.f32.xlu0 %v821
  %v823 = vpop.xlane.xlu0 %822
  %v824 = vsel %vm93, %v802, 0.0
  %825 = vadd.xlane.f32.xlu0 %v824
  %v826 = vpop.xlane.xlu0 %825
  %v827 = vmul.f32 %v805, %v124
  %v828 = vmul.f32 %v808, %v124
  %v829 = vmul.f32 %v811, %v124
  %v830 = vmul.f32 %v814, %v124
  %v831 = vmul.f32 %v817, %v124
  %v832 = vmul.f32 %v820, %v124
  %v833 = vmul.f32 %v823, %v124
  %v834 = vmul.f32 %v826, %v124
  %v835 = vmul.f32 %v795, %v795
  %v836 = vmul.f32 %v796, %v796
  %v837 = vmul.f32 %v797, %v797
  %v838 = vmul.f32 %v798, %v798
  %v839 = vmul.f32 %v799, %v799
  %v840 = vmul.f32 %v800, %v800
  %v841 = vmul.f32 %v801, %v801
  %v842 = vmul.f32 %v802, %v802
  %v843 = vsel %vm93, %v835, 0.0
  %844 = vadd.xlane.f32.xlu0 %v843
  %v845 = vpop.xlane.xlu0 %844
  %v846 = vsel %vm93, %v836, 0.0
  %847 = vadd.xlane.f32.xlu0 %v846
  %v848 = vpop.xlane.xlu0 %847
  %v849 = vsel %vm93, %v837, 0.0
  %850 = vadd.xlane.f32.xlu0 %v849
  %v851 = vpop.xlane.xlu0 %850
  %v852 = vsel %vm93, %v838, 0.0
  %853 = vadd.xlane.f32.xlu0 %v852
  %v854 = vpop.xlane.xlu0 %853
  %v855 = vsel %vm93, %v839, 0.0
  %856 = vadd.xlane.f32.xlu0 %v855
  %v857 = vpop.xlane.xlu0 %856
  %v858 = vsel %vm93, %v840, 0.0
  %859 = vadd.xlane.f32.xlu0 %v858
  %v860 = vpop.xlane.xlu0 %859
  %v861 = vsel %vm93, %v841, 0.0
  %862 = vadd.xlane.f32.xlu0 %v861
  %v863 = vpop.xlane.xlu0 %862
  %v864 = vsel %vm93, %v842, 0.0
  %865 = vadd.xlane.f32.xlu0 %v864
  %v866 = vpop.xlane.xlu0 %865
  %v867 = vmul.f32 %v845, %v124
  %v868 = vmul.f32 %v848, %v124
  %v869 = vmul.f32 %v851, %v124
  %v870 = vmul.f32 %v854, %v124
  %v871 = vmul.f32 %v857, %v124
  %v872 = vmul.f32 %v860, %v124
  %v873 = vmul.f32 %v863, %v124
  %v874 = vmul.f32 %v866, %v124
  %v875 = vmul.f32 %v827, %v827
  %v876 = vmul.f32 %v828, %v828
  %v877 = vmul.f32 %v829, %v829
  %v878 = vmul.f32 %v830, %v830
  %v879 = vmul.f32 %v831, %v831
  %v880 = vmul.f32 %v832, %v832
  %v881 = vmul.f32 %v833, %v833
  %v882 = vmul.f32 %v834, %v834
  %v883 = vsub.f32 %v867, %v875
  %v884 = vsub.f32 %v868, %v876
  %v885 = vsub.f32 %v869, %v877
  %v886 = vsub.f32 %v870, %v878
  %v887 = vsub.f32 %v871, %v879
  %v888 = vsub.f32 %v872, %v880
  %v889 = vsub.f32 %v873, %v881
  %v890 = vsub.f32 %v874, %v882
  %v891 = vsub.f32 %v795, %v827
  %v892 = vsub.f32 %v796, %v828
  %v893 = vsub.f32 %v797, %v829
  %v894 = vsub.f32 %v798, %v830
  %v895 = vsub.f32 %v799, %v831
  %v896 = vsub.f32 %v800, %v832
  %v897 = vsub.f32 %v801, %v833
  %v898 = vsub.f32 %v802, %v834
  %v899 = vadd.f32 %v883, 1e-05
  %v900 = vadd.f32 %v884, 1e-05
  %v901 = vadd.f32 %v885, 1e-05
  %v902 = vadd.f32 %v886, 1e-05
  %v903 = vadd.f32 %v887, 1e-05
  %v904 = vadd.f32 %v888, 1e-05
  %v905 = vadd.f32 %v889, 1e-05
  %v906 = vadd.f32 %v890, 1e-05
  %v907 = vrsqrt.pop %v899
  %v908 = vmul.f32 %v907, %v899
  %v909 = vmul.f32 %v908, %v907
  %v910 = vmul.f32 0.5, %v909
  %v911 = vsub.f32 1.5, %v910
  %v912 = vmul.f32 %v907, %v911
  %vm913 = vweird.f32 %v899
  %vm914 = vweird.f32 %v907
  %vm915 = vmor %vm913, %vm914
  %v916 = vsel %vm915, %v907, %v912
  %v917 = vrsqrt.pop %v900
  %v918 = vmul.f32 %v917, %v900
  %v919 = vmul.f32 %v918, %v917
  %v920 = vmul.f32 0.5, %v919
  %v921 = vsub.f32 1.5, %v920
  %v922 = vmul.f32 %v917, %v921
  %vm923 = vweird.f32 %v900
  %vm924 = vweird.f32 %v917
  %vm925 = vmor %vm923, %vm924
  %v926 = vsel %vm925, %v917, %v922
  %v927 = vrsqrt.pop %v901
  %v928 = vmul.f32 %v927, %v901
  %v929 = vmul.f32 %v928, %v927
  %v930 = vmul.f32 0.5, %v929
  %v931 = vsub.f32 1.5, %v930
  %v932 = vmul.f32 %v927, %v931
  %vm933 = vweird.f32 %v901
  %vm934 = vweird.f32 %v927
  %vm935 = vmor %vm933, %vm934
  %v936 = vsel %vm935, %v927, %v932
  %v937 = vrsqrt.pop %v902
  %v938 = vmul.f32 %v937, %v902
  %v939 = vmul.f32 %v938, %v937
  %v940 = vmul.f32 0.5, %v939
  %v941 = vsub.f32 1.5, %v940
  %v942 = vmul.f32 %v937, %v941
  %vm943 = vweird.f32 %v902
  %vm944 = vweird.f32 %v937
  %vm945 = vmor %vm943, %vm944
  %v946 = vsel %vm945, %v937, %v942
  %v947 = vrsqrt.pop %v903
  %v948 = vmul.f32 %v947, %v903
  %v949 = vmul.f32 %v948, %v947
  %v950 = vmul.f32 0.5, %v949
  %v951 = vsub.f32 1.5, %v950
  %v952 = vmul.f32 %v947, %v951
  %vm953 = vweird.f32 %v903
  %vm954 = vweird.f32 %v947
  %vm955 = vmor %vm953, %vm954
  %v956 = vsel %vm955, %v947, %v952
  %v957 = vrsqrt.pop %v904
  %v958 = vmul.f32 %v957, %v904
  %v959 = vmul.f32 %v958, %v957
  %v960 = vmul.f32 0.5, %v959
  %v961 = vsub.f32 1.5, %v960
  %v962 = vmul.f32 %v957, %v961
  %vm963 = vweird.f32 %v904
  %vm964 = vweird.f32 %v957
  %vm965 = vmor %vm963, %vm964
  %v966 = vsel %vm965, %v957, %v962
  %v967 = vrsqrt.pop %v905
  %v968 = vmul.f32 %v967, %v905
  %v969 = vmul.f32 %v968, %v967
  %v970 = vmul.f32 0.5, %v969
  %v971 = vsub.f32 1.5, %v970
  %v972 = vmul.f32 %v967, %v971
  %vm973 = vweird.f32 %v905
  %vm974 = vweird.f32 %v967
  %vm975 = vmor %vm973, %vm974
  %v976 = vsel %vm975, %v967, %v972
  %v977 = vrsqrt.pop %v906
  %v978 = vmul.f32 %v977, %v906
  %v979 = vmul.f32 %v978, %v977
  %v980 = vmul.f32 0.5, %v979
  %v981 = vsub.f32 1.5, %v980
  %v982 = vmul.f32 %v977, %v981
  %vm983 = vweird.f32 %v906
  %vm984 = vweird.f32 %v977
  %vm985 = vmor %vm983, %vm984
  %v986 = vsel %vm985, %v977, %v982
  %v987 = vmul.f32 %v891, %v916
  %v988 = vmul.f32 %v892, %v926
  %v989 = vmul.f32 %v893, %v936
  %v990 = vmul.f32 %v894, %v946
  %v991 = vmul.f32 %v895, %v956
  %v992 = vmul.f32 %v896, %v966
  %v993 = vmul.f32 %v897, %v976
  %v994 = vmul.f32 %v898, %v986
  %v995 = vperm.slane %v657, 0
  %v996 = vmul.f32 %v987, %v995
  %v997 = vmul.f32 %v988, %v995
  %v998 = vmul.f32 %v989, %v995
  %v999 = vmul.f32 %v990, %v995
  %v1000 = vmul.f32 %v991, %v995
  %v1001 = vmul.f32 %v992, %v995
  %v1002 = vmul.f32 %v993, %v995
  %v1003 = vmul.f32 %v994, %v995
  %v1004 = vperm.slane %v658, 0
  %v1005 = vadd.f32 %v996, %v1004
  %v1006 = vadd.f32 %v997, %v1004
  %v1007 = vadd.f32 %v998, %v1004
  %v1008 = vadd.f32 %v999, %v1004
  %v1009 = vadd.f32 %v1000, %v1004
  %v1010 = vadd.f32 %v1001, %v1004
  %v1011 = vadd.f32 %v1002, %v1004
  %v1012 = vadd.f32 %v1003, %v1004
  %v1013 = vmax.f32 %v1005, 0.0
  %v1014 = vmax.f32 %v1006, 0.0
  %v1015 = vmax.f32 %v1007, 0.0
  %v1016 = vmax.f32 %v1008, 0.0
  %v1017 = vmax.f32 %v1009, 0.0
  %v1018 = vmax.f32 %v1010, 0.0
  %v1019 = vmax.f32 %v1011, 0.0
  %v1020 = vmax.f32 %v1012, 0.0
  %s1021 = scalar_lea.vmem %s4, 4
  %v1022 = vld [vmem:[%s1021] sm:$0x1]
  %v1023 = vld [vmem:[%s1021 + $0x1] sm:$0x1]
  %v1024 = vld [vmem:[%s1021 + $0x2] sm:$0x1]
  %s1025 = scalar_lea.vmem %s3, 32
  %v1026 = vld [vmem:[%s1025] sm:$0xff]
  %v1027 = vld [vmem:[%s1025 + $0x8] sm:$0xff]
  %v1028 = vld [vmem:[%s1025 + $0x10] sm:$0xff]
  %v1029 = vld [vmem:[%s1025 + $0x18] sm:$0xff]
  %v1030 = vpack.c.bf16 %v1014, %v1013
  %v1031 = vpack.c.bf16 %v1016, %v1015
  %v1032 = vpack.c.bf16 %v1018, %v1017
  %v1033 = vpack.c.bf16 %v1020, %v1019
  %v1034 = vpack.c.bf16 %v1027, %v1026
  %v1035 = vpack.c.bf16 %v1029, %v1028
  %v1036 = vperm.slane %v1022, 0
  %v1038 = vsel %vm93, %v1030, 0
  %v1041 = vsel %vm93, %v1031, 0
  %v1044 = vsel %vm93, %v1032, 0
  %v1047 = vsel %vm93, %v1033, 0
  %1049 = vmatpush.bf16.msra.mxu0 0
  %1050 = vmatpush.bf16.msra.mxu0 0
  %1051 = vmatpush.bf16.msra.mxu0 0
  %1052 = vmatpush.bf16.msra.mxu0 0
  %1053 = vmatpush.bf16.msra.mxu0 0
  %1054 = vmatpush.bf16.msra.mxu0 0
  %1055 = vmatpush.bf16.msra.mxu0 %v1035
  %1056 = vmatpush.bf16.msra.mxu0 %v1034
  %1057 = vmatmul.bf16.gmra.mxu0 %v1038
  %v1058 = vpop.f32.mrf.mxu0
  %v1059 = vadd.f32 %v1036, %v1058
  %v1060 = vpop.f32.mrf.mxu0
  %v1061 = vadd.f32 %v1036, %v1060
  %1062 = vmatmul.bf16.gmra.mxu0 %v1041
  %v1063 = vpop.f32.mrf.mxu0
  %v1064 = vadd.f32 %v1036, %v1063
  %v1065 = vpop.f32.mrf.mxu0
  %v1066 = vadd.f32 %v1036, %v1065
  %1067 = vmatmul.bf16.gmra.mxu0 %v1044
  %v1068 = vpop.f32.mrf.mxu0
  %v1069 = vadd.f32 %v1036, %v1068
  %v1070 = vpop.f32.mrf.mxu0
  %v1071 = vadd.f32 %v1036, %v1070
  %1072 = vmatmul.bf16.gmra.mxu0 %v1047
  %v1073 = vpop.f32.mrf.mxu0
  %v1074 = vadd.f32 %v1036, %v1073
  %v1075 = vpop.f32.mrf.mxu0
  %v1076 = vadd.f32 %v1036, %v1075
  %1077 = vdwg.mxu0
  %vm1078 = vcmask 64512
  %v1079 = vsel %vm1078, %v1059, 0.0
  %1080 = vadd.xlane.f32.xlu0 %v1079
  %v1081 = vpop.xlane.xlu0 %1080
  %v1082 = vsel %vm1078, %v1061, 0.0
  %1083 = vadd.xlane.f32.xlu0 %v1082
  %v1084 = vpop.xlane.xlu0 %1083
  %v1085 = vsel %vm1078, %v1064, 0.0
  %1086 = vadd.xlane.f32.xlu0 %v1085
  %v1087 = vpop.xlane.xlu0 %1086
  %v1088 = vsel %vm1078, %v1066, 0.0
  %1089 = vadd.xlane.f32.xlu0 %v1088
  %v1090 = vpop.xlane.xlu0 %1089
  %v1091 = vsel %vm1078, %v1069, 0.0
  %1092 = vadd.xlane.f32.xlu0 %v1091
  %v1093 = vpop.xlane.xlu0 %1092
  %v1094 = vsel %vm1078, %v1071, 0.0
  %1095 = vadd.xlane.f32.xlu0 %v1094
  %v1096 = vpop.xlane.xlu0 %1095
  %v1097 = vsel %vm1078, %v1074, 0.0
  %1098 = vadd.xlane.f32.xlu0 %v1097
  %v1099 = vpop.xlane.xlu0 %1098
  %v1100 = vsel %vm1078, %v1076, 0.0
  %1101 = vadd.xlane.f32.xlu0 %v1100
  %v1102 = vpop.xlane.xlu0 %1101
  %v1103 = vrcp.pop 8.0
  %v1104 = vmul.f32 8.0, %v1103
  %v1105 = vsub.f32 1.0, %v1104
  %v1106 = vmul.f32 %v1103, %v1105
  %v1107 = vadd.f32 %v1103, %v1106
  %vm1108 = vweird.f32 %v1103
  %v1109 = vsel %vm1108, %v1103, %v1107
  %v1110 = vmul.f32 %v1081, %v1109
  %v1111 = vmul.f32 %v1084, %v1109
  %v1112 = vmul.f32 %v1087, %v1109
  %v1113 = vmul.f32 %v1090, %v1109
  %v1114 = vmul.f32 %v1093, %v1109
  %v1115 = vmul.f32 %v1096, %v1109
  %v1116 = vmul.f32 %v1099, %v1109
  %v1117 = vmul.f32 %v1102, %v1109
  %v1118 = vmul.f32 %v1059, %v1059
  %v1119 = vmul.f32 %v1061, %v1061
  %v1120 = vmul.f32 %v1064, %v1064
  %v1121 = vmul.f32 %v1066, %v1066
  %v1122 = vmul.f32 %v1069, %v1069
  %v1123 = vmul.f32 %v1071, %v1071
  %v1124 = vmul.f32 %v1074, %v1074
  %v1125 = vmul.f32 %v1076, %v1076
  %v1126 = vsel %vm1078, %v1118, 0.0
  %1127 = vadd.xlane.f32.xlu0 %v1126
  %v1128 = vpop.xlane.xlu0 %1127
  %v1129 = vsel %vm1078, %v1119, 0.0
  %1130 = vadd.xlane.f32.xlu0 %v1129
  %v1131 = vpop.xlane.xlu0 %1130
  %v1132 = vsel %vm1078, %v1120, 0.0
  %1133 = vadd.xlane.f32.xlu0 %v1132
  %v1134 = vpop.xlane.xlu0 %1133
  %v1135 = vsel %vm1078, %v1121, 0.0
  %1136 = vadd.xlane.f32.xlu0 %v1135
  %v1137 = vpop.xlane.xlu0 %1136
  %v1138 = vsel %vm1078, %v1122, 0.0
  %1139 = vadd.xlane.f32.xlu0 %v1138
  %v1140 = vpop.xlane.xlu0 %1139
  %v1141 = vsel %vm1078, %v1123, 0.0
  %1142 = vadd.xlane.f32.xlu0 %v1141
  %v1143 = vpop.xlane.xlu0 %1142
  %v1144 = vsel %vm1078, %v1124, 0.0
  %1145 = vadd.xlane.f32.xlu0 %v1144
  %v1146 = vpop.xlane.xlu0 %1145
  %v1147 = vsel %vm1078, %v1125, 0.0
  %1148 = vadd.xlane.f32.xlu0 %v1147
  %v1149 = vpop.xlane.xlu0 %1148
  %v1150 = vmul.f32 %v1128, %v1109
  %v1151 = vmul.f32 %v1131, %v1109
  %v1152 = vmul.f32 %v1134, %v1109
  %v1153 = vmul.f32 %v1137, %v1109
  %v1154 = vmul.f32 %v1140, %v1109
  %v1155 = vmul.f32 %v1143, %v1109
  %v1156 = vmul.f32 %v1146, %v1109
  %v1157 = vmul.f32 %v1149, %v1109
  %v1158 = vmul.f32 %v1110, %v1110
  %v1159 = vmul.f32 %v1111, %v1111
  %v1160 = vmul.f32 %v1112, %v1112
  %v1161 = vmul.f32 %v1113, %v1113
  %v1162 = vmul.f32 %v1114, %v1114
  %v1163 = vmul.f32 %v1115, %v1115
  %v1164 = vmul.f32 %v1116, %v1116
  %v1165 = vmul.f32 %v1117, %v1117
  %v1166 = vsub.f32 %v1150, %v1158
  %v1167 = vsub.f32 %v1151, %v1159
  %v1168 = vsub.f32 %v1152, %v1160
  %v1169 = vsub.f32 %v1153, %v1161
  %v1170 = vsub.f32 %v1154, %v1162
  %v1171 = vsub.f32 %v1155, %v1163
  %v1172 = vsub.f32 %v1156, %v1164
  %v1173 = vsub.f32 %v1157, %v1165
  %v1174 = vsub.f32 %v1059, %v1110
  %v1175 = vsub.f32 %v1061, %v1111
  %v1176 = vsub.f32 %v1064, %v1112
  %v1177 = vsub.f32 %v1066, %v1113
  %v1178 = vsub.f32 %v1069, %v1114
  %v1179 = vsub.f32 %v1071, %v1115
  %v1180 = vsub.f32 %v1074, %v1116
  %v1181 = vsub.f32 %v1076, %v1117
  %v1182 = vadd.f32 %v1166, 1e-05
  %v1183 = vadd.f32 %v1167, 1e-05
  %v1184 = vadd.f32 %v1168, 1e-05
  %v1185 = vadd.f32 %v1169, 1e-05
  %v1186 = vadd.f32 %v1170, 1e-05
  %v1187 = vadd.f32 %v1171, 1e-05
  %v1188 = vadd.f32 %v1172, 1e-05
  %v1189 = vadd.f32 %v1173, 1e-05
  %v1190 = vrsqrt.pop %v1182
  %v1191 = vmul.f32 %v1190, %v1182
  %v1192 = vmul.f32 %v1191, %v1190
  %v1193 = vmul.f32 0.5, %v1192
  %v1194 = vsub.f32 1.5, %v1193
  %v1195 = vmul.f32 %v1190, %v1194
  %vm1196 = vweird.f32 %v1182
  %vm1197 = vweird.f32 %v1190
  %vm1198 = vmor %vm1196, %vm1197
  %v1199 = vsel %vm1198, %v1190, %v1195
  %v1200 = vrsqrt.pop %v1183
  %v1201 = vmul.f32 %v1200, %v1183
  %v1202 = vmul.f32 %v1201, %v1200
  %v1203 = vmul.f32 0.5, %v1202
  %v1204 = vsub.f32 1.5, %v1203
  %v1205 = vmul.f32 %v1200, %v1204
  %vm1206 = vweird.f32 %v1183
  %vm1207 = vweird.f32 %v1200
  %vm1208 = vmor %vm1206, %vm1207
  %v1209 = vsel %vm1208, %v1200, %v1205
  %v1210 = vrsqrt.pop %v1184
  %v1211 = vmul.f32 %v1210, %v1184
  %v1212 = vmul.f32 %v1211, %v1210
  %v1213 = vmul.f32 0.5, %v1212
  %v1214 = vsub.f32 1.5, %v1213
  %v1215 = vmul.f32 %v1210, %v1214
  %vm1216 = vweird.f32 %v1184
  %vm1217 = vweird.f32 %v1210
  %vm1218 = vmor %vm1216, %vm1217
  %v1219 = vsel %vm1218, %v1210, %v1215
  %v1220 = vrsqrt.pop %v1185
  %v1221 = vmul.f32 %v1220, %v1185
  %v1222 = vmul.f32 %v1221, %v1220
  %v1223 = vmul.f32 0.5, %v1222
  %v1224 = vsub.f32 1.5, %v1223
  %v1225 = vmul.f32 %v1220, %v1224
  %vm1226 = vweird.f32 %v1185
  %vm1227 = vweird.f32 %v1220
  %vm1228 = vmor %vm1226, %vm1227
  %v1229 = vsel %vm1228, %v1220, %v1225
  %v1230 = vrsqrt.pop %v1186
  %v1231 = vmul.f32 %v1230, %v1186
  %v1232 = vmul.f32 %v1231, %v1230
  %v1233 = vmul.f32 0.5, %v1232
  %v1234 = vsub.f32 1.5, %v1233
  %v1235 = vmul.f32 %v1230, %v1234
  %vm1236 = vweird.f32 %v1186
  %vm1237 = vweird.f32 %v1230
  %vm1238 = vmor %vm1236, %vm1237
  %v1239 = vsel %vm1238, %v1230, %v1235
  %v1240 = vrsqrt.pop %v1187
  %v1241 = vmul.f32 %v1240, %v1187
  %v1242 = vmul.f32 %v1241, %v1240
  %v1243 = vmul.f32 0.5, %v1242
  %v1244 = vsub.f32 1.5, %v1243
  %v1245 = vmul.f32 %v1240, %v1244
  %vm1246 = vweird.f32 %v1187
  %vm1247 = vweird.f32 %v1240
  %vm1248 = vmor %vm1246, %vm1247
  %v1249 = vsel %vm1248, %v1240, %v1245
  %v1250 = vrsqrt.pop %v1188
  %v1251 = vmul.f32 %v1250, %v1188
  %v1252 = vmul.f32 %v1251, %v1250
  %v1253 = vmul.f32 0.5, %v1252
  %v1254 = vsub.f32 1.5, %v1253
  %v1255 = vmul.f32 %v1250, %v1254
  %vm1256 = vweird.f32 %v1188
  %vm1257 = vweird.f32 %v1250
  %vm1258 = vmor %vm1256, %vm1257
  %v1259 = vsel %vm1258, %v1250, %v1255
  %v1260 = vrsqrt.pop %v1189
  %v1261 = vmul.f32 %v1260, %v1189
  %v1262 = vmul.f32 %v1261, %v1260
  %v1263 = vmul.f32 0.5, %v1262
  %v1264 = vsub.f32 1.5, %v1263
  %v1265 = vmul.f32 %v1260, %v1264
  %vm1266 = vweird.f32 %v1189
  %vm1267 = vweird.f32 %v1260
  %vm1268 = vmor %vm1266, %vm1267
  %v1269 = vsel %vm1268, %v1260, %v1265
  %v1270 = vmul.f32 %v1174, %v1199
  %v1271 = vmul.f32 %v1175, %v1209
  %v1272 = vmul.f32 %v1176, %v1219
  %v1273 = vmul.f32 %v1177, %v1229
  %v1274 = vmul.f32 %v1178, %v1239
  %v1275 = vmul.f32 %v1179, %v1249
  %v1276 = vmul.f32 %v1180, %v1259
  %v1277 = vmul.f32 %v1181, %v1269
  %v1278 = vperm.slane %v1023, 0
  %v1279 = vmul.f32 %v1270, %v1278
  %v1280 = vmul.f32 %v1271, %v1278
  %v1281 = vmul.f32 %v1272, %v1278
  %v1282 = vmul.f32 %v1273, %v1278
  %v1283 = vmul.f32 %v1274, %v1278
  %v1284 = vmul.f32 %v1275, %v1278
  %v1285 = vmul.f32 %v1276, %v1278
  %v1286 = vmul.f32 %v1277, %v1278
  %v1287 = vperm.slane %v1024, 0
  %v1288 = vadd.f32 %v1279, %v1287
  %v1289 = vadd.f32 %v1280, %v1287
  %v1290 = vadd.f32 %v1281, %v1287
  %v1291 = vadd.f32 %v1282, %v1287
  %v1292 = vadd.f32 %v1283, %v1287
  %v1293 = vadd.f32 %v1284, %v1287
  %v1294 = vadd.f32 %v1285, %v1287
  %v1295 = vadd.f32 %v1286, %v1287
  %v1296 = vmax.f32 %v1288, 0.0
  %v1297 = vmax.f32 %v1289, 0.0
  %v1298 = vmax.f32 %v1290, 0.0
  %v1299 = vmax.f32 %v1291, 0.0
  %v1300 = vmax.f32 %v1292, 0.0
  %v1301 = vmax.f32 %v1293, 0.0
  %v1302 = vmax.f32 %v1294, 0.0
  %v1303 = vmax.f32 %v1295, 0.0
  %v1304 = vsel %vm1078, %v1296, -inf
  %v1305 = vrot.slane %v1304, 4
  %v1306 = vmax.f32 %v1304, %v1305
  %v1307 = vrot.slane %v1306, 2
  %v1308 = vmax.f32 %v1306, %v1307
  %v1309 = vrot.slane %v1308, 1
  %v1310 = vmax.f32 %v1308, %v1309
  %v1311 = vsel %vm1078, %v1297, -inf
  %v1312 = vrot.slane %v1311, 4
  %v1313 = vmax.f32 %v1311, %v1312
  %v1314 = vrot.slane %v1313, 2
  %v1315 = vmax.f32 %v1313, %v1314
  %v1316 = vrot.slane %v1315, 1
  %v1317 = vmax.f32 %v1315, %v1316
  %v1318 = vsel %vm1078, %v1298, -inf
  %v1319 = vrot.slane %v1318, 4
  %v1320 = vmax.f32 %v1318, %v1319
  %v1321 = vrot.slane %v1320, 2
  %v1322 = vmax.f32 %v1320, %v1321
  %v1323 = vrot.slane %v1322, 1
  %v1324 = vmax.f32 %v1322, %v1323
  %v1325 = vsel %vm1078, %v1299, -inf
  %v1326 = vrot.slane %v1325, 4
  %v1327 = vmax.f32 %v1325, %v1326
  %v1328 = vrot.slane %v1327, 2
  %v1329 = vmax.f32 %v1327, %v1328
  %v1330 = vrot.slane %v1329, 1
  %v1331 = vmax.f32 %v1329, %v1330
  %v1332 = vsel %vm1078, %v1300, -inf
  %v1333 = vrot.slane %v1332, 4
  %v1334 = vmax.f32 %v1332, %v1333
  %v1335 = vrot.slane %v1334, 2
  %v1336 = vmax.f32 %v1334, %v1335
  %v1337 = vrot.slane %v1336, 1
  %v1338 = vmax.f32 %v1336, %v1337
  %v1339 = vsel %vm1078, %v1301, -inf
  %v1340 = vrot.slane %v1339, 4
  %v1341 = vmax.f32 %v1339, %v1340
  %v1342 = vrot.slane %v1341, 2
  %v1343 = vmax.f32 %v1341, %v1342
  %v1344 = vrot.slane %v1343, 1
  %v1345 = vmax.f32 %v1343, %v1344
  %v1346 = vsel %vm1078, %v1302, -inf
  %v1347 = vrot.slane %v1346, 4
  %v1348 = vmax.f32 %v1346, %v1347
  %v1349 = vrot.slane %v1348, 2
  %v1350 = vmax.f32 %v1348, %v1349
  %v1351 = vrot.slane %v1350, 1
  %v1352 = vmax.f32 %v1350, %v1351
  %v1353 = vsel %vm1078, %v1303, -inf
  %v1354 = vrot.slane %v1353, 4
  %v1355 = vmax.f32 %v1353, %v1354
  %v1356 = vrot.slane %v1355, 2
  %v1357 = vmax.f32 %v1355, %v1356
  %v1358 = vrot.slane %v1357, 1
  %v1359 = vmax.f32 %v1357, %v1358
  %s1360 = scalar_lea.vmem %s2, 8
  %v1361 = vld [vmem:[%s1360] sm:$0x1]
  %v1362 = vld [vmem:[%s1360 + $0x1] sm:$0x1]
  %v1363 = vld [vmem:[%s1360 + $0x2] sm:$0x1]
  %s1364 = scalar_lea.vmem %s1, 128
  %v1365 = vld [vmem:[%s1364 + $0x8] sm:$0xff]
  %v1366 = vpack.c.bf16 %v1297, %v1296
  %v1367 = vpack.c.bf16 %v1299, %v1298
  %v1368 = vpack.c.bf16 %v1301, %v1300
  %v1369 = vpack.c.bf16 %v1303, %v1302
  %v1370 = vpack.c.bf16 %v1365, %v1365
  %v1371 = vld [vmem:[%s1364] sm:$0xff]
  %v1372 = vpack.c.bf16 %v1310, %v1310
  %v1373 = vpack.c.bf16 %v1317, %v1317
  %v1374 = vpack.c.bf16 %v1324, %v1324
  %v1375 = vpack.c.bf16 %v1331, %v1331
  %v1376 = vpack.c.bf16 %v1338, %v1338
  %v1377 = vpack.c.bf16 %v1345, %v1345
  %v1378 = vpack.c.bf16 %v1352, %v1352
  %v1379 = vpack.c.bf16 %v1359, %v1359
  %v1380 = vpack.c.bf16 %v1371, %v1371
  %v1389 = vunpack.c.l.b16 %v1372
  %v1390 = vunpack.c.l.b16 %v1373
  %v1391 = vunpack.c.l.b16 %v1374
  %v1392 = vunpack.c.l.b16 %v1375
  %v1393 = vunpack.c.l.b16 %v1376
  %v1394 = vunpack.c.l.b16 %v1377
  %v1395 = vunpack.c.l.b16 %v1378
  %v1396 = vunpack.c.l.b16 %v1379
  %v1397 = vsel %vm692, %v1390, %v1389
  %v1398 = vsel %vm694, %v1391, %v1397
  %v1399 = vsel %vm696, %v1392, %v1398
  %v1400 = vsel %vm698, %v1393, %v1399
  %v1401 = vsel %vm700, %v1394, %v1400
  %v1402 = vsel %vm702, %v1395, %v1401
  %v1403 = vsel %vm704, %v1396, %v1402
  %v1404 = vpack.c.b16 %v1403, %v1403
  %v1406 = vsel %vm1078, %v1404, 0
  %vm1408 = vcmask 1043456
  %v1410 = vsel %vm1408, %v1380, 0
  %1412 = vmatpush.bf16.msra.mxu0 0
  %1413 = vmatpush.bf16.msra.mxu0 0
  %1414 = vmatpush.bf16.msra.mxu0 0
  %1415 = vmatpush.bf16.msra.mxu0 0
  %1416 = vmatpush.bf16.msra.mxu0 0
  %1417 = vmatpush.bf16.msra.mxu0 0
  %1418 = vmatpush.bf16.msra.mxu0 0
  %1419 = vmatpush.bf16.msra.mxu0 %v1410
  %1420 = vmatmul.bf16.gmra.mxu0 %v1406
  %v1421 = vpop.f32.mrf.mxu0
  %v1422 = vadd.f32 0.0, %v1421
  %v1423 = vpop.f32.mrf.mxu0
  %1424 = vdwg.mxu0
  %v1426 = vrot.slane %v1422, 1
  %v1427 = vrot.slane %v1422, 2
  %v1428 = vrot.slane %v1422, 3
  %v1429 = vrot.slane %v1422, 4
  %v1430 = vrot.slane %v1422, 5
  %v1431 = vrot.slane %v1422, 6
  %v1432 = vrot.slane %v1422, 7
  %v1433 = vperm.slane %v1422, 0
  %v1434 = vperm.slane %v1426, 0
  %v1435 = vperm.slane %v1427, 0
  %v1436 = vperm.slane %v1428, 0
  %v1437 = vperm.slane %v1429, 0
  %v1438 = vperm.slane %v1430, 0
  %v1439 = vperm.slane %v1431, 0
  %v1440 = vperm.slane %v1432, 0
  %v1450 = vsel %vm1078, %v1366, 0
  %v1453 = vsel %vm1078, %v1367, 0
  %v1456 = vsel %vm1078, %v1368, 0
  %v1459 = vsel %vm1078, %v1369, 0
  %v1462 = vsel %vm1408, %v1370, 0
  %1464 = vmatpush.bf16.msra.mxu0 0
  %1465 = vmatpush.bf16.msra.mxu0 0
  %1466 = vmatpush.bf16.msra.mxu0 0
  %1467 = vmatpush.bf16.msra.mxu0 0
  %1468 = vmatpush.bf16.msra.mxu0 0
  %1469 = vmatpush.bf16.msra.mxu0 0
  %1470 = vmatpush.bf16.msra.mxu0 0
  %1471 = vmatpush.bf16.msra.mxu0 %v1462
  %1472 = vmatmul.bf16.gmra.mxu0 %v1450
  %v1473 = vpop.f32.mrf.mxu0
  %v1474 = vadd.f32 %v1433, %v1473
  %v1475 = vpop.f32.mrf.mxu0
  %v1476 = vadd.f32 %v1434, %v1475
  %1477 = vmatmul.bf16.gmra.mxu0 %v1453
  %v1478 = vpop.f32.mrf.mxu0
  %v1479 = vadd.f32 %v1435, %v1478
  %v1480 = vpop.f32.mrf.mxu0
  %v1481 = vadd.f32 %v1436, %v1480
  %1482 = vmatmul.bf16.gmra.mxu0 %v1456
  %v1483 = vpop.f32.mrf.mxu0
  %v1484 = vadd.f32 %v1437, %v1483
  %v1485 = vpop.f32.mrf.mxu0
  %v1486 = vadd.f32 %v1438, %v1485
  %1487 = vmatmul.bf16.gmra.mxu0 %v1459
  %v1488 = vpop.f32.mrf.mxu0
  %v1489 = vadd.f32 %v1439, %v1488
  %v1490 = vpop.f32.mrf.mxu0
  %v1491 = vadd.f32 %v1440, %v1490
  %1492 = vdwg.mxu0
  %v1493 = vperm.slane %v1361, 0
  %v1494 = vadd.f32 %v1474, %v1493
  %v1495 = vadd.f32 %v1476, %v1493
  %v1496 = vadd.f32 %v1479, %v1493
  %v1497 = vadd.f32 %v1481, %v1493
  %v1498 = vadd.f32 %v1484, %v1493
  %v1499 = vadd.f32 %v1486, %v1493
  %v1500 = vadd.f32 %v1489, %v1493
  %v1501 = vadd.f32 %v1491, %v1493
  %v1502 = vsel %vm93, %v1494, 0.0
  %1503 = vadd.xlane.f32.xlu0 %v1502
  %v1504 = vpop.xlane.xlu0 %1503
  %v1505 = vsel %vm93, %v1495, 0.0
  %1506 = vadd.xlane.f32.xlu0 %v1505
  %v1507 = vpop.xlane.xlu0 %1506
  %v1508 = vsel %vm93, %v1496, 0.0
  %1509 = vadd.xlane.f32.xlu0 %v1508
  %v1510 = vpop.xlane.xlu0 %1509
  %v1511 = vsel %vm93, %v1497, 0.0
  %1512 = vadd.xlane.f32.xlu0 %v1511
  %v1513 = vpop.xlane.xlu0 %1512
  %v1514 = vsel %vm93, %v1498, 0.0
  %1515 = vadd.xlane.f32.xlu0 %v1514
  %v1516 = vpop.xlane.xlu0 %1515
  %v1517 = vsel %vm93, %v1499, 0.0
  %1518 = vadd.xlane.f32.xlu0 %v1517
  %v1519 = vpop.xlane.xlu0 %1518
  %v1520 = vsel %vm93, %v1500, 0.0
  %1521 = vadd.xlane.f32.xlu0 %v1520
  %v1522 = vpop.xlane.xlu0 %1521
  %v1523 = vsel %vm93, %v1501, 0.0
  %1524 = vadd.xlane.f32.xlu0 %v1523
  %v1525 = vpop.xlane.xlu0 %1524
  %v1526 = vmul.f32 %v1504, %v124
  %v1527 = vmul.f32 %v1507, %v124
  %v1528 = vmul.f32 %v1510, %v124
  %v1529 = vmul.f32 %v1513, %v124
  %v1530 = vmul.f32 %v1516, %v124
  %v1531 = vmul.f32 %v1519, %v124
  %v1532 = vmul.f32 %v1522, %v124
  %v1533 = vmul.f32 %v1525, %v124
  %v1534 = vmul.f32 %v1494, %v1494
  %v1535 = vmul.f32 %v1495, %v1495
  %v1536 = vmul.f32 %v1496, %v1496
  %v1537 = vmul.f32 %v1497, %v1497
  %v1538 = vmul.f32 %v1498, %v1498
  %v1539 = vmul.f32 %v1499, %v1499
  %v1540 = vmul.f32 %v1500, %v1500
  %v1541 = vmul.f32 %v1501, %v1501
  %v1542 = vsel %vm93, %v1534, 0.0
  %1543 = vadd.xlane.f32.xlu0 %v1542
  %v1544 = vpop.xlane.xlu0 %1543
  %v1545 = vsel %vm93, %v1535, 0.0
  %1546 = vadd.xlane.f32.xlu0 %v1545
  %v1547 = vpop.xlane.xlu0 %1546
  %v1548 = vsel %vm93, %v1536, 0.0
  %1549 = vadd.xlane.f32.xlu0 %v1548
  %v1550 = vpop.xlane.xlu0 %1549
  %v1551 = vsel %vm93, %v1537, 0.0
  %1552 = vadd.xlane.f32.xlu0 %v1551
  %v1553 = vpop.xlane.xlu0 %1552
  %v1554 = vsel %vm93, %v1538, 0.0
  %1555 = vadd.xlane.f32.xlu0 %v1554
  %v1556 = vpop.xlane.xlu0 %1555
  %v1557 = vsel %vm93, %v1539, 0.0
  %1558 = vadd.xlane.f32.xlu0 %v1557
  %v1559 = vpop.xlane.xlu0 %1558
  %v1560 = vsel %vm93, %v1540, 0.0
  %1561 = vadd.xlane.f32.xlu0 %v1560
  %v1562 = vpop.xlane.xlu0 %1561
  %v1563 = vsel %vm93, %v1541, 0.0
  %1564 = vadd.xlane.f32.xlu0 %v1563
  %v1565 = vpop.xlane.xlu0 %1564
  %v1566 = vmul.f32 %v1544, %v124
  %v1567 = vmul.f32 %v1547, %v124
  %v1568 = vmul.f32 %v1550, %v124
  %v1569 = vmul.f32 %v1553, %v124
  %v1570 = vmul.f32 %v1556, %v124
  %v1571 = vmul.f32 %v1559, %v124
  %v1572 = vmul.f32 %v1562, %v124
  %v1573 = vmul.f32 %v1565, %v124
  %v1574 = vmul.f32 %v1526, %v1526
  %v1575 = vmul.f32 %v1527, %v1527
  %v1576 = vmul.f32 %v1528, %v1528
  %v1577 = vmul.f32 %v1529, %v1529
  %v1578 = vmul.f32 %v1530, %v1530
  %v1579 = vmul.f32 %v1531, %v1531
  %v1580 = vmul.f32 %v1532, %v1532
  %v1581 = vmul.f32 %v1533, %v1533
  %v1582 = vsub.f32 %v1566, %v1574
  %v1583 = vsub.f32 %v1567, %v1575
  %v1584 = vsub.f32 %v1568, %v1576
  %v1585 = vsub.f32 %v1569, %v1577
  %v1586 = vsub.f32 %v1570, %v1578
  %v1587 = vsub.f32 %v1571, %v1579
  %v1588 = vsub.f32 %v1572, %v1580
  %v1589 = vsub.f32 %v1573, %v1581
  %v1590 = vsub.f32 %v1494, %v1526
  %v1591 = vsub.f32 %v1495, %v1527
  %v1592 = vsub.f32 %v1496, %v1528
  %v1593 = vsub.f32 %v1497, %v1529
  %v1594 = vsub.f32 %v1498, %v1530
  %v1595 = vsub.f32 %v1499, %v1531
  %v1596 = vsub.f32 %v1500, %v1532
  %v1597 = vsub.f32 %v1501, %v1533
  %v1598 = vadd.f32 %v1582, 1e-05
  %v1599 = vadd.f32 %v1583, 1e-05
  %v1600 = vadd.f32 %v1584, 1e-05
  %v1601 = vadd.f32 %v1585, 1e-05
  %v1602 = vadd.f32 %v1586, 1e-05
  %v1603 = vadd.f32 %v1587, 1e-05
  %v1604 = vadd.f32 %v1588, 1e-05
  %v1605 = vadd.f32 %v1589, 1e-05
  %v1606 = vrsqrt.pop %v1598
  %v1607 = vmul.f32 %v1606, %v1598
  %v1608 = vmul.f32 %v1607, %v1606
  %v1609 = vmul.f32 0.5, %v1608
  %v1610 = vsub.f32 1.5, %v1609
  %v1611 = vmul.f32 %v1606, %v1610
  %vm1612 = vweird.f32 %v1598
  %vm1613 = vweird.f32 %v1606
  %vm1614 = vmor %vm1612, %vm1613
  %v1615 = vsel %vm1614, %v1606, %v1611
  %v1616 = vrsqrt.pop %v1599
  %v1617 = vmul.f32 %v1616, %v1599
  %v1618 = vmul.f32 %v1617, %v1616
  %v1619 = vmul.f32 0.5, %v1618
  %v1620 = vsub.f32 1.5, %v1619
  %v1621 = vmul.f32 %v1616, %v1620
  %vm1622 = vweird.f32 %v1599
  %vm1623 = vweird.f32 %v1616
  %vm1624 = vmor %vm1622, %vm1623
  %v1625 = vsel %vm1624, %v1616, %v1621
  %v1626 = vrsqrt.pop %v1600
  %v1627 = vmul.f32 %v1626, %v1600
  %v1628 = vmul.f32 %v1627, %v1626
  %v1629 = vmul.f32 0.5, %v1628
  %v1630 = vsub.f32 1.5, %v1629
  %v1631 = vmul.f32 %v1626, %v1630
  %vm1632 = vweird.f32 %v1600
  %vm1633 = vweird.f32 %v1626
  %vm1634 = vmor %vm1632, %vm1633
  %v1635 = vsel %vm1634, %v1626, %v1631
  %v1636 = vrsqrt.pop %v1601
  %v1637 = vmul.f32 %v1636, %v1601
  %v1638 = vmul.f32 %v1637, %v1636
  %v1639 = vmul.f32 0.5, %v1638
  %v1640 = vsub.f32 1.5, %v1639
  %v1641 = vmul.f32 %v1636, %v1640
  %vm1642 = vweird.f32 %v1601
  %vm1643 = vweird.f32 %v1636
  %vm1644 = vmor %vm1642, %vm1643
  %v1645 = vsel %vm1644, %v1636, %v1641
  %v1646 = vrsqrt.pop %v1602
  %v1647 = vmul.f32 %v1646, %v1602
  %v1648 = vmul.f32 %v1647, %v1646
  %v1649 = vmul.f32 0.5, %v1648
  %v1650 = vsub.f32 1.5, %v1649
  %v1651 = vmul.f32 %v1646, %v1650
  %vm1652 = vweird.f32 %v1602
  %vm1653 = vweird.f32 %v1646
  %vm1654 = vmor %vm1652, %vm1653
  %v1655 = vsel %vm1654, %v1646, %v1651
  %v1656 = vrsqrt.pop %v1603
  %v1657 = vmul.f32 %v1656, %v1603
  %v1658 = vmul.f32 %v1657, %v1656
  %v1659 = vmul.f32 0.5, %v1658
  %v1660 = vsub.f32 1.5, %v1659
  %v1661 = vmul.f32 %v1656, %v1660
  %vm1662 = vweird.f32 %v1603
  %vm1663 = vweird.f32 %v1656
  %vm1664 = vmor %vm1662, %vm1663
  %v1665 = vsel %vm1664, %v1656, %v1661
  %v1666 = vrsqrt.pop %v1604
  %v1667 = vmul.f32 %v1666, %v1604
  %v1668 = vmul.f32 %v1667, %v1666
  %v1669 = vmul.f32 0.5, %v1668
  %v1670 = vsub.f32 1.5, %v1669
  %v1671 = vmul.f32 %v1666, %v1670
  %vm1672 = vweird.f32 %v1604
  %vm1673 = vweird.f32 %v1666
  %vm1674 = vmor %vm1672, %vm1673
  %v1675 = vsel %vm1674, %v1666, %v1671
  %v1676 = vrsqrt.pop %v1605
  %v1677 = vmul.f32 %v1676, %v1605
  %v1678 = vmul.f32 %v1677, %v1676
  %v1679 = vmul.f32 0.5, %v1678
  %v1680 = vsub.f32 1.5, %v1679
  %v1681 = vmul.f32 %v1676, %v1680
  %vm1682 = vweird.f32 %v1605
  %vm1683 = vweird.f32 %v1676
  %vm1684 = vmor %vm1682, %vm1683
  %v1685 = vsel %vm1684, %v1676, %v1681
  %v1686 = vmul.f32 %v1590, %v1615
  %v1687 = vmul.f32 %v1591, %v1625
  %v1688 = vmul.f32 %v1592, %v1635
  %v1689 = vmul.f32 %v1593, %v1645
  %v1690 = vmul.f32 %v1594, %v1655
  %v1691 = vmul.f32 %v1595, %v1665
  %v1692 = vmul.f32 %v1596, %v1675
  %v1693 = vmul.f32 %v1597, %v1685
  %v1694 = vperm.slane %v1362, 0
  %v1695 = vmul.f32 %v1686, %v1694
  %v1696 = vmul.f32 %v1687, %v1694
  %v1697 = vmul.f32 %v1688, %v1694
  %v1698 = vmul.f32 %v1689, %v1694
  %v1699 = vmul.f32 %v1690, %v1694
  %v1700 = vmul.f32 %v1691, %v1694
  %v1701 = vmul.f32 %v1692, %v1694
  %v1702 = vmul.f32 %v1693, %v1694
  %v1703 = vperm.slane %v1363, 0
  %v1704 = vadd.f32 %v1695, %v1703
  %v1705 = vadd.f32 %v1696, %v1703
  %v1706 = vadd.f32 %v1697, %v1703
  %v1707 = vadd.f32 %v1698, %v1703
  %v1708 = vadd.f32 %v1699, %v1703
  %v1709 = vadd.f32 %v1700, %v1703
  %v1710 = vadd.f32 %v1701, %v1703
  %v1711 = vadd.f32 %v1702, %v1703
  %v1712 = vmax.f32 %v1704, 0.0
  %v1713 = vmax.f32 %v1705, 0.0
  %v1714 = vmax.f32 %v1706, 0.0
  %v1715 = vmax.f32 %v1707, 0.0
  %v1716 = vmax.f32 %v1708, 0.0
  %v1717 = vmax.f32 %v1709, 0.0
  %v1718 = vmax.f32 %v1710, 0.0
  %v1719 = vmax.f32 %v1711, 0.0
  %s1720 = scalar_lea.vmem %s4, 8
  %v1721 = vld [vmem:[%s1720] sm:$0x1]
  %v1722 = vld [vmem:[%s1720 + $0x1] sm:$0x1]
  %v1723 = vld [vmem:[%s1720 + $0x2] sm:$0x1]
  %s1724 = scalar_lea.vmem %s3, 64
  %v1725 = vld [vmem:[%s1724] sm:$0xff]
  %v1726 = vld [vmem:[%s1724 + $0x8] sm:$0xff]
  %v1727 = vld [vmem:[%s1724 + $0x10] sm:$0xff]
  %v1728 = vld [vmem:[%s1724 + $0x18] sm:$0xff]
  %v1729 = vpack.c.bf16 %v1713, %v1712
  %v1730 = vpack.c.bf16 %v1715, %v1714
  %v1731 = vpack.c.bf16 %v1717, %v1716
  %v1732 = vpack.c.bf16 %v1719, %v1718
  %v1733 = vpack.c.bf16 %v1726, %v1725
  %v1734 = vpack.c.bf16 %v1728, %v1727
  %v1735 = vperm.slane %v1721, 0
  %v1737 = vsel %vm93, %v1729, 0
  %v1740 = vsel %vm93, %v1730, 0
  %v1743 = vsel %vm93, %v1731, 0
  %v1746 = vsel %vm93, %v1732, 0
  %1748 = vmatpush.bf16.msra.mxu0 0
  %1749 = vmatpush.bf16.msra.mxu0 0
  %1750 = vmatpush.bf16.msra.mxu0 0
  %1751 = vmatpush.bf16.msra.mxu0 0
  %1752 = vmatpush.bf16.msra.mxu0 0
  %1753 = vmatpush.bf16.msra.mxu0 0
  %1754 = vmatpush.bf16.msra.mxu0 %v1734
  %1755 = vmatpush.bf16.msra.mxu0 %v1733
  %1756 = vmatmul.bf16.gmra.mxu0 %v1737
  %v1757 = vpop.f32.mrf.mxu0
  %v1758 = vadd.f32 %v1735, %v1757
  %v1759 = vpop.f32.mrf.mxu0
  %v1760 = vadd.f32 %v1735, %v1759
  %1761 = vmatmul.bf16.gmra.mxu0 %v1740
  %v1762 = vpop.f32.mrf.mxu0
  %v1763 = vadd.f32 %v1735, %v1762
  %v1764 = vpop.f32.mrf.mxu0
  %v1765 = vadd.f32 %v1735, %v1764
  %1766 = vmatmul.bf16.gmra.mxu0 %v1743
  %v1767 = vpop.f32.mrf.mxu0
  %v1768 = vadd.f32 %v1735, %v1767
  %v1769 = vpop.f32.mrf.mxu0
  %v1770 = vadd.f32 %v1735, %v1769
  %1771 = vmatmul.bf16.gmra.mxu0 %v1746
  %v1772 = vpop.f32.mrf.mxu0
  %v1773 = vadd.f32 %v1735, %v1772
  %v1774 = vpop.f32.mrf.mxu0
  %v1775 = vadd.f32 %v1735, %v1774
  %1776 = vdwg.mxu0
  %vm1777 = vcmask 130048
  %v1778 = vsel %vm1777, %v1758, 0.0
  %1779 = vadd.xlane.f32.xlu0 %v1778
  %v1780 = vpop.xlane.xlu0 %1779
  %v1781 = vsel %vm1777, %v1760, 0.0
  %1782 = vadd.xlane.f32.xlu0 %v1781
  %v1783 = vpop.xlane.xlu0 %1782
  %v1784 = vsel %vm1777, %v1763, 0.0
  %1785 = vadd.xlane.f32.xlu0 %v1784
  %v1786 = vpop.xlane.xlu0 %1785
  %v1787 = vsel %vm1777, %v1765, 0.0
  %1788 = vadd.xlane.f32.xlu0 %v1787
  %v1789 = vpop.xlane.xlu0 %1788
  %v1790 = vsel %vm1777, %v1768, 0.0
  %1791 = vadd.xlane.f32.xlu0 %v1790
  %v1792 = vpop.xlane.xlu0 %1791
  %v1793 = vsel %vm1777, %v1770, 0.0
  %1794 = vadd.xlane.f32.xlu0 %v1793
  %v1795 = vpop.xlane.xlu0 %1794
  %v1796 = vsel %vm1777, %v1773, 0.0
  %1797 = vadd.xlane.f32.xlu0 %v1796
  %v1798 = vpop.xlane.xlu0 %1797
  %v1799 = vsel %vm1777, %v1775, 0.0
  %1800 = vadd.xlane.f32.xlu0 %v1799
  %v1801 = vpop.xlane.xlu0 %1800
  %v1802 = vrcp.pop 16.0
  %v1803 = vmul.f32 16.0, %v1802
  %v1804 = vsub.f32 1.0, %v1803
  %v1805 = vmul.f32 %v1802, %v1804
  %v1806 = vadd.f32 %v1802, %v1805
  %vm1807 = vweird.f32 %v1802
  %v1808 = vsel %vm1807, %v1802, %v1806
  %v1809 = vmul.f32 %v1780, %v1808
  %v1810 = vmul.f32 %v1783, %v1808
  %v1811 = vmul.f32 %v1786, %v1808
  %v1812 = vmul.f32 %v1789, %v1808
  %v1813 = vmul.f32 %v1792, %v1808
  %v1814 = vmul.f32 %v1795, %v1808
  %v1815 = vmul.f32 %v1798, %v1808
  %v1816 = vmul.f32 %v1801, %v1808
  %v1817 = vmul.f32 %v1758, %v1758
  %v1818 = vmul.f32 %v1760, %v1760
  %v1819 = vmul.f32 %v1763, %v1763
  %v1820 = vmul.f32 %v1765, %v1765
  %v1821 = vmul.f32 %v1768, %v1768
  %v1822 = vmul.f32 %v1770, %v1770
  %v1823 = vmul.f32 %v1773, %v1773
  %v1824 = vmul.f32 %v1775, %v1775
  %v1825 = vsel %vm1777, %v1817, 0.0
  %1826 = vadd.xlane.f32.xlu0 %v1825
  %v1827 = vpop.xlane.xlu0 %1826
  %v1828 = vsel %vm1777, %v1818, 0.0
  %1829 = vadd.xlane.f32.xlu0 %v1828
  %v1830 = vpop.xlane.xlu0 %1829
  %v1831 = vsel %vm1777, %v1819, 0.0
  %1832 = vadd.xlane.f32.xlu0 %v1831
  %v1833 = vpop.xlane.xlu0 %1832
  %v1834 = vsel %vm1777, %v1820, 0.0
  %1835 = vadd.xlane.f32.xlu0 %v1834
  %v1836 = vpop.xlane.xlu0 %1835
  %v1837 = vsel %vm1777, %v1821, 0.0
  %1838 = vadd.xlane.f32.xlu0 %v1837
  %v1839 = vpop.xlane.xlu0 %1838
  %v1840 = vsel %vm1777, %v1822, 0.0
  %1841 = vadd.xlane.f32.xlu0 %v1840
  %v1842 = vpop.xlane.xlu0 %1841
  %v1843 = vsel %vm1777, %v1823, 0.0
  %1844 = vadd.xlane.f32.xlu0 %v1843
  %v1845 = vpop.xlane.xlu0 %1844
  %v1846 = vsel %vm1777, %v1824, 0.0
  %1847 = vadd.xlane.f32.xlu0 %v1846
  %v1848 = vpop.xlane.xlu0 %1847
  %v1849 = vmul.f32 %v1827, %v1808
  %v1850 = vmul.f32 %v1830, %v1808
  %v1851 = vmul.f32 %v1833, %v1808
  %v1852 = vmul.f32 %v1836, %v1808
  %v1853 = vmul.f32 %v1839, %v1808
  %v1854 = vmul.f32 %v1842, %v1808
  %v1855 = vmul.f32 %v1845, %v1808
  %v1856 = vmul.f32 %v1848, %v1808
  %v1857 = vmul.f32 %v1809, %v1809
  %v1858 = vmul.f32 %v1810, %v1810
  %v1859 = vmul.f32 %v1811, %v1811
  %v1860 = vmul.f32 %v1812, %v1812
  %v1861 = vmul.f32 %v1813, %v1813
  %v1862 = vmul.f32 %v1814, %v1814
  %v1863 = vmul.f32 %v1815, %v1815
  %v1864 = vmul.f32 %v1816, %v1816
  %v1865 = vsub.f32 %v1849, %v1857
  %v1866 = vsub.f32 %v1850, %v1858
  %v1867 = vsub.f32 %v1851, %v1859
  %v1868 = vsub.f32 %v1852, %v1860
  %v1869 = vsub.f32 %v1853, %v1861
  %v1870 = vsub.f32 %v1854, %v1862
  %v1871 = vsub.f32 %v1855, %v1863
  %v1872 = vsub.f32 %v1856, %v1864
  %v1873 = vsub.f32 %v1758, %v1809
  %v1874 = vsub.f32 %v1760, %v1810
  %v1875 = vsub.f32 %v1763, %v1811
  %v1876 = vsub.f32 %v1765, %v1812
  %v1877 = vsub.f32 %v1768, %v1813
  %v1878 = vsub.f32 %v1770, %v1814
  %v1879 = vsub.f32 %v1773, %v1815
  %v1880 = vsub.f32 %v1775, %v1816
  %v1881 = vadd.f32 %v1865, 1e-05
  %v1882 = vadd.f32 %v1866, 1e-05
  %v1883 = vadd.f32 %v1867, 1e-05
  %v1884 = vadd.f32 %v1868, 1e-05
  %v1885 = vadd.f32 %v1869, 1e-05
  %v1886 = vadd.f32 %v1870, 1e-05
  %v1887 = vadd.f32 %v1871, 1e-05
  %v1888 = vadd.f32 %v1872, 1e-05
  %v1889 = vrsqrt.pop %v1881
  %v1890 = vmul.f32 %v1889, %v1881
  %v1891 = vmul.f32 %v1890, %v1889
  %v1892 = vmul.f32 0.5, %v1891
  %v1893 = vsub.f32 1.5, %v1892
  %v1894 = vmul.f32 %v1889, %v1893
  %vm1895 = vweird.f32 %v1881
  %vm1896 = vweird.f32 %v1889
  %vm1897 = vmor %vm1895, %vm1896
  %v1898 = vsel %vm1897, %v1889, %v1894
  %v1899 = vrsqrt.pop %v1882
  %v1900 = vmul.f32 %v1899, %v1882
  %v1901 = vmul.f32 %v1900, %v1899
  %v1902 = vmul.f32 0.5, %v1901
  %v1903 = vsub.f32 1.5, %v1902
  %v1904 = vmul.f32 %v1899, %v1903
  %vm1905 = vweird.f32 %v1882
  %vm1906 = vweird.f32 %v1899
  %vm1907 = vmor %vm1905, %vm1906
  %v1908 = vsel %vm1907, %v1899, %v1904
  %v1909 = vrsqrt.pop %v1883
  %v1910 = vmul.f32 %v1909, %v1883
  %v1911 = vmul.f32 %v1910, %v1909
  %v1912 = vmul.f32 0.5, %v1911
  %v1913 = vsub.f32 1.5, %v1912
  %v1914 = vmul.f32 %v1909, %v1913
  %vm1915 = vweird.f32 %v1883
  %vm1916 = vweird.f32 %v1909
  %vm1917 = vmor %vm1915, %vm1916
  %v1918 = vsel %vm1917, %v1909, %v1914
  %v1919 = vrsqrt.pop %v1884
  %v1920 = vmul.f32 %v1919, %v1884
  %v1921 = vmul.f32 %v1920, %v1919
  %v1922 = vmul.f32 0.5, %v1921
  %v1923 = vsub.f32 1.5, %v1922
  %v1924 = vmul.f32 %v1919, %v1923
  %vm1925 = vweird.f32 %v1884
  %vm1926 = vweird.f32 %v1919
  %vm1927 = vmor %vm1925, %vm1926
  %v1928 = vsel %vm1927, %v1919, %v1924
  %v1929 = vrsqrt.pop %v1885
  %v1930 = vmul.f32 %v1929, %v1885
  %v1931 = vmul.f32 %v1930, %v1929
  %v1932 = vmul.f32 0.5, %v1931
  %v1933 = vsub.f32 1.5, %v1932
  %v1934 = vmul.f32 %v1929, %v1933
  %vm1935 = vweird.f32 %v1885
  %vm1936 = vweird.f32 %v1929
  %vm1937 = vmor %vm1935, %vm1936
  %v1938 = vsel %vm1937, %v1929, %v1934
  %v1939 = vrsqrt.pop %v1886
  %v1940 = vmul.f32 %v1939, %v1886
  %v1941 = vmul.f32 %v1940, %v1939
  %v1942 = vmul.f32 0.5, %v1941
  %v1943 = vsub.f32 1.5, %v1942
  %v1944 = vmul.f32 %v1939, %v1943
  %vm1945 = vweird.f32 %v1886
  %vm1946 = vweird.f32 %v1939
  %vm1947 = vmor %vm1945, %vm1946
  %v1948 = vsel %vm1947, %v1939, %v1944
  %v1949 = vrsqrt.pop %v1887
  %v1950 = vmul.f32 %v1949, %v1887
  %v1951 = vmul.f32 %v1950, %v1949
  %v1952 = vmul.f32 0.5, %v1951
  %v1953 = vsub.f32 1.5, %v1952
  %v1954 = vmul.f32 %v1949, %v1953
  %vm1955 = vweird.f32 %v1887
  %vm1956 = vweird.f32 %v1949
  %vm1957 = vmor %vm1955, %vm1956
  %v1958 = vsel %vm1957, %v1949, %v1954
  %v1959 = vrsqrt.pop %v1888
  %v1960 = vmul.f32 %v1959, %v1888
  %v1961 = vmul.f32 %v1960, %v1959
  %v1962 = vmul.f32 0.5, %v1961
  %v1963 = vsub.f32 1.5, %v1962
  %v1964 = vmul.f32 %v1959, %v1963
  %vm1965 = vweird.f32 %v1888
  %vm1966 = vweird.f32 %v1959
  %vm1967 = vmor %vm1965, %vm1966
  %v1968 = vsel %vm1967, %v1959, %v1964
  %v1969 = vmul.f32 %v1873, %v1898
  %v1970 = vmul.f32 %v1874, %v1908
  %v1971 = vmul.f32 %v1875, %v1918
  %v1972 = vmul.f32 %v1876, %v1928
  %v1973 = vmul.f32 %v1877, %v1938
  %v1974 = vmul.f32 %v1878, %v1948
  %v1975 = vmul.f32 %v1879, %v1958
  %v1976 = vmul.f32 %v1880, %v1968
  %v1977 = vperm.slane %v1722, 0
  %v1978 = vmul.f32 %v1969, %v1977
  %v1979 = vmul.f32 %v1970, %v1977
  %v1980 = vmul.f32 %v1971, %v1977
  %v1981 = vmul.f32 %v1972, %v1977
  %v1982 = vmul.f32 %v1973, %v1977
  %v1983 = vmul.f32 %v1974, %v1977
  %v1984 = vmul.f32 %v1975, %v1977
  %v1985 = vmul.f32 %v1976, %v1977
  %v1986 = vperm.slane %v1723, 0
  %v1987 = vadd.f32 %v1978, %v1986
  %v1988 = vadd.f32 %v1979, %v1986
  %v1989 = vadd.f32 %v1980, %v1986
  %v1990 = vadd.f32 %v1981, %v1986
  %v1991 = vadd.f32 %v1982, %v1986
  %v1992 = vadd.f32 %v1983, %v1986
  %v1993 = vadd.f32 %v1984, %v1986
  %v1994 = vadd.f32 %v1985, %v1986
  %v1995 = vmax.f32 %v1987, 0.0
  %v1996 = vmax.f32 %v1988, 0.0
  %v1997 = vmax.f32 %v1989, 0.0
  %v1998 = vmax.f32 %v1990, 0.0
  %v1999 = vmax.f32 %v1991, 0.0
  %v2000 = vmax.f32 %v1992, 0.0
  %v2001 = vmax.f32 %v1993, 0.0
  %v2002 = vmax.f32 %v1994, 0.0
  %v2003 = vsel %vm1777, %v1995, -inf
  %v2004 = vrot.slane %v2003, 4
  %v2005 = vmax.f32 %v2003, %v2004
  %v2006 = vrot.slane %v2005, 2
  %v2007 = vmax.f32 %v2005, %v2006
  %v2008 = vrot.slane %v2007, 1
  %v2009 = vmax.f32 %v2007, %v2008
  %v2010 = vsel %vm1777, %v1996, -inf
  %v2011 = vrot.slane %v2010, 4
  %v2012 = vmax.f32 %v2010, %v2011
  %v2013 = vrot.slane %v2012, 2
  %v2014 = vmax.f32 %v2012, %v2013
  %v2015 = vrot.slane %v2014, 1
  %v2016 = vmax.f32 %v2014, %v2015
  %v2017 = vsel %vm1777, %v1997, -inf
  %v2018 = vrot.slane %v2017, 4
  %v2019 = vmax.f32 %v2017, %v2018
  %v2020 = vrot.slane %v2019, 2
  %v2021 = vmax.f32 %v2019, %v2020
  %v2022 = vrot.slane %v2021, 1
  %v2023 = vmax.f32 %v2021, %v2022
  %v2024 = vsel %vm1777, %v1998, -inf
  %v2025 = vrot.slane %v2024, 4
  %v2026 = vmax.f32 %v2024, %v2025
  %v2027 = vrot.slane %v2026, 2
  %v2028 = vmax.f32 %v2026, %v2027
  %v2029 = vrot.slane %v2028, 1
  %v2030 = vmax.f32 %v2028, %v2029
  %v2031 = vsel %vm1777, %v1999, -inf
  %v2032 = vrot.slane %v2031, 4
  %v2033 = vmax.f32 %v2031, %v2032
  %v2034 = vrot.slane %v2033, 2
  %v2035 = vmax.f32 %v2033, %v2034
  %v2036 = vrot.slane %v2035, 1
  %v2037 = vmax.f32 %v2035, %v2036
  %v2038 = vsel %vm1777, %v2000, -inf
  %v2039 = vrot.slane %v2038, 4
  %v2040 = vmax.f32 %v2038, %v2039
  %v2041 = vrot.slane %v2040, 2
  %v2042 = vmax.f32 %v2040, %v2041
  %v2043 = vrot.slane %v2042, 1
  %v2044 = vmax.f32 %v2042, %v2043
  %v2045 = vsel %vm1777, %v2001, -inf
  %v2046 = vrot.slane %v2045, 4
  %v2047 = vmax.f32 %v2045, %v2046
  %v2048 = vrot.slane %v2047, 2
  %v2049 = vmax.f32 %v2047, %v2048
  %v2050 = vrot.slane %v2049, 1
  %v2051 = vmax.f32 %v2049, %v2050
  %v2052 = vsel %vm1777, %v2002, -inf
  %v2053 = vrot.slane %v2052, 4
  %v2054 = vmax.f32 %v2052, %v2053
  %v2055 = vrot.slane %v2054, 2
  %v2056 = vmax.f32 %v2054, %v2055
  %v2057 = vrot.slane %v2056, 1
  %v2058 = vmax.f32 %v2056, %v2057
  %s2059 = scalar_lea.vmem %s2, 12
  %v2060 = vld [vmem:[%s2059] sm:$0x1]
  %v2061 = vld [vmem:[%s2059 + $0x1] sm:$0x1]
  %v2062 = vld [vmem:[%s2059 + $0x2] sm:$0x1]
  %s2063 = scalar_lea.vmem %s1, 192
  %v2064 = vld [vmem:[%s2063 + $0x10] sm:$0xff]
  %v2065 = vld [vmem:[%s2063 + $0x18] sm:$0xff]
  %v2066 = vpack.c.bf16 %v1996, %v1995
  %v2067 = vpack.c.bf16 %v1998, %v1997
  %v2068 = vpack.c.bf16 %v2000, %v1999
  %v2069 = vpack.c.bf16 %v2002, %v2001
  %v2070 = vpack.c.bf16 %v2065, %v2064
  %v2071 = vld [vmem:[%s2063] sm:$0xff]
  %v2072 = vld [vmem:[%s2063 + $0x8] sm:$0xff]
  %v2073 = vpack.c.bf16 %v2009, %v2009
  %v2074 = vpack.c.bf16 %v2016, %v2016
  %v2075 = vpack.c.bf16 %v2023, %v2023
  %v2076 = vpack.c.bf16 %v2030, %v2030
  %v2077 = vpack.c.bf16 %v2037, %v2037
  %v2078 = vpack.c.bf16 %v2044, %v2044
  %v2079 = vpack.c.bf16 %v2051, %v2051
  %v2080 = vpack.c.bf16 %v2058, %v2058
  %v2081 = vpack.c.bf16 %v2072, %v2071
  %v2090 = vunpack.c.l.b16 %v2073
  %v2091 = vunpack.c.l.b16 %v2074
  %v2092 = vunpack.c.l.b16 %v2075
  %v2093 = vunpack.c.l.b16 %v2076
  %v2094 = vunpack.c.l.b16 %v2077
  %v2095 = vunpack.c.l.b16 %v2078
  %v2096 = vunpack.c.l.b16 %v2079
  %v2097 = vunpack.c.l.b16 %v2080
  %v2098 = vsel %vm692, %v2091, %v2090
  %v2099 = vsel %vm694, %v2092, %v2098
  %v2100 = vsel %vm696, %v2093, %v2099
  %v2101 = vsel %vm698, %v2094, %v2100
  %v2102 = vsel %vm700, %v2095, %v2101
  %v2103 = vsel %vm702, %v2096, %v2102
  %v2104 = vsel %vm704, %v2097, %v2103
  %v2105 = vpack.c.b16 %v2104, %v2104
  %v2107 = vsel %vm1777, %v2105, 0
  %2109 = vmatpush.bf16.msra.mxu0 0
  %2110 = vmatpush.bf16.msra.mxu0 0
  %2111 = vmatpush.bf16.msra.mxu0 0
  %2112 = vmatpush.bf16.msra.mxu0 0
  %2113 = vmatpush.bf16.msra.mxu0 0
  %2114 = vmatpush.bf16.msra.mxu0 0
  %2115 = vmatpush.bf16.msra.mxu0 0
  %2116 = vmatpush.bf16.msra.mxu0 %v2081
  %2117 = vmatmul.bf16.gmra.mxu0 %v2107
  %v2118 = vpop.f32.mrf.mxu0
  %v2119 = vadd.f32 0.0, %v2118
  %v2120 = vpop.f32.mrf.mxu0
  %2121 = vdwg.mxu0
  %v2123 = vrot.slane %v2119, 1
  %v2124 = vrot.slane %v2119, 2
  %v2125 = vrot.slane %v2119, 3
  %v2126 = vrot.slane %v2119, 4
  %v2127 = vrot.slane %v2119, 5
  %v2128 = vrot.slane %v2119, 6
  %v2129 = vrot.slane %v2119, 7
  %v2130 = vperm.slane %v2119, 0
  %v2131 = vperm.slane %v2123, 0
  %v2132 = vperm.slane %v2124, 0
  %v2133 = vperm.slane %v2125, 0
  %v2134 = vperm.slane %v2126, 0
  %v2135 = vperm.slane %v2127, 0
  %v2136 = vperm.slane %v2128, 0
  %v2137 = vperm.slane %v2129, 0
  %v2147 = vsel %vm1777, %v2066, 0
  %v2150 = vsel %vm1777, %v2067, 0
  %v2153 = vsel %vm1777, %v2068, 0
  %v2156 = vsel %vm1777, %v2069, 0
  %2158 = vmatpush.bf16.msra.mxu0 0
  %2159 = vmatpush.bf16.msra.mxu0 0
  %2160 = vmatpush.bf16.msra.mxu0 0
  %2161 = vmatpush.bf16.msra.mxu0 0
  %2162 = vmatpush.bf16.msra.mxu0 0
  %2163 = vmatpush.bf16.msra.mxu0 0
  %2164 = vmatpush.bf16.msra.mxu0 0
  %2165 = vmatpush.bf16.msra.mxu0 %v2070
  %2166 = vmatmul.bf16.gmra.mxu0 %v2147
  %v2167 = vpop.f32.mrf.mxu0
  %v2168 = vadd.f32 %v2130, %v2167
  %v2169 = vpop.f32.mrf.mxu0
  %v2170 = vadd.f32 %v2131, %v2169
  %2171 = vmatmul.bf16.gmra.mxu0 %v2150
  %v2172 = vpop.f32.mrf.mxu0
  %v2173 = vadd.f32 %v2132, %v2172
  %v2174 = vpop.f32.mrf.mxu0
  %v2175 = vadd.f32 %v2133, %v2174
  %2176 = vmatmul.bf16.gmra.mxu0 %v2153
  %v2177 = vpop.f32.mrf.mxu0
  %v2178 = vadd.f32 %v2134, %v2177
  %v2179 = vpop.f32.mrf.mxu0
  %v2180 = vadd.f32 %v2135, %v2179
  %2181 = vmatmul.bf16.gmra.mxu0 %v2156
  %v2182 = vpop.f32.mrf.mxu0
  %v2183 = vadd.f32 %v2136, %v2182
  %v2184 = vpop.f32.mrf.mxu0
  %v2185 = vadd.f32 %v2137, %v2184
  %2186 = vdwg.mxu0
  %v2187 = vperm.slane %v2060, 0
  %v2188 = vadd.f32 %v2168, %v2187
  %v2189 = vadd.f32 %v2170, %v2187
  %v2190 = vadd.f32 %v2173, %v2187
  %v2191 = vadd.f32 %v2175, %v2187
  %v2192 = vadd.f32 %v2178, %v2187
  %v2193 = vadd.f32 %v2180, %v2187
  %v2194 = vadd.f32 %v2183, %v2187
  %v2195 = vadd.f32 %v2185, %v2187
  %v2196 = vsel %vm93, %v2188, 0.0
  %2197 = vadd.xlane.f32.xlu0 %v2196
  %v2198 = vpop.xlane.xlu0 %2197
  %v2199 = vsel %vm93, %v2189, 0.0
  %2200 = vadd.xlane.f32.xlu0 %v2199
  %v2201 = vpop.xlane.xlu0 %2200
  %v2202 = vsel %vm93, %v2190, 0.0
  %2203 = vadd.xlane.f32.xlu0 %v2202
  %v2204 = vpop.xlane.xlu0 %2203
  %v2205 = vsel %vm93, %v2191, 0.0
  %2206 = vadd.xlane.f32.xlu0 %v2205
  %v2207 = vpop.xlane.xlu0 %2206
  %v2208 = vsel %vm93, %v2192, 0.0
  %2209 = vadd.xlane.f32.xlu0 %v2208
  %v2210 = vpop.xlane.xlu0 %2209
  %v2211 = vsel %vm93, %v2193, 0.0
  %2212 = vadd.xlane.f32.xlu0 %v2211
  %v2213 = vpop.xlane.xlu0 %2212
  %v2214 = vsel %vm93, %v2194, 0.0
  %2215 = vadd.xlane.f32.xlu0 %v2214
  %v2216 = vpop.xlane.xlu0 %2215
  %v2217 = vsel %vm93, %v2195, 0.0
  %2218 = vadd.xlane.f32.xlu0 %v2217
  %v2219 = vpop.xlane.xlu0 %2218
  %v2220 = vmul.f32 %v2198, %v124
  %v2221 = vmul.f32 %v2201, %v124
  %v2222 = vmul.f32 %v2204, %v124
  %v2223 = vmul.f32 %v2207, %v124
  %v2224 = vmul.f32 %v2210, %v124
  %v2225 = vmul.f32 %v2213, %v124
  %v2226 = vmul.f32 %v2216, %v124
  %v2227 = vmul.f32 %v2219, %v124
  %v2228 = vmul.f32 %v2188, %v2188
  %v2229 = vmul.f32 %v2189, %v2189
  %v2230 = vmul.f32 %v2190, %v2190
  %v2231 = vmul.f32 %v2191, %v2191
  %v2232 = vmul.f32 %v2192, %v2192
  %v2233 = vmul.f32 %v2193, %v2193
  %v2234 = vmul.f32 %v2194, %v2194
  %v2235 = vmul.f32 %v2195, %v2195
  %v2236 = vsel %vm93, %v2228, 0.0
  %2237 = vadd.xlane.f32.xlu0 %v2236
  %v2238 = vpop.xlane.xlu0 %2237
  %v2239 = vsel %vm93, %v2229, 0.0
  %2240 = vadd.xlane.f32.xlu0 %v2239
  %v2241 = vpop.xlane.xlu0 %2240
  %v2242 = vsel %vm93, %v2230, 0.0
  %2243 = vadd.xlane.f32.xlu0 %v2242
  %v2244 = vpop.xlane.xlu0 %2243
  %v2245 = vsel %vm93, %v2231, 0.0
  %2246 = vadd.xlane.f32.xlu0 %v2245
  %v2247 = vpop.xlane.xlu0 %2246
  %v2248 = vsel %vm93, %v2232, 0.0
  %2249 = vadd.xlane.f32.xlu0 %v2248
  %v2250 = vpop.xlane.xlu0 %2249
  %v2251 = vsel %vm93, %v2233, 0.0
  %2252 = vadd.xlane.f32.xlu0 %v2251
  %v2253 = vpop.xlane.xlu0 %2252
  %v2254 = vsel %vm93, %v2234, 0.0
  %2255 = vadd.xlane.f32.xlu0 %v2254
  %v2256 = vpop.xlane.xlu0 %2255
  %v2257 = vsel %vm93, %v2235, 0.0
  %2258 = vadd.xlane.f32.xlu0 %v2257
  %v2259 = vpop.xlane.xlu0 %2258
  %v2260 = vmul.f32 %v2238, %v124
  %v2261 = vmul.f32 %v2241, %v124
  %v2262 = vmul.f32 %v2244, %v124
  %v2263 = vmul.f32 %v2247, %v124
  %v2264 = vmul.f32 %v2250, %v124
  %v2265 = vmul.f32 %v2253, %v124
  %v2266 = vmul.f32 %v2256, %v124
  %v2267 = vmul.f32 %v2259, %v124
  %v2268 = vmul.f32 %v2220, %v2220
  %v2269 = vmul.f32 %v2221, %v2221
  %v2270 = vmul.f32 %v2222, %v2222
  %v2271 = vmul.f32 %v2223, %v2223
  %v2272 = vmul.f32 %v2224, %v2224
  %v2273 = vmul.f32 %v2225, %v2225
  %v2274 = vmul.f32 %v2226, %v2226
  %v2275 = vmul.f32 %v2227, %v2227
  %v2276 = vsub.f32 %v2260, %v2268
  %v2277 = vsub.f32 %v2261, %v2269
  %v2278 = vsub.f32 %v2262, %v2270
  %v2279 = vsub.f32 %v2263, %v2271
  %v2280 = vsub.f32 %v2264, %v2272
  %v2281 = vsub.f32 %v2265, %v2273
  %v2282 = vsub.f32 %v2266, %v2274
  %v2283 = vsub.f32 %v2267, %v2275
  %v2284 = vsub.f32 %v2188, %v2220
  %v2285 = vsub.f32 %v2189, %v2221
  %v2286 = vsub.f32 %v2190, %v2222
  %v2287 = vsub.f32 %v2191, %v2223
  %v2288 = vsub.f32 %v2192, %v2224
  %v2289 = vsub.f32 %v2193, %v2225
  %v2290 = vsub.f32 %v2194, %v2226
  %v2291 = vsub.f32 %v2195, %v2227
  %v2292 = vadd.f32 %v2276, 1e-05
  %v2293 = vadd.f32 %v2277, 1e-05
  %v2294 = vadd.f32 %v2278, 1e-05
  %v2295 = vadd.f32 %v2279, 1e-05
  %v2296 = vadd.f32 %v2280, 1e-05
  %v2297 = vadd.f32 %v2281, 1e-05
  %v2298 = vadd.f32 %v2282, 1e-05
  %v2299 = vadd.f32 %v2283, 1e-05
  %v2300 = vrsqrt.pop %v2292
  %v2301 = vmul.f32 %v2300, %v2292
  %v2302 = vmul.f32 %v2301, %v2300
  %v2303 = vmul.f32 0.5, %v2302
  %v2304 = vsub.f32 1.5, %v2303
  %v2305 = vmul.f32 %v2300, %v2304
  %vm2306 = vweird.f32 %v2292
  %vm2307 = vweird.f32 %v2300
  %vm2308 = vmor %vm2306, %vm2307
  %v2309 = vsel %vm2308, %v2300, %v2305
  %v2310 = vrsqrt.pop %v2293
  %v2311 = vmul.f32 %v2310, %v2293
  %v2312 = vmul.f32 %v2311, %v2310
  %v2313 = vmul.f32 0.5, %v2312
  %v2314 = vsub.f32 1.5, %v2313
  %v2315 = vmul.f32 %v2310, %v2314
  %vm2316 = vweird.f32 %v2293
  %vm2317 = vweird.f32 %v2310
  %vm2318 = vmor %vm2316, %vm2317
  %v2319 = vsel %vm2318, %v2310, %v2315
  %v2320 = vrsqrt.pop %v2294
  %v2321 = vmul.f32 %v2320, %v2294
  %v2322 = vmul.f32 %v2321, %v2320
  %v2323 = vmul.f32 0.5, %v2322
  %v2324 = vsub.f32 1.5, %v2323
  %v2325 = vmul.f32 %v2320, %v2324
  %vm2326 = vweird.f32 %v2294
  %vm2327 = vweird.f32 %v2320
  %vm2328 = vmor %vm2326, %vm2327
  %v2329 = vsel %vm2328, %v2320, %v2325
  %v2330 = vrsqrt.pop %v2295
  %v2331 = vmul.f32 %v2330, %v2295
  %v2332 = vmul.f32 %v2331, %v2330
  %v2333 = vmul.f32 0.5, %v2332
  %v2334 = vsub.f32 1.5, %v2333
  %v2335 = vmul.f32 %v2330, %v2334
  %vm2336 = vweird.f32 %v2295
  %vm2337 = vweird.f32 %v2330
  %vm2338 = vmor %vm2336, %vm2337
  %v2339 = vsel %vm2338, %v2330, %v2335
  %v2340 = vrsqrt.pop %v2296
  %v2341 = vmul.f32 %v2340, %v2296
  %v2342 = vmul.f32 %v2341, %v2340
  %v2343 = vmul.f32 0.5, %v2342
  %v2344 = vsub.f32 1.5, %v2343
  %v2345 = vmul.f32 %v2340, %v2344
  %vm2346 = vweird.f32 %v2296
  %vm2347 = vweird.f32 %v2340
  %vm2348 = vmor %vm2346, %vm2347
  %v2349 = vsel %vm2348, %v2340, %v2345
  %v2350 = vrsqrt.pop %v2297
  %v2351 = vmul.f32 %v2350, %v2297
  %v2352 = vmul.f32 %v2351, %v2350
  %v2353 = vmul.f32 0.5, %v2352
  %v2354 = vsub.f32 1.5, %v2353
  %v2355 = vmul.f32 %v2350, %v2354
  %vm2356 = vweird.f32 %v2297
  %vm2357 = vweird.f32 %v2350
  %vm2358 = vmor %vm2356, %vm2357
  %v2359 = vsel %vm2358, %v2350, %v2355
  %v2360 = vrsqrt.pop %v2298
  %v2361 = vmul.f32 %v2360, %v2298
  %v2362 = vmul.f32 %v2361, %v2360
  %v2363 = vmul.f32 0.5, %v2362
  %v2364 = vsub.f32 1.5, %v2363
  %v2365 = vmul.f32 %v2360, %v2364
  %vm2366 = vweird.f32 %v2298
  %vm2367 = vweird.f32 %v2360
  %vm2368 = vmor %vm2366, %vm2367
  %v2369 = vsel %vm2368, %v2360, %v2365
  %v2370 = vrsqrt.pop %v2299
  %v2371 = vmul.f32 %v2370, %v2299
  %v2372 = vmul.f32 %v2371, %v2370
  %v2373 = vmul.f32 0.5, %v2372
  %v2374 = vsub.f32 1.5, %v2373
  %v2375 = vmul.f32 %v2370, %v2374
  %vm2376 = vweird.f32 %v2299
  %vm2377 = vweird.f32 %v2370
  %vm2378 = vmor %vm2376, %vm2377
  %v2379 = vsel %vm2378, %v2370, %v2375
  %v2380 = vmul.f32 %v2284, %v2309
  %v2381 = vmul.f32 %v2285, %v2319
  %v2382 = vmul.f32 %v2286, %v2329
  %v2383 = vmul.f32 %v2287, %v2339
  %v2384 = vmul.f32 %v2288, %v2349
  %v2385 = vmul.f32 %v2289, %v2359
  %v2386 = vmul.f32 %v2290, %v2369
  %v2387 = vmul.f32 %v2291, %v2379
  %v2388 = vperm.slane %v2061, 0
  %v2389 = vmul.f32 %v2380, %v2388
  %v2390 = vmul.f32 %v2381, %v2388
  %v2391 = vmul.f32 %v2382, %v2388
  %v2392 = vmul.f32 %v2383, %v2388
  %v2393 = vmul.f32 %v2384, %v2388
  %v2394 = vmul.f32 %v2385, %v2388
  %v2395 = vmul.f32 %v2386, %v2388
  %v2396 = vmul.f32 %v2387, %v2388
  %v2397 = vperm.slane %v2062, 0
  %v2398 = vadd.f32 %v2389, %v2397
  %v2399 = vadd.f32 %v2390, %v2397
  %v2400 = vadd.f32 %v2391, %v2397
  %v2401 = vadd.f32 %v2392, %v2397
  %v2402 = vadd.f32 %v2393, %v2397
  %v2403 = vadd.f32 %v2394, %v2397
  %v2404 = vadd.f32 %v2395, %v2397
  %v2405 = vadd.f32 %v2396, %v2397
  %v2406 = vmax.f32 %v2398, 0.0
  %v2407 = vmax.f32 %v2399, 0.0
  %v2408 = vmax.f32 %v2400, 0.0
  %v2409 = vmax.f32 %v2401, 0.0
  %v2410 = vmax.f32 %v2402, 0.0
  %v2411 = vmax.f32 %v2403, 0.0
  %v2412 = vmax.f32 %v2404, 0.0
  %v2413 = vmax.f32 %v2405, 0.0
  %s2414 = scalar_lea.vmem %s4, 12
  %v2415 = vld [vmem:[%s2414] sm:$0x1]
  %v2416 = vld [vmem:[%s2414 + $0x1] sm:$0x1]
  %v2417 = vld [vmem:[%s2414 + $0x2] sm:$0x1]
  %s2418 = scalar_lea.vmem %s3, 96
  %v2419 = vld [vmem:[%s2418] sm:$0xff]
  %v2420 = vld [vmem:[%s2418 + $0x8] sm:$0xff]
  %v2421 = vld [vmem:[%s2418 + $0x10] sm:$0xff]
  %v2422 = vld [vmem:[%s2418 + $0x18] sm:$0xff]
  %v2423 = vpack.c.bf16 %v2407, %v2406
  %v2424 = vpack.c.bf16 %v2409, %v2408
  %v2425 = vpack.c.bf16 %v2411, %v2410
  %v2426 = vpack.c.bf16 %v2413, %v2412
  %v2427 = vpack.c.bf16 %v2420, %v2419
  %v2428 = vpack.c.bf16 %v2422, %v2421
  %v2429 = vperm.slane %v2415, 0
  %v2431 = vsel %vm93, %v2423, 0
  %v2434 = vsel %vm93, %v2424, 0
  %v2437 = vsel %vm93, %v2425, 0
  %v2440 = vsel %vm93, %v2426, 0
  %2442 = vmatpush.bf16.msra.mxu0 0
  %2443 = vmatpush.bf16.msra.mxu0 0
  %2444 = vmatpush.bf16.msra.mxu0 0
  %2445 = vmatpush.bf16.msra.mxu0 0
  %2446 = vmatpush.bf16.msra.mxu0 0
  %2447 = vmatpush.bf16.msra.mxu0 0
  %2448 = vmatpush.bf16.msra.mxu0 %v2428
  %2449 = vmatpush.bf16.msra.mxu0 %v2427
  %2450 = vmatmul.bf16.gmra.mxu0 %v2431
  %v2451 = vpop.f32.mrf.mxu0
  %v2452 = vadd.f32 %v2429, %v2451
  %v2453 = vpop.f32.mrf.mxu0
  %v2454 = vadd.f32 %v2429, %v2453
  %2455 = vmatmul.bf16.gmra.mxu0 %v2434
  %v2456 = vpop.f32.mrf.mxu0
  %v2457 = vadd.f32 %v2429, %v2456
  %v2458 = vpop.f32.mrf.mxu0
  %v2459 = vadd.f32 %v2429, %v2458
  %2460 = vmatmul.bf16.gmra.mxu0 %v2437
  %v2461 = vpop.f32.mrf.mxu0
  %v2462 = vadd.f32 %v2429, %v2461
  %v2463 = vpop.f32.mrf.mxu0
  %v2464 = vadd.f32 %v2429, %v2463
  %2465 = vmatmul.bf16.gmra.mxu0 %v2440
  %v2466 = vpop.f32.mrf.mxu0
  %v2467 = vadd.f32 %v2429, %v2466
  %v2468 = vpop.f32.mrf.mxu0
  %v2469 = vadd.f32 %v2429, %v2468
  %2470 = vdwg.mxu0
  %v2471 = vsel %vm93, %v2452, 0.0
  %2472 = vadd.xlane.f32.xlu0 %v2471
  %v2473 = vpop.xlane.xlu0 %2472
  %v2474 = vsel %vm93, %v2454, 0.0
  %2475 = vadd.xlane.f32.xlu0 %v2474
  %v2476 = vpop.xlane.xlu0 %2475
  %v2477 = vsel %vm93, %v2457, 0.0
  %2478 = vadd.xlane.f32.xlu0 %v2477
  %v2479 = vpop.xlane.xlu0 %2478
  %v2480 = vsel %vm93, %v2459, 0.0
  %2481 = vadd.xlane.f32.xlu0 %v2480
  %v2482 = vpop.xlane.xlu0 %2481
  %v2483 = vsel %vm93, %v2462, 0.0
  %2484 = vadd.xlane.f32.xlu0 %v2483
  %v2485 = vpop.xlane.xlu0 %2484
  %v2486 = vsel %vm93, %v2464, 0.0
  %2487 = vadd.xlane.f32.xlu0 %v2486
  %v2488 = vpop.xlane.xlu0 %2487
  %v2489 = vsel %vm93, %v2467, 0.0
  %2490 = vadd.xlane.f32.xlu0 %v2489
  %v2491 = vpop.xlane.xlu0 %2490
  %v2492 = vsel %vm93, %v2469, 0.0
  %2493 = vadd.xlane.f32.xlu0 %v2492
  %v2494 = vpop.xlane.xlu0 %2493
  %v2495 = vmul.f32 %v2473, %v124
  %v2496 = vmul.f32 %v2476, %v124
  %v2497 = vmul.f32 %v2479, %v124
  %v2498 = vmul.f32 %v2482, %v124
  %v2499 = vmul.f32 %v2485, %v124
  %v2500 = vmul.f32 %v2488, %v124
  %v2501 = vmul.f32 %v2491, %v124
  %v2502 = vmul.f32 %v2494, %v124
  %v2503 = vmul.f32 %v2452, %v2452
  %v2504 = vmul.f32 %v2454, %v2454
  %v2505 = vmul.f32 %v2457, %v2457
  %v2506 = vmul.f32 %v2459, %v2459
  %v2507 = vmul.f32 %v2462, %v2462
  %v2508 = vmul.f32 %v2464, %v2464
  %v2509 = vmul.f32 %v2467, %v2467
  %v2510 = vmul.f32 %v2469, %v2469
  %v2511 = vsel %vm93, %v2503, 0.0
  %2512 = vadd.xlane.f32.xlu0 %v2511
  %v2513 = vpop.xlane.xlu0 %2512
  %v2514 = vsel %vm93, %v2504, 0.0
  %2515 = vadd.xlane.f32.xlu0 %v2514
  %v2516 = vpop.xlane.xlu0 %2515
  %v2517 = vsel %vm93, %v2505, 0.0
  %2518 = vadd.xlane.f32.xlu0 %v2517
  %v2519 = vpop.xlane.xlu0 %2518
  %v2520 = vsel %vm93, %v2506, 0.0
  %2521 = vadd.xlane.f32.xlu0 %v2520
  %v2522 = vpop.xlane.xlu0 %2521
  %v2523 = vsel %vm93, %v2507, 0.0
  %2524 = vadd.xlane.f32.xlu0 %v2523
  %v2525 = vpop.xlane.xlu0 %2524
  %v2526 = vsel %vm93, %v2508, 0.0
  %2527 = vadd.xlane.f32.xlu0 %v2526
  %v2528 = vpop.xlane.xlu0 %2527
  %v2529 = vsel %vm93, %v2509, 0.0
  %2530 = vadd.xlane.f32.xlu0 %v2529
  %v2531 = vpop.xlane.xlu0 %2530
  %v2532 = vsel %vm93, %v2510, 0.0
  %2533 = vadd.xlane.f32.xlu0 %v2532
  %v2534 = vpop.xlane.xlu0 %2533
  %v2535 = vmul.f32 %v2513, %v124
  %v2536 = vmul.f32 %v2516, %v124
  %v2537 = vmul.f32 %v2519, %v124
  %v2538 = vmul.f32 %v2522, %v124
  %v2539 = vmul.f32 %v2525, %v124
  %v2540 = vmul.f32 %v2528, %v124
  %v2541 = vmul.f32 %v2531, %v124
  %v2542 = vmul.f32 %v2534, %v124
  %v2543 = vmul.f32 %v2495, %v2495
  %v2544 = vmul.f32 %v2496, %v2496
  %v2545 = vmul.f32 %v2497, %v2497
  %v2546 = vmul.f32 %v2498, %v2498
  %v2547 = vmul.f32 %v2499, %v2499
  %v2548 = vmul.f32 %v2500, %v2500
  %v2549 = vmul.f32 %v2501, %v2501
  %v2550 = vmul.f32 %v2502, %v2502
  %v2551 = vsub.f32 %v2535, %v2543
  %v2552 = vsub.f32 %v2536, %v2544
  %v2553 = vsub.f32 %v2537, %v2545
  %v2554 = vsub.f32 %v2538, %v2546
  %v2555 = vsub.f32 %v2539, %v2547
  %v2556 = vsub.f32 %v2540, %v2548
  %v2557 = vsub.f32 %v2541, %v2549
  %v2558 = vsub.f32 %v2542, %v2550
  %v2559 = vsub.f32 %v2452, %v2495
  %v2560 = vsub.f32 %v2454, %v2496
  %v2561 = vsub.f32 %v2457, %v2497
  %v2562 = vsub.f32 %v2459, %v2498
  %v2563 = vsub.f32 %v2462, %v2499
  %v2564 = vsub.f32 %v2464, %v2500
  %v2565 = vsub.f32 %v2467, %v2501
  %v2566 = vsub.f32 %v2469, %v2502
  %v2567 = vadd.f32 %v2551, 1e-05
  %v2568 = vadd.f32 %v2552, 1e-05
  %v2569 = vadd.f32 %v2553, 1e-05
  %v2570 = vadd.f32 %v2554, 1e-05
  %v2571 = vadd.f32 %v2555, 1e-05
  %v2572 = vadd.f32 %v2556, 1e-05
  %v2573 = vadd.f32 %v2557, 1e-05
  %v2574 = vadd.f32 %v2558, 1e-05
  %v2575 = vrsqrt.pop %v2567
  %v2576 = vmul.f32 %v2575, %v2567
  %v2577 = vmul.f32 %v2576, %v2575
  %v2578 = vmul.f32 0.5, %v2577
  %v2579 = vsub.f32 1.5, %v2578
  %v2580 = vmul.f32 %v2575, %v2579
  %vm2581 = vweird.f32 %v2567
  %vm2582 = vweird.f32 %v2575
  %vm2583 = vmor %vm2581, %vm2582
  %v2584 = vsel %vm2583, %v2575, %v2580
  %v2585 = vrsqrt.pop %v2568
  %v2586 = vmul.f32 %v2585, %v2568
  %v2587 = vmul.f32 %v2586, %v2585
  %v2588 = vmul.f32 0.5, %v2587
  %v2589 = vsub.f32 1.5, %v2588
  %v2590 = vmul.f32 %v2585, %v2589
  %vm2591 = vweird.f32 %v2568
  %vm2592 = vweird.f32 %v2585
  %vm2593 = vmor %vm2591, %vm2592
  %v2594 = vsel %vm2593, %v2585, %v2590
  %v2595 = vrsqrt.pop %v2569
  %v2596 = vmul.f32 %v2595, %v2569
  %v2597 = vmul.f32 %v2596, %v2595
  %v2598 = vmul.f32 0.5, %v2597
  %v2599 = vsub.f32 1.5, %v2598
  %v2600 = vmul.f32 %v2595, %v2599
  %vm2601 = vweird.f32 %v2569
  %vm2602 = vweird.f32 %v2595
  %vm2603 = vmor %vm2601, %vm2602
  %v2604 = vsel %vm2603, %v2595, %v2600
  %v2605 = vrsqrt.pop %v2570
  %v2606 = vmul.f32 %v2605, %v2570
  %v2607 = vmul.f32 %v2606, %v2605
  %v2608 = vmul.f32 0.5, %v2607
  %v2609 = vsub.f32 1.5, %v2608
  %v2610 = vmul.f32 %v2605, %v2609
  %vm2611 = vweird.f32 %v2570
  %vm2612 = vweird.f32 %v2605
  %vm2613 = vmor %vm2611, %vm2612
  %v2614 = vsel %vm2613, %v2605, %v2610
  %v2615 = vrsqrt.pop %v2571
  %v2616 = vmul.f32 %v2615, %v2571
  %v2617 = vmul.f32 %v2616, %v2615
  %v2618 = vmul.f32 0.5, %v2617
  %v2619 = vsub.f32 1.5, %v2618
  %v2620 = vmul.f32 %v2615, %v2619
  %vm2621 = vweird.f32 %v2571
  %vm2622 = vweird.f32 %v2615
  %vm2623 = vmor %vm2621, %vm2622
  %v2624 = vsel %vm2623, %v2615, %v2620
  %v2625 = vrsqrt.pop %v2572
  %v2626 = vmul.f32 %v2625, %v2572
  %v2627 = vmul.f32 %v2626, %v2625
  %v2628 = vmul.f32 0.5, %v2627
  %v2629 = vsub.f32 1.5, %v2628
  %v2630 = vmul.f32 %v2625, %v2629
  %vm2631 = vweird.f32 %v2572
  %vm2632 = vweird.f32 %v2625
  %vm2633 = vmor %vm2631, %vm2632
  %v2634 = vsel %vm2633, %v2625, %v2630
  %v2635 = vrsqrt.pop %v2573
  %v2636 = vmul.f32 %v2635, %v2573
  %v2637 = vmul.f32 %v2636, %v2635
  %v2638 = vmul.f32 0.5, %v2637
  %v2639 = vsub.f32 1.5, %v2638
  %v2640 = vmul.f32 %v2635, %v2639
  %vm2641 = vweird.f32 %v2573
  %vm2642 = vweird.f32 %v2635
  %vm2643 = vmor %vm2641, %vm2642
  %v2644 = vsel %vm2643, %v2635, %v2640
  %v2645 = vrsqrt.pop %v2574
  %v2646 = vmul.f32 %v2645, %v2574
  %v2647 = vmul.f32 %v2646, %v2645
  %v2648 = vmul.f32 0.5, %v2647
  %v2649 = vsub.f32 1.5, %v2648
  %v2650 = vmul.f32 %v2645, %v2649
  %vm2651 = vweird.f32 %v2574
  %vm2652 = vweird.f32 %v2645
  %vm2653 = vmor %vm2651, %vm2652
  %v2654 = vsel %vm2653, %v2645, %v2650
  %v2655 = vmul.f32 %v2559, %v2584
  %v2656 = vmul.f32 %v2560, %v2594
  %v2657 = vmul.f32 %v2561, %v2604
  %v2658 = vmul.f32 %v2562, %v2614
  %v2659 = vmul.f32 %v2563, %v2624
  %v2660 = vmul.f32 %v2564, %v2634
  %v2661 = vmul.f32 %v2565, %v2644
  %v2662 = vmul.f32 %v2566, %v2654
  %v2663 = vperm.slane %v2416, 0
  %v2664 = vmul.f32 %v2655, %v2663
  %v2665 = vmul.f32 %v2656, %v2663
  %v2666 = vmul.f32 %v2657, %v2663
  %v2667 = vmul.f32 %v2658, %v2663
  %v2668 = vmul.f32 %v2659, %v2663
  %v2669 = vmul.f32 %v2660, %v2663
  %v2670 = vmul.f32 %v2661, %v2663
  %v2671 = vmul.f32 %v2662, %v2663
  %v2672 = vperm.slane %v2417, 0
  %v2673 = vadd.f32 %v2664, %v2672
  %v2674 = vadd.f32 %v2665, %v2672
  %v2675 = vadd.f32 %v2666, %v2672
  %v2676 = vadd.f32 %v2667, %v2672
  %v2677 = vadd.f32 %v2668, %v2672
  %v2678 = vadd.f32 %v2669, %v2672
  %v2679 = vadd.f32 %v2670, %v2672
  %v2680 = vadd.f32 %v2671, %v2672
  %v2681 = vmax.f32 %v2673, 0.0
  %v2682 = vmax.f32 %v2674, 0.0
  %v2683 = vmax.f32 %v2675, 0.0
  %v2684 = vmax.f32 %v2676, 0.0
  %v2685 = vmax.f32 %v2677, 0.0
  %v2686 = vmax.f32 %v2678, 0.0
  %v2687 = vmax.f32 %v2679, 0.0
  %v2688 = vmax.f32 %v2680, 0.0
  %v2689 = vsel %vm93, %v2681, -inf
  %v2690 = vrot.slane %v2689, 4
  %v2691 = vmax.f32 %v2689, %v2690
  %v2692 = vrot.slane %v2691, 2
  %v2693 = vmax.f32 %v2691, %v2692
  %v2694 = vrot.slane %v2693, 1
  %v2695 = vmax.f32 %v2693, %v2694
  %v2696 = vsel %vm93, %v2682, -inf
  %v2697 = vrot.slane %v2696, 4
  %v2698 = vmax.f32 %v2696, %v2697
  %v2699 = vrot.slane %v2698, 2
  %v2700 = vmax.f32 %v2698, %v2699
  %v2701 = vrot.slane %v2700, 1
  %v2702 = vmax.f32 %v2700, %v2701
  %v2703 = vsel %vm93, %v2683, -inf
  %v2704 = vrot.slane %v2703, 4
  %v2705 = vmax.f32 %v2703, %v2704
  %v2706 = vrot.slane %v2705, 2
  %v2707 = vmax.f32 %v2705, %v2706
  %v2708 = vrot.slane %v2707, 1
  %v2709 = vmax.f32 %v2707, %v2708
  %v2710 = vsel %vm93, %v2684, -inf
  %v2711 = vrot.slane %v2710, 4
  %v2712 = vmax.f32 %v2710, %v2711
  %v2713 = vrot.slane %v2712, 2
  %v2714 = vmax.f32 %v2712, %v2713
  %v2715 = vrot.slane %v2714, 1
  %v2716 = vmax.f32 %v2714, %v2715
  %v2717 = vsel %vm93, %v2685, -inf
  %v2718 = vrot.slane %v2717, 4
  %v2719 = vmax.f32 %v2717, %v2718
  %v2720 = vrot.slane %v2719, 2
  %v2721 = vmax.f32 %v2719, %v2720
  %v2722 = vrot.slane %v2721, 1
  %v2723 = vmax.f32 %v2721, %v2722
  %v2724 = vsel %vm93, %v2686, -inf
  %v2725 = vrot.slane %v2724, 4
  %v2726 = vmax.f32 %v2724, %v2725
  %v2727 = vrot.slane %v2726, 2
  %v2728 = vmax.f32 %v2726, %v2727
  %v2729 = vrot.slane %v2728, 1
  %v2730 = vmax.f32 %v2728, %v2729
  %v2731 = vsel %vm93, %v2687, -inf
  %v2732 = vrot.slane %v2731, 4
  %v2733 = vmax.f32 %v2731, %v2732
  %v2734 = vrot.slane %v2733, 2
  %v2735 = vmax.f32 %v2733, %v2734
  %v2736 = vrot.slane %v2735, 1
  %v2737 = vmax.f32 %v2735, %v2736
  %v2738 = vsel %vm93, %v2688, -inf
  %v2739 = vrot.slane %v2738, 4
  %v2740 = vmax.f32 %v2738, %v2739
  %v2741 = vrot.slane %v2740, 2
  %v2742 = vmax.f32 %v2740, %v2741
  %v2743 = vrot.slane %v2742, 1
  %v2744 = vmax.f32 %v2742, %v2743
  %s2745 = scalar_lea.vmem %s2, 16
  %v2746 = vld [vmem:[%s2745] sm:$0x1]
  %v2747 = vld [vmem:[%s2745 + $0x1] sm:$0x1]
  %v2748 = vld [vmem:[%s2745 + $0x2] sm:$0x1]
  %s2749 = scalar_lea.vmem %s1, 256
  %v2750 = vld [vmem:[%s2749 + $0x20] sm:$0xff]
  %v2751 = vld [vmem:[%s2749 + $0x28] sm:$0xff]
  %v2752 = vld [vmem:[%s2749 + $0x30] sm:$0xff]
  %v2753 = vld [vmem:[%s2749 + $0x38] sm:$0xff]
  %v2754 = vpack.c.bf16 %v2682, %v2681
  %v2755 = vpack.c.bf16 %v2684, %v2683
  %v2756 = vpack.c.bf16 %v2686, %v2685
  %v2757 = vpack.c.bf16 %v2688, %v2687
  %v2758 = vpack.c.bf16 %v2751, %v2750
  %v2759 = vpack.c.bf16 %v2753, %v2752
  %v2760 = vld [vmem:[%s2749] sm:$0xff]
  %v2761 = vld [vmem:[%s2749 + $0x8] sm:$0xff]
  %v2762 = vld [vmem:[%s2749 + $0x10] sm:$0xff]
  %v2763 = vld [vmem:[%s2749 + $0x18] sm:$0xff]
  %v2764 = vpack.c.bf16 %v2695, %v2695
  %v2765 = vpack.c.bf16 %v2702, %v2702
  %v2766 = vpack.c.bf16 %v2709, %v2709
  %v2767 = vpack.c.bf16 %v2716, %v2716
  %v2768 = vpack.c.bf16 %v2723, %v2723
  %v2769 = vpack.c.bf16 %v2730, %v2730
  %v2770 = vpack.c.bf16 %v2737, %v2737
  %v2771 = vpack.c.bf16 %v2744, %v2744
  %v2772 = vpack.c.bf16 %v2761, %v2760
  %v2773 = vpack.c.bf16 %v2763, %v2762
  %v2782 = vunpack.c.l.b16 %v2764
  %v2783 = vunpack.c.l.b16 %v2765
  %v2784 = vunpack.c.l.b16 %v2766
  %v2785 = vunpack.c.l.b16 %v2767
  %v2786 = vunpack.c.l.b16 %v2768
  %v2787 = vunpack.c.l.b16 %v2769
  %v2788 = vunpack.c.l.b16 %v2770
  %v2789 = vunpack.c.l.b16 %v2771
  %v2790 = vsel %vm692, %v2783, %v2782
  %v2791 = vsel %vm694, %v2784, %v2790
  %v2792 = vsel %vm696, %v2785, %v2791
  %v2793 = vsel %vm698, %v2786, %v2792
  %v2794 = vsel %vm700, %v2787, %v2793
  %v2795 = vsel %vm702, %v2788, %v2794
  %v2796 = vsel %vm704, %v2789, %v2795
  %v2797 = vpack.c.b16 %v2796, %v2796
  %v2799 = vsel %vm93, %v2797, 0
  %2801 = vmatpush.bf16.msra.mxu0 0
  %2802 = vmatpush.bf16.msra.mxu0 0
  %2803 = vmatpush.bf16.msra.mxu0 0
  %2804 = vmatpush.bf16.msra.mxu0 0
  %2805 = vmatpush.bf16.msra.mxu0 0
  %2806 = vmatpush.bf16.msra.mxu0 0
  %2807 = vmatpush.bf16.msra.mxu0 %v2773
  %2808 = vmatpush.bf16.msra.mxu0 %v2772
  %2809 = vmatmul.bf16.gmra.mxu0 %v2799
  %v2810 = vpop.f32.mrf.mxu0
  %v2811 = vadd.f32 0.0, %v2810
  %v2812 = vpop.f32.mrf.mxu0
  %2813 = vdwg.mxu0
  %v2815 = vrot.slane %v2811, 1
  %v2816 = vrot.slane %v2811, 2
  %v2817 = vrot.slane %v2811, 3
  %v2818 = vrot.slane %v2811, 4
  %v2819 = vrot.slane %v2811, 5
  %v2820 = vrot.slane %v2811, 6
  %v2821 = vrot.slane %v2811, 7
  %v2822 = vperm.slane %v2811, 0
  %v2823 = vperm.slane %v2815, 0
  %v2824 = vperm.slane %v2816, 0
  %v2825 = vperm.slane %v2817, 0
  %v2826 = vperm.slane %v2818, 0
  %v2827 = vperm.slane %v2819, 0
  %v2828 = vperm.slane %v2820, 0
  %v2829 = vperm.slane %v2821, 0
  %v2839 = vsel %vm93, %v2754, 0
  %v2842 = vsel %vm93, %v2755, 0
  %v2845 = vsel %vm93, %v2756, 0
  %v2848 = vsel %vm93, %v2757, 0
  %2850 = vmatpush.bf16.msra.mxu0 0
  %2851 = vmatpush.bf16.msra.mxu0 0
  %2852 = vmatpush.bf16.msra.mxu0 0
  %2853 = vmatpush.bf16.msra.mxu0 0
  %2854 = vmatpush.bf16.msra.mxu0 0
  %2855 = vmatpush.bf16.msra.mxu0 0
  %2856 = vmatpush.bf16.msra.mxu0 %v2759
  %2857 = vmatpush.bf16.msra.mxu0 %v2758
  %2858 = vmatmul.bf16.gmra.mxu0 %v2839
  %v2859 = vpop.f32.mrf.mxu0
  %v2860 = vadd.f32 %v2822, %v2859
  %v2861 = vpop.f32.mrf.mxu0
  %v2862 = vadd.f32 %v2823, %v2861
  %2863 = vmatmul.bf16.gmra.mxu0 %v2842
  %v2864 = vpop.f32.mrf.mxu0
  %v2865 = vadd.f32 %v2824, %v2864
  %v2866 = vpop.f32.mrf.mxu0
  %v2867 = vadd.f32 %v2825, %v2866
  %2868 = vmatmul.bf16.gmra.mxu0 %v2845
  %v2869 = vpop.f32.mrf.mxu0
  %v2870 = vadd.f32 %v2826, %v2869
  %v2871 = vpop.f32.mrf.mxu0
  %v2872 = vadd.f32 %v2827, %v2871
  %2873 = vmatmul.bf16.gmra.mxu0 %v2848
  %v2874 = vpop.f32.mrf.mxu0
  %v2875 = vadd.f32 %v2828, %v2874
  %v2876 = vpop.f32.mrf.mxu0
  %v2877 = vadd.f32 %v2829, %v2876
  %2878 = vdwg.mxu0
  %v2879 = vperm.slane %v2746, 0
  %v2880 = vadd.f32 %v2860, %v2879
  %v2881 = vadd.f32 %v2862, %v2879
  %v2882 = vadd.f32 %v2865, %v2879
  %v2883 = vadd.f32 %v2867, %v2879
  %v2884 = vadd.f32 %v2870, %v2879
  %v2885 = vadd.f32 %v2872, %v2879
  %v2886 = vadd.f32 %v2875, %v2879
  %v2887 = vadd.f32 %v2877, %v2879
  %v2888 = vsel %vm93, %v2880, 0.0
  %2889 = vadd.xlane.f32.xlu0 %v2888
  %v2890 = vpop.xlane.xlu0 %2889
  %v2891 = vsel %vm93, %v2881, 0.0
  %2892 = vadd.xlane.f32.xlu0 %v2891
  %v2893 = vpop.xlane.xlu0 %2892
  %v2894 = vsel %vm93, %v2882, 0.0
  %2895 = vadd.xlane.f32.xlu0 %v2894
  %v2896 = vpop.xlane.xlu0 %2895
  %v2897 = vsel %vm93, %v2883, 0.0
  %2898 = vadd.xlane.f32.xlu0 %v2897
  %v2899 = vpop.xlane.xlu0 %2898
  %v2900 = vsel %vm93, %v2884, 0.0
  %2901 = vadd.xlane.f32.xlu0 %v2900
  %v2902 = vpop.xlane.xlu0 %2901
  %v2903 = vsel %vm93, %v2885, 0.0
  %2904 = vadd.xlane.f32.xlu0 %v2903
  %v2905 = vpop.xlane.xlu0 %2904
  %v2906 = vsel %vm93, %v2886, 0.0
  %2907 = vadd.xlane.f32.xlu0 %v2906
  %v2908 = vpop.xlane.xlu0 %2907
  %v2909 = vsel %vm93, %v2887, 0.0
  %2910 = vadd.xlane.f32.xlu0 %v2909
  %v2911 = vpop.xlane.xlu0 %2910
  %v2912 = vmul.f32 %v2890, %v124
  %v2913 = vmul.f32 %v2893, %v124
  %v2914 = vmul.f32 %v2896, %v124
  %v2915 = vmul.f32 %v2899, %v124
  %v2916 = vmul.f32 %v2902, %v124
  %v2917 = vmul.f32 %v2905, %v124
  %v2918 = vmul.f32 %v2908, %v124
  %v2919 = vmul.f32 %v2911, %v124
  %v2920 = vmul.f32 %v2880, %v2880
  %v2921 = vmul.f32 %v2881, %v2881
  %v2922 = vmul.f32 %v2882, %v2882
  %v2923 = vmul.f32 %v2883, %v2883
  %v2924 = vmul.f32 %v2884, %v2884
  %v2925 = vmul.f32 %v2885, %v2885
  %v2926 = vmul.f32 %v2886, %v2886
  %v2927 = vmul.f32 %v2887, %v2887
  %v2928 = vsel %vm93, %v2920, 0.0
  %2929 = vadd.xlane.f32.xlu0 %v2928
  %v2930 = vpop.xlane.xlu0 %2929
  %v2931 = vsel %vm93, %v2921, 0.0
  %2932 = vadd.xlane.f32.xlu0 %v2931
  %v2933 = vpop.xlane.xlu0 %2932
  %v2934 = vsel %vm93, %v2922, 0.0
  %2935 = vadd.xlane.f32.xlu0 %v2934
  %v2936 = vpop.xlane.xlu0 %2935
  %v2937 = vsel %vm93, %v2923, 0.0
  %2938 = vadd.xlane.f32.xlu0 %v2937
  %v2939 = vpop.xlane.xlu0 %2938
  %v2940 = vsel %vm93, %v2924, 0.0
  %2941 = vadd.xlane.f32.xlu0 %v2940
  %v2942 = vpop.xlane.xlu0 %2941
  %v2943 = vsel %vm93, %v2925, 0.0
  %2944 = vadd.xlane.f32.xlu0 %v2943
  %v2945 = vpop.xlane.xlu0 %2944
  %v2946 = vsel %vm93, %v2926, 0.0
  %2947 = vadd.xlane.f32.xlu0 %v2946
  %v2948 = vpop.xlane.xlu0 %2947
  %v2949 = vsel %vm93, %v2927, 0.0
  %2950 = vadd.xlane.f32.xlu0 %v2949
  %v2951 = vpop.xlane.xlu0 %2950
  %v2952 = vmul.f32 %v2930, %v124
  %v2953 = vmul.f32 %v2933, %v124
  %v2954 = vmul.f32 %v2936, %v124
  %v2955 = vmul.f32 %v2939, %v124
  %v2956 = vmul.f32 %v2942, %v124
  %v2957 = vmul.f32 %v2945, %v124
  %v2958 = vmul.f32 %v2948, %v124
  %v2959 = vmul.f32 %v2951, %v124
  %v2960 = vmul.f32 %v2912, %v2912
  %v2961 = vmul.f32 %v2913, %v2913
  %v2962 = vmul.f32 %v2914, %v2914
  %v2963 = vmul.f32 %v2915, %v2915
  %v2964 = vmul.f32 %v2916, %v2916
  %v2965 = vmul.f32 %v2917, %v2917
  %v2966 = vmul.f32 %v2918, %v2918
  %v2967 = vmul.f32 %v2919, %v2919
  %v2968 = vsub.f32 %v2952, %v2960
  %v2969 = vsub.f32 %v2953, %v2961
  %v2970 = vsub.f32 %v2954, %v2962
  %v2971 = vsub.f32 %v2955, %v2963
  %v2972 = vsub.f32 %v2956, %v2964
  %v2973 = vsub.f32 %v2957, %v2965
  %v2974 = vsub.f32 %v2958, %v2966
  %v2975 = vsub.f32 %v2959, %v2967
  %v2976 = vsub.f32 %v2880, %v2912
  %v2977 = vsub.f32 %v2881, %v2913
  %v2978 = vsub.f32 %v2882, %v2914
  %v2979 = vsub.f32 %v2883, %v2915
  %v2980 = vsub.f32 %v2884, %v2916
  %v2981 = vsub.f32 %v2885, %v2917
  %v2982 = vsub.f32 %v2886, %v2918
  %v2983 = vsub.f32 %v2887, %v2919
  %v2984 = vadd.f32 %v2968, 1e-05
  %v2985 = vadd.f32 %v2969, 1e-05
  %v2986 = vadd.f32 %v2970, 1e-05
  %v2987 = vadd.f32 %v2971, 1e-05
  %v2988 = vadd.f32 %v2972, 1e-05
  %v2989 = vadd.f32 %v2973, 1e-05
  %v2990 = vadd.f32 %v2974, 1e-05
  %v2991 = vadd.f32 %v2975, 1e-05
  %v2992 = vrsqrt.pop %v2984
  %v2993 = vmul.f32 %v2992, %v2984
  %v2994 = vmul.f32 %v2993, %v2992
  %v2995 = vmul.f32 0.5, %v2994
  %v2996 = vsub.f32 1.5, %v2995
  %v2997 = vmul.f32 %v2992, %v2996
  %vm2998 = vweird.f32 %v2984
  %vm2999 = vweird.f32 %v2992
  %vm3000 = vmor %vm2998, %vm2999
  %v3001 = vsel %vm3000, %v2992, %v2997
  %v3002 = vrsqrt.pop %v2985
  %v3003 = vmul.f32 %v3002, %v2985
  %v3004 = vmul.f32 %v3003, %v3002
  %v3005 = vmul.f32 0.5, %v3004
  %v3006 = vsub.f32 1.5, %v3005
  %v3007 = vmul.f32 %v3002, %v3006
  %vm3008 = vweird.f32 %v2985
  %vm3009 = vweird.f32 %v3002
  %vm3010 = vmor %vm3008, %vm3009
  %v3011 = vsel %vm3010, %v3002, %v3007
  %v3012 = vrsqrt.pop %v2986
  %v3013 = vmul.f32 %v3012, %v2986
  %v3014 = vmul.f32 %v3013, %v3012
  %v3015 = vmul.f32 0.5, %v3014
  %v3016 = vsub.f32 1.5, %v3015
  %v3017 = vmul.f32 %v3012, %v3016
  %vm3018 = vweird.f32 %v2986
  %vm3019 = vweird.f32 %v3012
  %vm3020 = vmor %vm3018, %vm3019
  %v3021 = vsel %vm3020, %v3012, %v3017
  %v3022 = vrsqrt.pop %v2987
  %v3023 = vmul.f32 %v3022, %v2987
  %v3024 = vmul.f32 %v3023, %v3022
  %v3025 = vmul.f32 0.5, %v3024
  %v3026 = vsub.f32 1.5, %v3025
  %v3027 = vmul.f32 %v3022, %v3026
  %vm3028 = vweird.f32 %v2987
  %vm3029 = vweird.f32 %v3022
  %vm3030 = vmor %vm3028, %vm3029
  %v3031 = vsel %vm3030, %v3022, %v3027
  %v3032 = vrsqrt.pop %v2988
  %v3033 = vmul.f32 %v3032, %v2988
  %v3034 = vmul.f32 %v3033, %v3032
  %v3035 = vmul.f32 0.5, %v3034
  %v3036 = vsub.f32 1.5, %v3035
  %v3037 = vmul.f32 %v3032, %v3036
  %vm3038 = vweird.f32 %v2988
  %vm3039 = vweird.f32 %v3032
  %vm3040 = vmor %vm3038, %vm3039
  %v3041 = vsel %vm3040, %v3032, %v3037
  %v3042 = vrsqrt.pop %v2989
  %v3043 = vmul.f32 %v3042, %v2989
  %v3044 = vmul.f32 %v3043, %v3042
  %v3045 = vmul.f32 0.5, %v3044
  %v3046 = vsub.f32 1.5, %v3045
  %v3047 = vmul.f32 %v3042, %v3046
  %vm3048 = vweird.f32 %v2989
  %vm3049 = vweird.f32 %v3042
  %vm3050 = vmor %vm3048, %vm3049
  %v3051 = vsel %vm3050, %v3042, %v3047
  %v3052 = vrsqrt.pop %v2990
  %v3053 = vmul.f32 %v3052, %v2990
  %v3054 = vmul.f32 %v3053, %v3052
  %v3055 = vmul.f32 0.5, %v3054
  %v3056 = vsub.f32 1.5, %v3055
  %v3057 = vmul.f32 %v3052, %v3056
  %vm3058 = vweird.f32 %v2990
  %vm3059 = vweird.f32 %v3052
  %vm3060 = vmor %vm3058, %vm3059
  %v3061 = vsel %vm3060, %v3052, %v3057
  %v3062 = vrsqrt.pop %v2991
  %v3063 = vmul.f32 %v3062, %v2991
  %v3064 = vmul.f32 %v3063, %v3062
  %v3065 = vmul.f32 0.5, %v3064
  %v3066 = vsub.f32 1.5, %v3065
  %v3067 = vmul.f32 %v3062, %v3066
  %vm3068 = vweird.f32 %v2991
  %vm3069 = vweird.f32 %v3062
  %vm3070 = vmor %vm3068, %vm3069
  %v3071 = vsel %vm3070, %v3062, %v3067
  %v3072 = vmul.f32 %v2976, %v3001
  %v3073 = vmul.f32 %v2977, %v3011
  %v3074 = vmul.f32 %v2978, %v3021
  %v3075 = vmul.f32 %v2979, %v3031
  %v3076 = vmul.f32 %v2980, %v3041
  %v3077 = vmul.f32 %v2981, %v3051
  %v3078 = vmul.f32 %v2982, %v3061
  %v3079 = vmul.f32 %v2983, %v3071
  %v3080 = vperm.slane %v2747, 0
  %v3081 = vmul.f32 %v3072, %v3080
  %v3082 = vmul.f32 %v3073, %v3080
  %v3083 = vmul.f32 %v3074, %v3080
  %v3084 = vmul.f32 %v3075, %v3080
  %v3085 = vmul.f32 %v3076, %v3080
  %v3086 = vmul.f32 %v3077, %v3080
  %v3087 = vmul.f32 %v3078, %v3080
  %v3088 = vmul.f32 %v3079, %v3080
  %v3089 = vperm.slane %v2748, 0
  %v3090 = vadd.f32 %v3081, %v3089
  %v3091 = vadd.f32 %v3082, %v3089
  %v3092 = vadd.f32 %v3083, %v3089
  %v3093 = vadd.f32 %v3084, %v3089
  %v3094 = vadd.f32 %v3085, %v3089
  %v3095 = vadd.f32 %v3086, %v3089
  %v3096 = vadd.f32 %v3087, %v3089
  %v3097 = vadd.f32 %v3088, %v3089
  %v3098 = vmax.f32 %v3090, 0.0
  %v3099 = vmax.f32 %v3091, 0.0
  %v3100 = vmax.f32 %v3092, 0.0
  %v3101 = vmax.f32 %v3093, 0.0
  %v3102 = vmax.f32 %v3094, 0.0
  %v3103 = vmax.f32 %v3095, 0.0
  %v3104 = vmax.f32 %v3096, 0.0
  %v3105 = vmax.f32 %v3097, 0.0
  %s3106 = scalar_lea.vmem %s4, 16
  %v3107 = vld [vmem:[%s3106] sm:$0x1]
  %v3108 = vld [vmem:[%s3106 + $0x1] sm:$0x1]
  %v3109 = vld [vmem:[%s3106 + $0x2] sm:$0x1]
  %s3110 = scalar_lea.vmem %s3, 128
  %v3111 = vld [vmem:[%s3110] sm:$0xff]
  %v3112 = vld [vmem:[%s3110 + $0x8] sm:$0xff]
  %v3113 = vld [vmem:[%s3110 + $0x10] sm:$0xff]
  %v3114 = vld [vmem:[%s3110 + $0x18] sm:$0xff]
  %v3115 = vpack.c.bf16 %v3099, %v3098
  %v3116 = vpack.c.bf16 %v3101, %v3100
  %v3117 = vpack.c.bf16 %v3103, %v3102
  %v3118 = vpack.c.bf16 %v3105, %v3104
  %v3119 = vpack.c.bf16 %v3112, %v3111
  %v3120 = vpack.c.bf16 %v3114, %v3113
  %v3121 = vperm.slane %v3107, 0
  %v3123 = vsel %vm93, %v3115, 0
  %v3126 = vsel %vm93, %v3116, 0
  %v3129 = vsel %vm93, %v3117, 0
  %v3132 = vsel %vm93, %v3118, 0
  %3134 = vmatpush.bf16.msra.mxu0 0
  %3135 = vmatpush.bf16.msra.mxu0 0
  %3136 = vmatpush.bf16.msra.mxu0 0
  %3137 = vmatpush.bf16.msra.mxu0 0
  %3138 = vmatpush.bf16.msra.mxu0 0
  %3139 = vmatpush.bf16.msra.mxu0 0
  %3140 = vmatpush.bf16.msra.mxu0 %v3120
  %3141 = vmatpush.bf16.msra.mxu0 %v3119
  %3142 = vmatmul.bf16.gmra.mxu0 %v3123
  %v3143 = vpop.f32.mrf.mxu0
  %v3144 = vadd.f32 %v3121, %v3143
  %v3145 = vpop.f32.mrf.mxu0
  %v3146 = vadd.f32 %v3121, %v3145
  %3147 = vmatmul.bf16.gmra.mxu0 %v3126
  %v3148 = vpop.f32.mrf.mxu0
  %v3149 = vadd.f32 %v3121, %v3148
  %v3150 = vpop.f32.mrf.mxu0
  %v3151 = vadd.f32 %v3121, %v3150
  %3152 = vmatmul.bf16.gmra.mxu0 %v3129
  %v3153 = vpop.f32.mrf.mxu0
  %v3154 = vadd.f32 %v3121, %v3153
  %v3155 = vpop.f32.mrf.mxu0
  %v3156 = vadd.f32 %v3121, %v3155
  %3157 = vmatmul.bf16.gmra.mxu0 %v3132
  %v3158 = vpop.f32.mrf.mxu0
  %v3159 = vadd.f32 %v3121, %v3158
  %v3160 = vpop.f32.mrf.mxu0
  %v3161 = vadd.f32 %v3121, %v3160
  %3162 = vdwg.mxu0
  %vm3163 = vcmask 523264
  %v3164 = vsel %vm3163, %v3144, 0.0
  %3165 = vadd.xlane.f32.xlu0 %v3164
  %v3166 = vpop.xlane.xlu0 %3165
  %v3167 = vsel %vm3163, %v3146, 0.0
  %3168 = vadd.xlane.f32.xlu0 %v3167
  %v3169 = vpop.xlane.xlu0 %3168
  %v3170 = vsel %vm3163, %v3149, 0.0
  %3171 = vadd.xlane.f32.xlu0 %v3170
  %v3172 = vpop.xlane.xlu0 %3171
  %v3173 = vsel %vm3163, %v3151, 0.0
  %3174 = vadd.xlane.f32.xlu0 %v3173
  %v3175 = vpop.xlane.xlu0 %3174
  %v3176 = vsel %vm3163, %v3154, 0.0
  %3177 = vadd.xlane.f32.xlu0 %v3176
  %v3178 = vpop.xlane.xlu0 %3177
  %v3179 = vsel %vm3163, %v3156, 0.0
  %3180 = vadd.xlane.f32.xlu0 %v3179
  %v3181 = vpop.xlane.xlu0 %3180
  %v3182 = vsel %vm3163, %v3159, 0.0
  %3183 = vadd.xlane.f32.xlu0 %v3182
  %v3184 = vpop.xlane.xlu0 %3183
  %v3185 = vsel %vm3163, %v3161, 0.0
  %3186 = vadd.xlane.f32.xlu0 %v3185
  %v3187 = vpop.xlane.xlu0 %3186
  %v3188 = vrcp.pop 64.0
  %v3189 = vmul.f32 64.0, %v3188
  %v3190 = vsub.f32 1.0, %v3189
  %v3191 = vmul.f32 %v3188, %v3190
  %v3192 = vadd.f32 %v3188, %v3191
  %vm3193 = vweird.f32 %v3188
  %v3194 = vsel %vm3193, %v3188, %v3192
  %v3195 = vmul.f32 %v3166, %v3194
  %v3196 = vmul.f32 %v3169, %v3194
  %v3197 = vmul.f32 %v3172, %v3194
  %v3198 = vmul.f32 %v3175, %v3194
  %v3199 = vmul.f32 %v3178, %v3194
  %v3200 = vmul.f32 %v3181, %v3194
  %v3201 = vmul.f32 %v3184, %v3194
  %v3202 = vmul.f32 %v3187, %v3194
  %v3203 = vmul.f32 %v3144, %v3144
  %v3204 = vmul.f32 %v3146, %v3146
  %v3205 = vmul.f32 %v3149, %v3149
  %v3206 = vmul.f32 %v3151, %v3151
  %v3207 = vmul.f32 %v3154, %v3154
  %v3208 = vmul.f32 %v3156, %v3156
  %v3209 = vmul.f32 %v3159, %v3159
  %v3210 = vmul.f32 %v3161, %v3161
  %v3211 = vsel %vm3163, %v3203, 0.0
  %3212 = vadd.xlane.f32.xlu0 %v3211
  %v3213 = vpop.xlane.xlu0 %3212
  %v3214 = vsel %vm3163, %v3204, 0.0
  %3215 = vadd.xlane.f32.xlu0 %v3214
  %v3216 = vpop.xlane.xlu0 %3215
  %v3217 = vsel %vm3163, %v3205, 0.0
  %3218 = vadd.xlane.f32.xlu0 %v3217
  %v3219 = vpop.xlane.xlu0 %3218
  %v3220 = vsel %vm3163, %v3206, 0.0
  %3221 = vadd.xlane.f32.xlu0 %v3220
  %v3222 = vpop.xlane.xlu0 %3221
  %v3223 = vsel %vm3163, %v3207, 0.0
  %3224 = vadd.xlane.f32.xlu0 %v3223
  %v3225 = vpop.xlane.xlu0 %3224
  %v3226 = vsel %vm3163, %v3208, 0.0
  %3227 = vadd.xlane.f32.xlu0 %v3226
  %v3228 = vpop.xlane.xlu0 %3227
  %v3229 = vsel %vm3163, %v3209, 0.0
  %3230 = vadd.xlane.f32.xlu0 %v3229
  %v3231 = vpop.xlane.xlu0 %3230
  %v3232 = vsel %vm3163, %v3210, 0.0
  %3233 = vadd.xlane.f32.xlu0 %v3232
  %v3234 = vpop.xlane.xlu0 %3233
  %v3235 = vmul.f32 %v3213, %v3194
  %v3236 = vmul.f32 %v3216, %v3194
  %v3237 = vmul.f32 %v3219, %v3194
  %v3238 = vmul.f32 %v3222, %v3194
  %v3239 = vmul.f32 %v3225, %v3194
  %v3240 = vmul.f32 %v3228, %v3194
  %v3241 = vmul.f32 %v3231, %v3194
  %v3242 = vmul.f32 %v3234, %v3194
  %v3243 = vmul.f32 %v3195, %v3195
  %v3244 = vmul.f32 %v3196, %v3196
  %v3245 = vmul.f32 %v3197, %v3197
  %v3246 = vmul.f32 %v3198, %v3198
  %v3247 = vmul.f32 %v3199, %v3199
  %v3248 = vmul.f32 %v3200, %v3200
  %v3249 = vmul.f32 %v3201, %v3201
  %v3250 = vmul.f32 %v3202, %v3202
  %v3251 = vsub.f32 %v3235, %v3243
  %v3252 = vsub.f32 %v3236, %v3244
  %v3253 = vsub.f32 %v3237, %v3245
  %v3254 = vsub.f32 %v3238, %v3246
  %v3255 = vsub.f32 %v3239, %v3247
  %v3256 = vsub.f32 %v3240, %v3248
  %v3257 = vsub.f32 %v3241, %v3249
  %v3258 = vsub.f32 %v3242, %v3250
  %v3259 = vsub.f32 %v3144, %v3195
  %v3260 = vsub.f32 %v3146, %v3196
  %v3261 = vsub.f32 %v3149, %v3197
  %v3262 = vsub.f32 %v3151, %v3198
  %v3263 = vsub.f32 %v3154, %v3199
  %v3264 = vsub.f32 %v3156, %v3200
  %v3265 = vsub.f32 %v3159, %v3201
  %v3266 = vsub.f32 %v3161, %v3202
  %v3267 = vadd.f32 %v3251, 1e-05
  %v3268 = vadd.f32 %v3252, 1e-05
  %v3269 = vadd.f32 %v3253, 1e-05
  %v3270 = vadd.f32 %v3254, 1e-05
  %v3271 = vadd.f32 %v3255, 1e-05
  %v3272 = vadd.f32 %v3256, 1e-05
  %v3273 = vadd.f32 %v3257, 1e-05
  %v3274 = vadd.f32 %v3258, 1e-05
  %v3275 = vrsqrt.pop %v3267
  %v3276 = vmul.f32 %v3275, %v3267
  %v3277 = vmul.f32 %v3276, %v3275
  %v3278 = vmul.f32 0.5, %v3277
  %v3279 = vsub.f32 1.5, %v3278
  %v3280 = vmul.f32 %v3275, %v3279
  %vm3281 = vweird.f32 %v3267
  %vm3282 = vweird.f32 %v3275
  %vm3283 = vmor %vm3281, %vm3282
  %v3284 = vsel %vm3283, %v3275, %v3280
  %v3285 = vrsqrt.pop %v3268
  %v3286 = vmul.f32 %v3285, %v3268
  %v3287 = vmul.f32 %v3286, %v3285
  %v3288 = vmul.f32 0.5, %v3287
  %v3289 = vsub.f32 1.5, %v3288
  %v3290 = vmul.f32 %v3285, %v3289
  %vm3291 = vweird.f32 %v3268
  %vm3292 = vweird.f32 %v3285
  %vm3293 = vmor %vm3291, %vm3292
  %v3294 = vsel %vm3293, %v3285, %v3290
  %v3295 = vrsqrt.pop %v3269
  %v3296 = vmul.f32 %v3295, %v3269
  %v3297 = vmul.f32 %v3296, %v3295
  %v3298 = vmul.f32 0.5, %v3297
  %v3299 = vsub.f32 1.5, %v3298
  %v3300 = vmul.f32 %v3295, %v3299
  %vm3301 = vweird.f32 %v3269
  %vm3302 = vweird.f32 %v3295
  %vm3303 = vmor %vm3301, %vm3302
  %v3304 = vsel %vm3303, %v3295, %v3300
  %v3305 = vrsqrt.pop %v3270
  %v3306 = vmul.f32 %v3305, %v3270
  %v3307 = vmul.f32 %v3306, %v3305
  %v3308 = vmul.f32 0.5, %v3307
  %v3309 = vsub.f32 1.5, %v3308
  %v3310 = vmul.f32 %v3305, %v3309
  %vm3311 = vweird.f32 %v3270
  %vm3312 = vweird.f32 %v3305
  %vm3313 = vmor %vm3311, %vm3312
  %v3314 = vsel %vm3313, %v3305, %v3310
  %v3315 = vrsqrt.pop %v3271
  %v3316 = vmul.f32 %v3315, %v3271
  %v3317 = vmul.f32 %v3316, %v3315
  %v3318 = vmul.f32 0.5, %v3317
  %v3319 = vsub.f32 1.5, %v3318
  %v3320 = vmul.f32 %v3315, %v3319
  %vm3321 = vweird.f32 %v3271
  %vm3322 = vweird.f32 %v3315
  %vm3323 = vmor %vm3321, %vm3322
  %v3324 = vsel %vm3323, %v3315, %v3320
  %v3325 = vrsqrt.pop %v3272
  %v3326 = vmul.f32 %v3325, %v3272
  %v3327 = vmul.f32 %v3326, %v3325
  %v3328 = vmul.f32 0.5, %v3327
  %v3329 = vsub.f32 1.5, %v3328
  %v3330 = vmul.f32 %v3325, %v3329
  %vm3331 = vweird.f32 %v3272
  %vm3332 = vweird.f32 %v3325
  %vm3333 = vmor %vm3331, %vm3332
  %v3334 = vsel %vm3333, %v3325, %v3330
  %v3335 = vrsqrt.pop %v3273
  %v3336 = vmul.f32 %v3335, %v3273
  %v3337 = vmul.f32 %v3336, %v3335
  %v3338 = vmul.f32 0.5, %v3337
  %v3339 = vsub.f32 1.5, %v3338
  %v3340 = vmul.f32 %v3335, %v3339
  %vm3341 = vweird.f32 %v3273
  %vm3342 = vweird.f32 %v3335
  %vm3343 = vmor %vm3341, %vm3342
  %v3344 = vsel %vm3343, %v3335, %v3340
  %v3345 = vrsqrt.pop %v3274
  %v3346 = vmul.f32 %v3345, %v3274
  %v3347 = vmul.f32 %v3346, %v3345
  %v3348 = vmul.f32 0.5, %v3347
  %v3349 = vsub.f32 1.5, %v3348
  %v3350 = vmul.f32 %v3345, %v3349
  %vm3351 = vweird.f32 %v3274
  %vm3352 = vweird.f32 %v3345
  %vm3353 = vmor %vm3351, %vm3352
  %v3354 = vsel %vm3353, %v3345, %v3350
  %v3355 = vmul.f32 %v3259, %v3284
  %v3356 = vmul.f32 %v3260, %v3294
  %v3357 = vmul.f32 %v3261, %v3304
  %v3358 = vmul.f32 %v3262, %v3314
  %v3359 = vmul.f32 %v3263, %v3324
  %v3360 = vmul.f32 %v3264, %v3334
  %v3361 = vmul.f32 %v3265, %v3344
  %v3362 = vmul.f32 %v3266, %v3354
  %v3363 = vperm.slane %v3108, 0
  %v3364 = vmul.f32 %v3355, %v3363
  %v3365 = vmul.f32 %v3356, %v3363
  %v3366 = vmul.f32 %v3357, %v3363
  %v3367 = vmul.f32 %v3358, %v3363
  %v3368 = vmul.f32 %v3359, %v3363
  %v3369 = vmul.f32 %v3360, %v3363
  %v3370 = vmul.f32 %v3361, %v3363
  %v3371 = vmul.f32 %v3362, %v3363
  %v3372 = vperm.slane %v3109, 0
  %v3373 = vadd.f32 %v3364, %v3372
  %v3374 = vadd.f32 %v3365, %v3372
  %v3375 = vadd.f32 %v3366, %v3372
  %v3376 = vadd.f32 %v3367, %v3372
  %v3377 = vadd.f32 %v3368, %v3372
  %v3378 = vadd.f32 %v3369, %v3372
  %v3379 = vadd.f32 %v3370, %v3372
  %v3380 = vadd.f32 %v3371, %v3372
  %v3381 = vmax.f32 %v3373, 0.0
  %v3382 = vmax.f32 %v3374, 0.0
  %v3383 = vmax.f32 %v3375, 0.0
  %v3384 = vmax.f32 %v3376, 0.0
  %v3385 = vmax.f32 %v3377, 0.0
  %v3386 = vmax.f32 %v3378, 0.0
  %v3387 = vmax.f32 %v3379, 0.0
  %v3388 = vmax.f32 %v3380, 0.0
  %v3389 = vsel %vm3163, %v3381, -inf
  %v3390 = vrot.slane %v3389, 4
  %v3391 = vmax.f32 %v3389, %v3390
  %v3392 = vrot.slane %v3391, 2
  %v3393 = vmax.f32 %v3391, %v3392
  %v3394 = vrot.slane %v3393, 1
  %v3395 = vmax.f32 %v3393, %v3394
  %v3396 = vsel %vm3163, %v3382, -inf
  %v3397 = vrot.slane %v3396, 4
  %v3398 = vmax.f32 %v3396, %v3397
  %v3399 = vrot.slane %v3398, 2
  %v3400 = vmax.f32 %v3398, %v3399
  %v3401 = vrot.slane %v3400, 1
  %v3402 = vmax.f32 %v3400, %v3401
  %v3403 = vsel %vm3163, %v3383, -inf
  %v3404 = vrot.slane %v3403, 4
  %v3405 = vmax.f32 %v3403, %v3404
  %v3406 = vrot.slane %v3405, 2
  %v3407 = vmax.f32 %v3405, %v3406
  %v3408 = vrot.slane %v3407, 1
  %v3409 = vmax.f32 %v3407, %v3408
  %v3410 = vsel %vm3163, %v3384, -inf
  %v3411 = vrot.slane %v3410, 4
  %v3412 = vmax.f32 %v3410, %v3411
  %v3413 = vrot.slane %v3412, 2
  %v3414 = vmax.f32 %v3412, %v3413
  %v3415 = vrot.slane %v3414, 1
  %v3416 = vmax.f32 %v3414, %v3415
  %v3417 = vsel %vm3163, %v3385, -inf
  %v3418 = vrot.slane %v3417, 4
  %v3419 = vmax.f32 %v3417, %v3418
  %v3420 = vrot.slane %v3419, 2
  %v3421 = vmax.f32 %v3419, %v3420
  %v3422 = vrot.slane %v3421, 1
  %v3423 = vmax.f32 %v3421, %v3422
  %v3424 = vsel %vm3163, %v3386, -inf
  %v3425 = vrot.slane %v3424, 4
  %v3426 = vmax.f32 %v3424, %v3425
  %v3427 = vrot.slane %v3426, 2
  %v3428 = vmax.f32 %v3426, %v3427
  %v3429 = vrot.slane %v3428, 1
  %v3430 = vmax.f32 %v3428, %v3429
  %v3431 = vsel %vm3163, %v3387, -inf
  %v3432 = vrot.slane %v3431, 4
  %v3433 = vmax.f32 %v3431, %v3432
  %v3434 = vrot.slane %v3433, 2
  %v3435 = vmax.f32 %v3433, %v3434
  %v3436 = vrot.slane %v3435, 1
  %v3437 = vmax.f32 %v3435, %v3436
  %v3438 = vsel %vm3163, %v3388, -inf
  %v3439 = vrot.slane %v3438, 4
  %v3440 = vmax.f32 %v3438, %v3439
  %v3441 = vrot.slane %v3440, 2
  %v3442 = vmax.f32 %v3440, %v3441
  %v3443 = vrot.slane %v3442, 1
  %v3444 = vmax.f32 %v3442, %v3443
  %v3445 = vld [vmem:[%s5] sm:$0xff]
  %v3446 = vld [vmem:[%s5 + $0x8] sm:$0xff]
  %v3447 = vld [vmem:[%s5 + $0x10] sm:$0xff]
  %v3448 = vld [vmem:[%s5 + $0x18] sm:$0xff]
  %v3449 = vld [vmem:[%s5 + $0x20] sm:$0xff]
  %v3450 = vld [vmem:[%s5 + $0x28] sm:$0xff]
  %v3451 = vld [vmem:[%s5 + $0x30] sm:$0xff]
  %v3452 = vld [vmem:[%s5 + $0x38] sm:$0xff]
  %v3453 = vld [vmem:[%s5 + $0x40] sm:$0xff]
  %v3454 = vld [vmem:[%s5 + $0x48] sm:$0xff]
  %v3455 = vld [vmem:[%s5 + $0x50] sm:$0xff]
  %v3456 = vld [vmem:[%s5 + $0x58] sm:$0xff]
  %v3457 = vld [vmem:[%s5 + $0x60] sm:$0xff]
  %v3458 = vld [vmem:[%s5 + $0x68] sm:$0xff]
  %v3459 = vld [vmem:[%s5 + $0x70] sm:$0xff]
  %v3460 = vld [vmem:[%s5 + $0x78] sm:$0xff]
  %v3461 = vld [vmem:[%s5 + $0x80] sm:$0xff]
  %v3462 = vld [vmem:[%s5 + $0x88] sm:$0xff]
  %v3463 = vld [vmem:[%s5 + $0x90] sm:$0xff]
  %v3464 = vld [vmem:[%s5 + $0x98] sm:$0xff]
  %v3465 = vld [vmem:[%s5 + $0xa0] sm:$0xff]
  %v3466 = vld [vmem:[%s5 + $0xa8] sm:$0xff]
  %v3467 = vld [vmem:[%s5 + $0xb0] sm:$0xff]
  %v3468 = vld [vmem:[%s5 + $0xb8] sm:$0xff]
  %v3469 = vpack.c.bf16 %v3395, %v3395
  %v3470 = vpack.c.bf16 %v3402, %v3402
  %v3471 = vpack.c.bf16 %v3409, %v3409
  %v3472 = vpack.c.bf16 %v3416, %v3416
  %v3473 = vpack.c.bf16 %v3423, %v3423
  %v3474 = vpack.c.bf16 %v3430, %v3430
  %v3475 = vpack.c.bf16 %v3437, %v3437
  %v3476 = vpack.c.bf16 %v3444, %v3444
  %v3477 = vpack.c.bf16 %v3448, %v3445
  %v3478 = vpack.c.bf16 %v3449, %v3446
  %v3479 = vpack.c.bf16 %v3450, %v3447
  %v3480 = vpack.c.bf16 %v3454, %v3451
  %v3481 = vpack.c.bf16 %v3455, %v3452
  %v3482 = vpack.c.bf16 %v3456, %v3453
  %v3483 = vpack.c.bf16 %v3460, %v3457
  %v3484 = vpack.c.bf16 %v3461, %v3458
  %v3485 = vpack.c.bf16 %v3462, %v3459
  %v3486 = vpack.c.bf16 %v3466, %v3463
  %v3487 = vpack.c.bf16 %v3467, %v3464
  %v3488 = vpack.c.bf16 %v3468, %v3465
  %v3489 = vld [vmem:[%s6] sm:$0x7]
  %v3491 = vperm.slane %v3489, 0
  %v3492 = vperm.slane %v3489, 1
  %v3493 = vperm.slane %v3489, 2
  %v3505 = vunpack.c.l.b16 %v3469
  %v3506 = vunpack.c.l.b16 %v3470
  %v3507 = vunpack.c.l.b16 %v3471
  %v3508 = vunpack.c.l.b16 %v3472
  %v3509 = vunpack.c.l.b16 %v3473
  %v3510 = vunpack.c.l.b16 %v3474
  %v3511 = vunpack.c.l.b16 %v3475
  %v3512 = vunpack.c.l.b16 %v3476
  %v3513 = vsel %vm692, %v3506, %v3505
  %v3514 = vsel %vm694, %v3507, %v3513
  %v3515 = vsel %vm696, %v3508, %v3514
  %v3516 = vsel %vm698, %v3509, %v3515
  %v3517 = vsel %vm700, %v3510, %v3516
  %v3518 = vsel %vm702, %v3511, %v3517
  %v3519 = vsel %vm704, %v3512, %v3518
  %v3520 = vpack.c.b16 %v3519, %v3519
  %v3522 = vsel %vm3163, %v3520, 0
  %3524 = vmatpush.bf16.msra.mxu0 0
  %3525 = vmatpush.bf16.msra.mxu0 0
  %3526 = vmatpush.bf16.msra.mxu0 0
  %3527 = vmatpush.bf16.msra.mxu0 0
  %3528 = vmatpush.bf16.msra.mxu0 %v3486
  %3529 = vmatpush.bf16.msra.mxu0 %v3483
  %3530 = vmatpush.bf16.msra.mxu0 %v3480
  %3531 = vmatpush.bf16.msra.mxu0 %v3477
  %3532 = vmatmul.bf16.gmra.mxu0 %v3522
  %v3533 = vpop.f32.mrf.mxu0
  %v3534 = vadd.f32 %v3491, %v3533
  %v3535 = vpop.f32.mrf.mxu0
  %3536 = vdwg.mxu0
  %3537 = vmatpush.bf16.msra.mxu0 0
  %3538 = vmatpush.bf16.msra.mxu0 0
  %3539 = vmatpush.bf16.msra.mxu0 0
  %3540 = vmatpush.bf16.msra.mxu0 0
  %3541 = vmatpush.bf16.msra.mxu0 %v3487
  %3542 = vmatpush.bf16.msra.mxu0 %v3484
  %3543 = vmatpush.bf16.msra.mxu0 %v3481
  %3544 = vmatpush.bf16.msra.mxu0 %v3478
  %3545 = vmatmul.bf16.gmra.mxu0 %v3522
  %v3546 = vpop.f32.mrf.mxu0
  %v3547 = vadd.f32 %v3492, %v3546
  %v3548 = vpop.f32.mrf.mxu0
  %3549 = vdwg.mxu0
  %3550 = vmatpush.bf16.msra.mxu0 0
  %3551 = vmatpush.bf16.msra.mxu0 0
  %3552 = vmatpush.bf16.msra.mxu0 0
  %3553 = vmatpush.bf16.msra.mxu0 0
  %3554 = vmatpush.bf16.msra.mxu0 %v3488
  %3555 = vmatpush.bf16.msra.mxu0 %v3485
  %3556 = vmatpush.bf16.msra.mxu0 %v3482
  %3557 = vmatpush.bf16.msra.mxu0 %v3479
  %3558 = vmatmul.bf16.gmra.mxu0 %v3522
  %v3559 = vpop.f32.mrf.mxu0
  %v3560 = vadd.f32 %v3493, %v3559
  %v3561 = vpop.f32.mrf.mxu0
  %3562 = vdwg.mxu0
  %3563 = vst [vmem:[%s7] sm:$0xff] %v3534
  %3564 = vst [vmem:[%s8] sm:$0xff] %v3547
  %3565 = vst [vmem:[%s8 + $0x8] sm:$0xff] %v3560
  // Predicated region
  $region30: #{run.2} parent=0 // pred_check
    _
  $region31: #{run.2} parent=0 // pred_check_branch
    %3567 = sbr.rel (0) target = $region33
  $region32: #{run.2} parent=0 // pred_region
    _
  $region33: #{run.2} parent=0 // pred_fallthru
    _
  // Predicated region
  $region34: #{run.2} parent=0 // pred_check
    _
  $region35: #{run.2} parent=0 // pred_check_branch
    %3569 = sbr.rel (0) target = $region37
  $region36: #{run.2} parent=0 // pred_region
    _
  $region37: #{run.2} parent=0 // pred_fallthru
    _
  // Predicated region
  $region38: #{run.2} parent=0 // pred_check
    _
  $region39: #{run.2} parent=0 // pred_check_branch
    %3571 = sbr.rel (0) target = $region41
  $region40: #{run.2} parent=0 // pred_region
    _
  $region41: #{run.2} parent=0 // pred_fallthru
    _
  // Predicated region
  $region42: #{run.2} parent=0 // pred_check
    _
  $region43: #{run.2} parent=0 // pred_check_branch
    %3573 = sbr.rel (0) target = $region45
  $region44: #{run.2} parent=0 // pred_region
    _
  $region45: #{run.2} parent=0 // pred_fallthru
    _

</llo_original>
